<compile_context>
chip_gen: v7x
topology: tpu7x:2x2x1
jax: 0.10.0
libtpu: 0.0.40
codegen_flags: <defaults>
</compile_context>

<pallas_src>
import functools
import numpy as np
import jax
import jax.numpy as jnp
from jax.experimental import pallas as pl
from jax.experimental.pallas import tpu as pltpu

_VMEM = pl.BlockSpec(memory_space=pltpu.MemorySpace.VMEM)


def _round_up(x, m):
    return (x + m - 1) // m * m


# ------------------------------ Pallas kernel -------------------------------

def _decoder_kernel(cap_ref, len_ref, emb_ref, wih_ref, whh_ref, bi_ref, bhn_ref,
                    h0_ref, wout_ref, bout_ref,
                    logp_ref, hout_ref,
                    x_scratch, gi_scratch, packed_scratch,
                    *, num_layers, seq_len, batch, hidden, batch_sizes):
    """Fused DecoderRNN forward.

    cap_ref   : (T*Bp, 1)   int32  time-major token ids (pad rows = 0)
    len_ref   : (Bp, 1)     int32  sequence lengths (0 for batch-pad rows)
    emb_ref   : (Vp, Hp)    f32    embedding table (zero padded)
    wih_ref   : (L, Hp, 3Hp) bf16  fused input->hidden weights, gate blocks [r|z|n], each block
                                   starting at a 128-lane boundary
    whh_ref   : (L, Hp, 3Hp) bf16  fused hidden->hidden weights (same layout)
    bi_ref    : (L, 1, 3Hp)  f32   fused bias  [b_ir+b_hr | b_iz+b_hz | b_in]
    bhn_ref   : (L, 1, Hp)   f32   b_hn (kept separate: used inside r * (W_hn h + b_hn))
    h0_ref    : (L, Bp, Hp)  f32   initial hidden (zero padded)
    wout_ref  : (Hp, Vp)     bf16  output projection
    bout_ref  : (1, Vp)      f32   output bias (-1e30 on padded vocab columns)
    logp_ref  : (Np, Vp)     f32   log-softmax rows in pack_padded_sequence order
    hout_ref  : (L, Bp, Hp)  f32   final hidden, frozen at each sequence's last valid step
    x_scratch : (T*Bp, Hp)   f32   running layer-input / layer-output sequence
    gi_scratch: (T*Bp, 3Hp)  f32   staged whole-sequence input projections of current layer
    packed_scratch: (Np, Hp) f32   packed top-layer rows fed to the head matmul
    """
    T, Bp, H = seq_len, batch, hidden
    bf16 = jnp.bfloat16

    # ---- embedding lookup as a one-hot matmul (vocab is tiny & VMEM-resident here) ----
    # TODO(synk): for realistic vocab sizes replace this with a DMA row-gather from an HBM
    # embedding table (memory_space=pl.ANY + pltpu.make_async_copy), not a one-hot matmul.
    vp = emb_ref.shape[0]
    lane_iota = jax.lax.broadcasted_iota(jnp.int32, (T * Bp, vp), 1)
    one_hot = jnp.where(cap_ref[...] == lane_iota, 1.0, 0.0)                 # (T*Bp, Vp) f32
    x_scratch[...] = jnp.dot(one_hot, emb_ref[...],
                             preferred_element_type=jnp.float32)             # (T*Bp, Hp)

    # Hoisted out of the layer/time loops: the per-step freeze masks (reused by every layer).
    len_vec = len_ref[...]                                                   # (Bp, 1) int32
    step_mask = [len_vec > t for t in range(T)]

    for layer in range(num_layers):
        w_hh = whh_ref[layer]                                                # (Hp, 3Hp) bf16
        b_hn = jnp.broadcast_to(bhn_ref[layer], (Bp, H))                     # hoisted broadcast

        # Whole-sequence input projection: ONE MXU call, off the serial chain, staged in VMEM.
        gi_scratch[...] = (jnp.dot(x_scratch[...].astype(bf16), wih_ref[layer],
                                   preferred_element_type=jnp.float32)
                           + bi_ref[layer])                                  # (T*Bp, 3Hp) f32

        h = h0_ref[layer]                                                    # (Bp, Hp) f32
        for t in range(T):                       # T small & static: fully unrolled
            gi = gi_scratch[t * Bp:(t + 1) * Bp, :]                          # aligned (8, 3*128)
            gh = jnp.dot(h.astype(bf16), w_hh,
                         preferred_element_type=jnp.float32)                 # (Bp, 3Hp) f32
            # Gate slices start at 128-lane boundaries -> whole-vreg slices, no lane shuffles.
            r = jax.nn.sigmoid(gi[:, 0:H] + gh[:, 0:H])
            z = jax.nn.sigmoid(gi[:, H:2 * H] + gh[:, H:2 * H])
            n = jnp.tanh(gi[:, 2 * H:3 * H] + r * (gh[:, 2 * H:3 * H] + b_hn))
            h_new = (1.0 - z) * n + z * h
            h = jnp.where(step_mask[t], h_new, h)        # freeze finished sequences (packed sem.)
            x_scratch[t * Bp:(t + 1) * Bp, :] = h        # full (8,128) tile: unmasked store
        hout_ref[layer] = h
        # TODO(synk): for long T switch the unrolled time loop to lax.fori_loop(..., unroll=k).

    # ---- pack_padded_sequence row order (batch_sizes are host-static -> static slice copies) ----
    packed_scratch[...] = jnp.zeros_like(packed_scratch)
    off = 0
    for t, bs in enumerate(batch_sizes):
        packed_scratch[off:off + bs, :] = x_scratch[t * Bp:t * Bp + bs, :]
        off += bs

    # ---- Linear + LogSoftmax over the lane-dense padded vocab axis ----
    # TODO(synk): at realistic sizes (H>=512, V>=10k) tile this head over N ('parallel') and V
    # ('arbitrary') with an online logsumexp accumulator so it fits v7x's 64 MiB VMEM.
    logits = (jnp.dot(packed_scratch[...].astype(bf16), wout_ref[...],
                      preferred_element_type=jnp.float32) + bout_ref[...])   # (Np, Vp) f32
    mx = jnp.max(logits, axis=1, keepdims=True)
    shifted = logits - mx
    lse = jnp.log(jnp.sum(jnp.exp(shifted), axis=1, keepdims=True))
    logp_ref[...] = shifted - lse


# ------------------------------- pallas_call wrapper -------------------------

def _decoder_pallas(cap_2d, lengths_bp1, emb_p, wih, whh, bi, bhn, h0, w_out_p, b_out_p,
                    *, num_layers, seq_len, batch, hidden, n_packed, vocab_p, batch_sizes):
    tbp = seq_len * batch
    kernel = functools.partial(_decoder_kernel, num_layers=num_layers, seq_len=seq_len,
                               batch=batch, hidden=hidden, batch_sizes=batch_sizes)
    # TODO(synk): on v7x add a leading batch-tile grid axis marked 'parallel' to use both
    # TensorCores; at this toy size (one batch tile) it would only add dispatch overhead.
    return pl.pallas_call(
        kernel,
        out_shape=(jax.ShapeDtypeStruct((n_packed, vocab_p), jnp.float32),
                   jax.ShapeDtypeStruct((num_layers, batch, hidden), jnp.float32)),
        in_specs=[_VMEM] * 10,
        out_specs=(_VMEM, _VMEM),
        scratch_shapes=[pltpu.VMEM((tbp, hidden), jnp.float32),
                        pltpu.VMEM((tbp, 3 * hidden), jnp.float32),
                        pltpu.VMEM((n_packed, hidden), jnp.float32)],
        compiler_params=pltpu.CompilerParams(vmem_limit_bytes=32 * 1024 * 1024),
    )(cap_2d, lengths_bp1, emb_p, wih, whh, bi, bhn, h0, w_out_p, b_out_p)


def decoder_rnn_forward(caption, lengths, hidden, params):
    """Mirrors DecoderRNN.forward(caption, lengths, hidden).

    caption: (B, T) int32 token ids
    lengths: python list of ints, sorted descending (pack_padded_sequence contract)
    hidden : (num_layers, B, H)
    params : {"embedding": (V,H), "gru": [(w_ih(3H,H), w_hh(3H,H), b_ih(3H,), b_hh(3H,)), ...],
              "out": (w_out(V,H), b_out(V,))}   (PyTorch parameter layouts)
    returns: (log_probs (N, V), hidden (L, B, H), batch_sizes (T,))
    """
    emb_table = params["embedding"]
    gru_layers = params["gru"]
    w_out, b_out = params["out"]

    B, T = caption.shape
    H = emb_table.shape[1]
    V = w_out.shape[0]
    L = len(gru_layers)

    lengths_np = np.asarray(lengths, dtype=np.int32)
    assert np.all(lengths_np[:-1] >= lengths_np[1:]), "lengths must be sorted descending"
    assert int(lengths_np.max()) == T

    Bp = _round_up(B, 8)            # sublane-aligned batch
    Hp = _round_up(H, 128)          # lane-aligned hidden (each gate block = whole lane tiles)
    Vp = _round_up(V, 128)          # lane-dense head output

    # ---- fused, lane-padded gate packing (gate order r, z, n), done once in the wrapper ----
    def pack_gate_matrix(w):                      # torch (3H, in_dim) -> (Hp, 3Hp)
        in_dim = w.shape[1]
        m = jnp.zeros((Hp, 3 * Hp), jnp.float32)
        for g in range(3):
            m = m.at[:in_dim, g * Hp:g * Hp + H].set(w[g * H:(g + 1) * H, :].T)
        return m

    def pack_bias(b_ih, b_hh):                    # -> (1, 3Hp)
        b = jnp.zeros((1, 3 * Hp), jnp.float32)
        b = b.at[0, 0 * Hp:0 * Hp + H].set(b_ih[0:H] + b_hh[0:H])            # r: b_ir + b_hr
        b = b.at[0, 1 * Hp:1 * Hp + H].set(b_ih[H:2 * H] + b_hh[H:2 * H])    # z: b_iz + b_hz
        b = b.at[0, 2 * Hp:2 * Hp + H].set(b_ih[2 * H:3 * H])                # n: b_in only
        return b

    wih = jnp.stack([pack_gate_matrix(w_ih) for (w_ih, _, _, _) in gru_layers]).astype(jnp.bfloat16)
    whh = jnp.stack([pack_gate_matrix(w_hh) for (_, w_hh, _, _) in gru_layers]).astype(jnp.bfloat16)
    bi = jnp.stack([pack_bias(b_ih, b_hh) for (_, _, b_ih, b_hh) in gru_layers])        # (L,1,3Hp)
    bhn = jnp.stack([jnp.zeros((1, Hp), jnp.float32).at[0, :H].set(b_hh[2 * H:3 * H])
                     for (_, _, _, b_hh) in gru_layers])                                 # (L,1,Hp)

    emb_p = jnp.zeros((Vp, Hp), jnp.float32).at[:V, :H].set(emb_table)
    w_out_p = jnp.zeros((Hp, Vp), jnp.float32).at[:H, :V].set(w_out.T).astype(jnp.bfloat16)
    b_out_p = jnp.full((1, Vp), -1e30, jnp.float32).at[0, :V].set(b_out)

    # ---- time-major, batch-padded token ids / lengths / h0 (int-only glue) ----
    cap_tb = jnp.pad(caption.astype(jnp.int32).T, ((0, 0), (0, Bp - B)))     # (T, Bp)
    cap_2d = cap_tb.reshape(T * Bp, 1)
    lengths_bp1 = jnp.asarray(np.pad(lengths_np, (0, Bp - B)).reshape(Bp, 1), jnp.int32)
    h0 = jnp.zeros((L, Bp, Hp), jnp.float32).at[:, :B, :H].set(hidden)

    batch_sizes = tuple(int((lengths_np > t).sum()) for t in range(T))
    N = int(sum(batch_sizes))
    Np = _round_up(N, 8)

    logp_p, h_final_p = _decoder_pallas(
        cap_2d, lengths_bp1, emb_p, wih, whh, bi, bhn, h0, w_out_p, b_out_p,
        num_layers=L, seq_len=T, batch=Bp, hidden=Hp,
        n_packed=Np, vocab_p=Vp, batch_sizes=batch_sizes)

    log_probs = logp_p[:N, :V]
    h_final = h_final_p[:, :B, :H]
    return log_probs, h_final, jnp.asarray(np.asarray(batch_sizes, dtype=np.int32))


# ----------------------- pure numpy reference (checking) --------------------

def _reference(caption, lengths, hidden, params):
    emb_table = np.asarray(params["embedding"])
    gru_layers = [tuple(np.asarray(a) for a in layer) for layer in params["gru"]]
    w_out = np.asarray(params["out"][0]); b_out = np.asarray(params["out"][1])
    caption = np.asarray(caption); lengths = np.asarray(lengths)
    B, T = caption.shape
    H = emb_table.shape[1]

    x_seq = np.transpose(emb_table[caption], (1, 0, 2))           # (T, B, H)
    h = np.array(np.asarray(hidden), dtype=np.float32)            # (L, B, H)
    outs = np.zeros((T, B, H), np.float32)
    for t in range(T):
        x = x_seq[t]
        for l, (w_ih, w_hh, b_ih, b_hh) in enumerate(gru_layers):
            gi = x @ w_ih.T + b_ih
            gh = h[l] @ w_hh.T + b_hh
            r = 1.0 / (1.0 + np.exp(-(gi[:, :H] + gh[:, :H])))
            z = 1.0 / (1.0 + np.exp(-(gi[:, H:2 * H] + gh[:, H:2 * H])))
            n = np.tanh(gi[:, 2 * H:] + r * gh[:, 2 * H:])
            h_new = (1.0 - z) * n + z * h[l]
            m = (t < lengths)[:, None]
            h[l] = np.where(m, h_new, h[l])
            x = h[l]
        outs[t] = x
    packed = np.concatenate([outs[t, :int((lengths > t).sum())] for t in range(T)], 0)
    logits = packed @ w_out.T + b_out
    mx = logits.max(1, keepdims=True)
    sh = logits - mx
    lp = sh - np.log(np.exp(sh).sum(1, keepdims=True))
    return lp, h


# --------------------------------- main -------------------------------------

if __name__ == "__main__":
    hidden_size = 32
    output_size = 40          # vocab size
    num_layers = 2
    B = 4
    lengths = [8, 7, 5, 3]    # sorted descending
    T = max(lengths)

    key = jax.random.PRNGKey(0)
    ks = jax.random.split(key, 13)
    scale = 1.0 / np.sqrt(hidden_size)

    emb_table = jax.random.normal(ks[0], (output_size, hidden_size), jnp.float32) * scale
    gru_layers = []
    for l in range(num_layers):
        w_ih = jax.random.normal(ks[1 + 4 * l], (3 * hidden_size, hidden_size), jnp.float32) * scale
        w_hh = jax.random.normal(ks[2 + 4 * l], (3 * hidden_size, hidden_size), jnp.float32) * scale
        b_ih = jax.random.normal(ks[3 + 4 * l], (3 * hidden_size,), jnp.float32) * scale
        b_hh = jax.random.normal(ks[4 + 4 * l], (3 * hidden_size,), jnp.float32) * scale
        gru_layers.append((w_ih, w_hh, b_ih, b_hh))
    w_out = jax.random.normal(ks[9], (output_size, hidden_size), jnp.float32) * scale
    b_out = jax.random.normal(ks[10], (output_size,), jnp.float32) * scale

    caption = jax.random.randint(ks[11], (B, T), 0, output_size, dtype=jnp.int32)
    hidden0 = jax.random.normal(ks[12], (num_layers, B, hidden_size), jnp.float32) * scale

    params = {"embedding": emb_table, "gru": gru_layers, "out": (w_out, b_out)}

    log_probs, h_final, batch_sizes = decoder_rnn_forward(caption, lengths, hidden0, params)
    jax.block_until_ready((log_probs, h_final, batch_sizes))

    N = int(sum(lengths))
    assert log_probs.shape == (N, output_size)
    assert h_final.shape == (num_layers, B, hidden_size)
    assert batch_sizes.shape == (T,)
    # log-softmax rows must normalize to ~1 in prob space
    assert np.allclose(np.exp(np.asarray(log_probs)).sum(axis=1), 1.0, atol=1e-4)

    # numerical check against a pure-numpy f32 reference (bf16 MXU operands, f32 accumulation)
    lp_ref, h_ref = _reference(caption, lengths, hidden0, params)
    assert np.allclose(np.asarray(log_probs), lp_ref, rtol=3e-2, atol=3e-2)
    assert np.allclose(np.asarray(h_final), h_ref, rtol=3e-2, atol=3e-2)

    print("KERNEL_OK")
</pallas_src>

<mosaic_0001>
module attributes {stable_mosaic.version = 11 : i64} {
  func.func @_decoder_kernel(%arg0: memref<64x1xi32, #tpu.memory_space<vmem>>, %arg1: memref<8x1xi32, #tpu.memory_space<vmem>>, %arg2: memref<128x128xf32, #tpu.memory_space<vmem>>, %arg3: memref<2x128x384xbf16, #tpu.memory_space<vmem>>, %arg4: memref<2x128x384xbf16, #tpu.memory_space<vmem>>, %arg5: memref<2x1x384xf32, #tpu.memory_space<vmem>>, %arg6: memref<2x1x128xf32, #tpu.memory_space<vmem>>, %arg7: memref<2x8x128xf32, #tpu.memory_space<vmem>>, %arg8: memref<128x128xbf16, #tpu.memory_space<vmem>>, %arg9: memref<1x128xf32, #tpu.memory_space<vmem>>, %arg10: memref<24x128xf32, #tpu.memory_space<vmem>>, %arg11: memref<2x8x128xf32, #tpu.memory_space<vmem>>, %arg12: memref<64x128xf32, #tpu.memory_space<vmem>>, %arg13: memref<64x384xf32, #tpu.memory_space<vmem>>, %arg14: memref<24x128xf32, #tpu.memory_space<vmem>>) attributes {dimension_semantics = [], scalar_prefetch = 0 : i64, scratch_operands = 3 : i64, tpu.core_type = #tpu.core_type<tc>} {
    %0 = tpu.iota {dimensions = array<i32: 1>} : vector<64x128xi32>
    %c0 = arith.constant 0 : index
    %c0_0 = arith.constant 0 : index
    %1 = vector.load %arg0[%c0, %c0_0] : memref<64x1xi32, #tpu.memory_space<vmem>>, vector<64x1xi32>
    %2 = vector.broadcast %1 : vector<64x1xi32> to vector<64x128xi32>
    %3 = arith.cmpi eq, %2, %0 : vector<64x128xi32>
    %cst = arith.constant 1.000000e+00 : f32
    %cst_1 = arith.constant 0.000000e+00 : f32
    %4 = vector.broadcast %cst : f32 to vector<64x128xf32>
    %5 = vector.broadcast %cst_1 : f32 to vector<64x128xf32>
    %6 = arith.select %3, %4, %5 : vector<64x128xi1>, vector<64x128xf32>
    %c0_2 = arith.constant 0 : index
    %c0_3 = arith.constant 0 : index
    %7 = vector.load %arg2[%c0_2, %c0_3] : memref<128x128xf32, #tpu.memory_space<vmem>>, vector<128x128xf32>
    %cst_4 = arith.constant dense<0.000000e+00> : vector<64x128xf32>
    %8 = tpu.matmul %6, %7, %cst_4 {dimension_numbers = #tpu.dot_dimension_numbers<[1], [0], [0], [1], [0, 0, 1, 1], [], []>} : vector<64x128xf32>, vector<128x128xf32>, vector<64x128xf32> -> vector<64x128xf32>
    %c0_5 = arith.constant 0 : index
    %c0_6 = arith.constant 0 : index
    %9 = vector.load %arg12[%c0_5, %c0_6] : memref<64x128xf32, #tpu.memory_space<vmem>>, vector<64x128xf32>
    tpu.vector_store %arg12[%c0_5, %c0_6], %8 {strides = array<i32>} : memref<64x128xf32, #tpu.memory_space<vmem>>, vector<64x128xf32>,
    %c0_7 = arith.constant 0 : index
    %c0_8 = arith.constant 0 : index
    %10 = vector.load %arg1[%c0_7, %c0_8] : memref<8x1xi32, #tpu.memory_space<vmem>>, vector<8x1xi32>
    %c0_i32 = arith.constant 0 : i32
    %11 = vector.broadcast %c0_i32 : i32 to vector<8x1xi32>
    %12 = arith.cmpi sgt, %10, %11 : vector<8x1xi32>
    %c1_i32 = arith.constant 1 : i32
    %13 = vector.broadcast %c1_i32 : i32 to vector<8x1xi32>
    %14 = arith.cmpi sgt, %10, %13 : vector<8x1xi32>
    %c2_i32 = arith.constant 2 : i32
    %15 = vector.broadcast %c2_i32 : i32 to vector<8x1xi32>
    %16 = arith.cmpi sgt, %10, %15 : vector<8x1xi32>
    %c3_i32 = arith.constant 3 : i32
    %17 = vector.broadcast %c3_i32 : i32 to vector<8x1xi32>
    %18 = arith.cmpi sgt, %10, %17 : vector<8x1xi32>
    %c4_i32 = arith.constant 4 : i32
    %19 = vector.broadcast %c4_i32 : i32 to vector<8x1xi32>
    %20 = arith.cmpi sgt, %10, %19 : vector<8x1xi32>
    %c5_i32 = arith.constant 5 : i32
    %21 = vector.broadcast %c5_i32 : i32 to vector<8x1xi32>
    %22 = arith.cmpi sgt, %10, %21 : vector<8x1xi32>
    %c6_i32 = arith.constant 6 : i32
    %23 = vector.broadcast %c6_i32 : i32 to vector<8x1xi32>
    %24 = arith.cmpi sgt, %10, %23 : vector<8x1xi32>
    %c7_i32 = arith.constant 7 : i32
    %25 = vector.broadcast %c7_i32 : i32 to vector<8x1xi32>
    %26 = arith.cmpi sgt, %10, %25 : vector<8x1xi32>
    %c0_9 = arith.constant 0 : index
    %c0_10 = arith.constant 0 : index
    %c0_11 = arith.constant 0 : index
    %27 = vector.load %arg4[%c0_9, %c0_10, %c0_11] : memref<2x128x384xbf16, #tpu.memory_space<vmem>>, vector<1x128x384xbf16>
    %28 = vector.shape_cast %27 : vector<1x128x384xbf16> to vector<128x384xbf16>
    %c0_12 = arith.constant 0 : index
    %c0_13 = arith.constant 0 : index
    %c0_14 = arith.constant 0 : index
    %29 = vector.load %arg6[%c0_12, %c0_13, %c0_14] : memref<2x1x128xf32, #tpu.memory_space<vmem>>, vector<1x1x128xf32>
    %30 = vector.shape_cast %29 : vector<1x1x128xf32> to vector<1x128xf32>
    %31 = vector.shape_cast %30 : vector<1x128xf32> to vector<1x128xf32>
    %32 = vector.broadcast %31 : vector<1x128xf32> to vector<8x128xf32>
    %c0_15 = arith.constant 0 : index
    %c0_16 = arith.constant 0 : index
    %33 = vector.load %arg12[%c0_15, %c0_16] : memref<64x128xf32, #tpu.memory_space<vmem>>, vector<64x128xf32>
    %34 = arith.truncf %33 : vector<64x128xf32> to vector<64x128xbf16>
    %c0_17 = arith.constant 0 : index
    %c0_18 = arith.constant 0 : index
    %c0_19 = arith.constant 0 : index
    %35 = vector.load %arg3[%c0_17, %c0_18, %c0_19] : memref<2x128x384xbf16, #tpu.memory_space<vmem>>, vector<1x128x384xbf16>
    %36 = vector.shape_cast %35 : vector<1x128x384xbf16> to vector<128x384xbf16>
    %cst_20 = arith.constant dense<0.000000e+00> : vector<64x384xf32>
    %37 = tpu.matmul %34, %36, %cst_20 {dimension_numbers = #tpu.dot_dimension_numbers<[1], [0], [0], [1], [0, 0, 1, 1], [], []>} : vector<64x128xbf16>, vector<128x384xbf16>, vector<64x384xf32> -> vector<64x384xf32>
    %c0_21 = arith.constant 0 : index
    %c0_22 = arith.constant 0 : index
    %c0_23 = arith.constant 0 : index
    %38 = vector.load %arg5[%c0_21, %c0_22, %c0_23] : memref<2x1x384xf32, #tpu.memory_space<vmem>>, vector<1x1x384xf32>
    %39 = vector.shape_cast %38 : vector<1x1x384xf32> to vector<1x384xf32>
    %40 = vector.broadcast %39 : vector<1x384xf32> to vector<64x384xf32>
    %41 = arith.addf %37, %40 : vector<64x384xf32>
    %c0_24 = arith.constant 0 : index
    %c0_25 = arith.constant 0 : index
    %42 = vector.load %arg13[%c0_24, %c0_25] : memref<64x384xf32, #tpu.memory_space<vmem>>, vector<64x384xf32>
    tpu.vector_store %arg13[%c0_24, %c0_25], %41 {strides = array<i32>} : memref<64x384xf32, #tpu.memory_space<vmem>>, vector<64x384xf32>,
    %c0_26 = arith.constant 0 : index
    %c0_27 = arith.constant 0 : index
    %c0_28 = arith.constant 0 : index
    %43 = vector.load %arg7[%c0_26, %c0_27, %c0_28] : memref<2x8x128xf32, #tpu.memory_space<vmem>>, vector<1x8x128xf32>
    %44 = vector.shape_cast %43 : vector<1x8x128xf32> to vector<8x128xf32>
    %c0_29 = arith.constant 0 : index
    %c0_30 = arith.constant 0 : index
    %45 = vector.load %arg13[%c0_29, %c0_30] : memref<64x384xf32, #tpu.memory_space<vmem>>, vector<8x384xf32>
    %46 = arith.truncf %44 : vector<8x128xf32> to vector<8x128xbf16>
    %cst_31 = arith.constant dense<0.000000e+00> : vector<8x384xf32>
    %47 = tpu.matmul %46, %28, %cst_31 {dimension_numbers = #tpu.dot_dimension_numbers<[1], [0], [0], [1], [0, 0, 1, 1], [], []>} : vector<8x128xbf16>, vector<128x384xbf16>, vector<8x384xf32> -> vector<8x384xf32>
    %48 = vector.extract_strided_slice %45 {offsets = [0, 0], sizes = [8, 128], strides = [1, 1]} : vector<8x384xf32> to vector<8x128xf32>
    %49 = vector.extract_strided_slice %47 {offsets = [0, 0], sizes = [8, 128], strides = [1, 1]} : vector<8x384xf32> to vector<8x128xf32>
    %50 = arith.addf %48, %49 : vector<8x128xf32>
    %51 = arith.negf %50 : vector<8x128xf32>
    %52 = math.exp %51 : vector<8x128xf32>
    %cst_32 = arith.constant 1.000000e+00 : f32
    %53 = vector.broadcast %cst_32 : f32 to vector<8x128xf32>
    %54 = arith.addf %53, %52 : vector<8x128xf32>
    %55 = arith.divf %53, %54 : vector<8x128xf32>
    %56 = vector.extract_strided_slice %45 {offsets = [0, 128], sizes = [8, 128], strides = [1, 1]} : vector<8x384xf32> to vector<8x128xf32>
    %57 = vector.extract_strided_slice %47 {offsets = [0, 128], sizes = [8, 128], strides = [1, 1]} : vector<8x384xf32> to vector<8x128xf32>
    %58 = arith.addf %56, %57 : vector<8x128xf32>
    %59 = arith.negf %58 : vector<8x128xf32>
    %60 = math.exp %59 : vector<8x128xf32>
    %cst_33 = arith.constant 1.000000e+00 : f32
    %61 = vector.broadcast %cst_33 : f32 to vector<8x128xf32>
    %62 = arith.addf %61, %60 : vector<8x128xf32>
    %63 = arith.divf %61, %62 : vector<8x128xf32>
    %64 = vector.extract_strided_slice %45 {offsets = [0, 256], sizes = [8, 128], strides = [1, 1]} : vector<8x384xf32> to vector<8x128xf32>
    %65 = vector.extract_strided_slice %47 {offsets = [0, 256], sizes = [8, 128], strides = [1, 1]} : vector<8x384xf32> to vector<8x128xf32>
    %66 = arith.addf %65, %32 : vector<8x128xf32>
    %67 = arith.mulf %55, %66 : vector<8x128xf32>
    %68 = arith.addf %64, %67 : vector<8x128xf32>
    %69 = math.tanh %68 : vector<8x128xf32>
    %cst_34 = arith.constant 1.000000e+00 : f32
    %70 = vector.broadcast %cst_34 : f32 to vector<8x128xf32>
    %71 = arith.subf %70, %63 : vector<8x128xf32>
    %72 = arith.mulf %71, %69 : vector<8x128xf32>
    %73 = arith.mulf %63, %44 : vector<8x128xf32>
    %74 = arith.addf %72, %73 : vector<8x128xf32>
    %75 = vector.shape_cast %12 : vector<8x1xi1> to vector<8x1xi1>
    %76 = vector.broadcast %75 : vector<8x1xi1> to vector<8x128xi1>
    %77 = arith.select %76, %74, %44 : vector<8x128xi1>, vector<8x128xf32>
    %c0_35 = arith.constant 0 : index
    %c0_36 = arith.constant 0 : index
    %78 = vector.load %arg12[%c0_35, %c0_36] : memref<64x128xf32, #tpu.memory_space<vmem>>, vector<8x128xf32>
    tpu.vector_store %arg12[%c0_35, %c0_36], %77 {strides = array<i32>} : memref<64x128xf32, #tpu.memory_space<vmem>>, vector<8x128xf32>,
    %c8 = arith.constant 8 : index
    %c0_37 = arith.constant 0 : index
    %79 = vector.load %arg13[%c8, %c0_37] : memref<64x384xf32, #tpu.memory_space<vmem>>, vector<8x384xf32>
    %80 = arith.truncf %77 : vector<8x128xf32> to vector<8x128xbf16>
    %cst_38 = arith.constant dense<0.000000e+00> : vector<8x384xf32>
    %81 = tpu.matmul %80, %28, %cst_38 {dimension_numbers = #tpu.dot_dimension_numbers<[1], [0], [0], [1], [0, 0, 1, 1], [], []>} : vector<8x128xbf16>, vector<128x384xbf16>, vector<8x384xf32> -> vector<8x384xf32>
    %82 = vector.extract_strided_slice %79 {offsets = [0, 0], sizes = [8, 128], strides = [1, 1]} : vector<8x384xf32> to vector<8x128xf32>
    %83 = vector.extract_strided_slice %81 {offsets = [0, 0], sizes = [8, 128], strides = [1, 1]} : vector<8x384xf32> to vector<8x128xf32>
    %84 = arith.addf %82, %83 : vector<8x128xf32>
    %85 = arith.negf %84 : vector<8x128xf32>
    %86 = math.exp %85 : vector<8x128xf32>
    %cst_39 = arith.constant 1.000000e+00 : f32
    %87 = vector.broadcast %cst_39 : f32 to vector<8x128xf32>
    %88 = arith.addf %87, %86 : vector<8x128xf32>
    %89 = arith.divf %87, %88 : vector<8x128xf32>
    %90 = vector.extract_strided_slice %79 {offsets = [0, 128], sizes = [8, 128], strides = [1, 1]} : vector<8x384xf32> to vector<8x128xf32>
    %91 = vector.extract_strided_slice %81 {offsets = [0, 128], sizes = [8, 128], strides = [1, 1]} : vector<8x384xf32> to vector<8x128xf32>
    %92 = arith.addf %90, %91 : vector<8x128xf32>
    %93 = arith.negf %92 : vector<8x128xf32>
    %94 = math.exp %93 : vector<8x128xf32>
    %cst_40 = arith.constant 1.000000e+00 : f32
    %95 = vector.broadcast %cst_40 : f32 to vector<8x128xf32>
    %96 = arith.addf %95, %94 : vector<8x128xf32>
    %97 = arith.divf %95, %96 : vector<8x128xf32>
    %98 = vector.extract_strided_slice %79 {offsets = [0, 256], sizes = [8, 128], strides = [1, 1]} : vector<8x384xf32> to vector<8x128xf32>
    %99 = vector.extract_strided_slice %81 {offsets = [0, 256], sizes = [8, 128], strides = [1, 1]} : vector<8x384xf32> to vector<8x128xf32>
    %100 = arith.addf %99, %32 : vector<8x128xf32>
    %101 = arith.mulf %89, %100 : vector<8x128xf32>
    %102 = arith.addf %98, %101 : vector<8x128xf32>
    %103 = math.tanh %102 : vector<8x128xf32>
    %cst_41 = arith.constant 1.000000e+00 : f32
    %104 = vector.broadcast %cst_41 : f32 to vector<8x128xf32>
    %105 = arith.subf %104, %97 : vector<8x128xf32>
    %106 = arith.mulf %105, %103 : vector<8x128xf32>
    %107 = arith.mulf %97, %77 : vector<8x128xf32>
    %108 = arith.addf %106, %107 : vector<8x128xf32>
    %109 = vector.shape_cast %14 : vector<8x1xi1> to vector<8x1xi1>
    %110 = vector.broadcast %109 : vector<8x1xi1> to vector<8x128xi1>
    %111 = arith.select %110, %108, %77 : vector<8x128xi1>, vector<8x128xf32>
    %c8_42 = arith.constant 8 : index
    %c0_43 = arith.constant 0 : index
    %112 = vector.load %arg12[%c8_42, %c0_43] : memref<64x128xf32, #tpu.memory_space<vmem>>, vector<8x128xf32>
    tpu.vector_store %arg12[%c8_42, %c0_43], %111 {strides = array<i32>} : memref<64x128xf32, #tpu.memory_space<vmem>>, vector<8x128xf32>,
    %c16 = arith.constant 16 : index
    %c0_44 = arith.constant 0 : index
    %113 = vector.load %arg13[%c16, %c0_44] : memref<64x384xf32, #tpu.memory_space<vmem>>, vector<8x384xf32>
    %114 = arith.truncf %111 : vector<8x128xf32> to vector<8x128xbf16>
    %cst_45 = arith.constant dense<0.000000e+00> : vector<8x384xf32>
    %115 = tpu.matmul %114, %28, %cst_45 {dimension_numbers = #tpu.dot_dimension_numbers<[1], [0], [0], [1], [0, 0, 1, 1], [], []>} : vector<8x128xbf16>, vector<128x384xbf16>, vector<8x384xf32> -> vector<8x384xf32>
    %116 = vector.extract_strided_slice %113 {offsets = [0, 0], sizes = [8, 128], strides = [1, 1]} : vector<8x384xf32> to vector<8x128xf32>
    %117 = vector.extract_strided_slice %115 {offsets = [0, 0], sizes = [8, 128], strides = [1, 1]} : vector<8x384xf32> to vector<8x128xf32>
    %118 = arith.addf %116, %117 : vector<8x128xf32>
    %119 = arith.negf %118 : vector<8x128xf32>
    %120 = math.exp %119 : vector<8x128xf32>
    %cst_46 = arith.constant 1.000000e+00 : f32
    %121 = vector.broadcast %cst_46 : f32 to vector<8x128xf32>
    %122 = arith.addf %121, %120 : vector<8x128xf32>
    %123 = arith.divf %121, %122 : vector<8x128xf32>
    %124 = vector.extract_strided_slice %113 {offsets = [0, 128], sizes = [8, 128], strides = [1, 1]} : vector<8x384xf32> to vector<8x128xf32>
    %125 = vector.extract_strided_slice %115 {offsets = [0, 128], sizes = [8, 128], strides = [1, 1]} : vector<8x384xf32> to vector<8x128xf32>
    %126 = arith.addf %124, %125 : vector<8x128xf32>
    %127 = arith.negf %126 : vector<8x128xf32>
    %128 = math.exp %127 : vector<8x128xf32>
    %cst_47 = arith.constant 1.000000e+00 : f32
    %129 = vector.broadcast %cst_47 : f32 to vector<8x128xf32>
    %130 = arith.addf %129, %128 : vector<8x128xf32>
    %131 = arith.divf %129, %130 : vector<8x128xf32>
    %132 = vector.extract_strided_slice %113 {offsets = [0, 256], sizes = [8, 128], strides = [1, 1]} : vector<8x384xf32> to vector<8x128xf32>
    %133 = vector.extract_strided_slice %115 {offsets = [0, 256], sizes = [8, 128], strides = [1, 1]} : vector<8x384xf32> to vector<8x128xf32>
    %134 = arith.addf %133, %32 : vector<8x128xf32>
    %135 = arith.mulf %123, %134 : vector<8x128xf32>
    %136 = arith.addf %132, %135 : vector<8x128xf32>
    %137 = math.tanh %136 : vector<8x128xf32>
    %cst_48 = arith.constant 1.000000e+00 : f32
    %138 = vector.broadcast %cst_48 : f32 to vector<8x128xf32>
    %139 = arith.subf %138, %131 : vector<8x128xf32>
    %140 = arith.mulf %139, %137 : vector<8x128xf32>
    %141 = arith.mulf %131, %111 : vector<8x128xf32>
    %142 = arith.addf %140, %141 : vector<8x128xf32>
    %143 = vector.shape_cast %16 : vector<8x1xi1> to vector<8x1xi1>
    %144 = vector.broadcast %143 : vector<8x1xi1> to vector<8x128xi1>
    %145 = arith.select %144, %142, %111 : vector<8x128xi1>, vector<8x128xf32>
    %c16_49 = arith.constant 16 : index
    %c0_50 = arith.constant 0 : index
    %146 = vector.load %arg12[%c16_49, %c0_50] : memref<64x128xf32, #tpu.memory_space<vmem>>, vector<8x128xf32>
    tpu.vector_store %arg12[%c16_49, %c0_50], %145 {strides = array<i32>} : memref<64x128xf32, #tpu.memory_space<vmem>>, vector<8x128xf32>,
    %c24 = arith.constant 24 : index
    %c0_51 = arith.constant 0 : index
    %147 = vector.load %arg13[%c24, %c0_51] : memref<64x384xf32, #tpu.memory_space<vmem>>, vector<8x384xf32>
    %148 = arith.truncf %145 : vector<8x128xf32> to vector<8x128xbf16>
    %cst_52 = arith.constant dense<0.000000e+00> : vector<8x384xf32>
    %149 = tpu.matmul %148, %28, %cst_52 {dimension_numbers = #tpu.dot_dimension_numbers<[1], [0], [0], [1], [0, 0, 1, 1], [], []>} : vector<8x128xbf16>, vector<128x384xbf16>, vector<8x384xf32> -> vector<8x384xf32>
    %150 = vector.extract_strided_slice %147 {offsets = [0, 0], sizes = [8, 128], strides = [1, 1]} : vector<8x384xf32> to vector<8x128xf32>
    %151 = vector.extract_strided_slice %149 {offsets = [0, 0], sizes = [8, 128], strides = [1, 1]} : vector<8x384xf32> to vector<8x128xf32>
    %152 = arith.addf %150, %151 : vector<8x128xf32>
    %153 = arith.negf %152 : vector<8x128xf32>
    %154 = math.exp %153 : vector<8x128xf32>
    %cst_53 = arith.constant 1.000000e+00 : f32
    %155 = vector.broadcast %cst_53 : f32 to vector<8x128xf32>
    %156 = arith.addf %155, %154 : vector<8x128xf32>
    %157 = arith.divf %155, %156 : vector<8x128xf32>
    %158 = vector.extract_strided_slice %147 {offsets = [0, 128], sizes = [8, 128], strides = [1, 1]} : vector<8x384xf32> to vector<8x128xf32>
    %159 = vector.extract_strided_slice %149 {offsets = [0, 128], sizes = [8, 128], strides = [1, 1]} : vector<8x384xf32> to vector<8x128xf32>
    %160 = arith.addf %158, %159 : vector<8x128xf32>
    %161 = arith.negf %160 : vector<8x128xf32>
    %162 = math.exp %161 : vector<8x128xf32>
    %cst_54 = arith.constant 1.000000e+00 : f32
    %163 = vector.broadcast %cst_54 : f32 to vector<8x128xf32>
    %164 = arith.addf %163, %162 : vector<8x128xf32>
    %165 = arith.divf %163, %164 : vector<8x128xf32>
    %166 = vector.extract_strided_slice %147 {offsets = [0, 256], sizes = [8, 128], strides = [1, 1]} : vector<8x384xf32> to vector<8x128xf32>
    %167 = vector.extract_strided_slice %149 {offsets = [0, 256], sizes = [8, 128], strides = [1, 1]} : vector<8x384xf32> to vector<8x128xf32>
    %168 = arith.addf %167, %32 : vector<8x128xf32>
    %169 = arith.mulf %157, %168 : vector<8x128xf32>
    %170 = arith.addf %166, %169 : vector<8x128xf32>
    %171 = math.tanh %170 : vector<8x128xf32>
    %cst_55 = arith.constant 1.000000e+00 : f32
    %172 = vector.broadcast %cst_55 : f32 to vector<8x128xf32>
    %173 = arith.subf %172, %165 : vector<8x128xf32>
    %174 = arith.mulf %173, %171 : vector<8x128xf32>
    %175 = arith.mulf %165, %145 : vector<8x128xf32>
    %176 = arith.addf %174, %175 : vector<8x128xf32>
    %177 = vector.shape_cast %18 : vector<8x1xi1> to vector<8x1xi1>
    %178 = vector.broadcast %177 : vector<8x1xi1> to vector<8x128xi1>
    %179 = arith.select %178, %176, %145 : vector<8x128xi1>, vector<8x128xf32>
    %c24_56 = arith.constant 24 : index
    %c0_57 = arith.constant 0 : index
    %180 = vector.load %arg12[%c24_56, %c0_57] : memref<64x128xf32, #tpu.memory_space<vmem>>, vector<8x128xf32>
    tpu.vector_store %arg12[%c24_56, %c0_57], %179 {strides = array<i32>} : memref<64x128xf32, #tpu.memory_space<vmem>>, vector<8x128xf32>,
    %c32 = arith.constant 32 : index
    %c0_58 = arith.constant 0 : index
    %181 = vector.load %arg13[%c32, %c0_58] : memref<64x384xf32, #tpu.memory_space<vmem>>, vector<8x384xf32>
    %182 = arith.truncf %179 : vector<8x128xf32> to vector<8x128xbf16>
    %cst_59 = arith.constant dense<0.000000e+00> : vector<8x384xf32>
    %183 = tpu.matmul %182, %28, %cst_59 {dimension_numbers = #tpu.dot_dimension_numbers<[1], [0], [0], [1], [0, 0, 1, 1], [], []>} : vector<8x128xbf16>, vector<128x384xbf16>, vector<8x384xf32> -> vector<8x384xf32>
    %184 = vector.extract_strided_slice %181 {offsets = [0, 0], sizes = [8, 128], strides = [1, 1]} : vector<8x384xf32> to vector<8x128xf32>
    %185 = vector.extract_strided_slice %183 {offsets = [0, 0], sizes = [8, 128], strides = [1, 1]} : vector<8x384xf32> to vector<8x128xf32>
    %186 = arith.addf %184, %185 : vector<8x128xf32>
    %187 = arith.negf %186 : vector<8x128xf32>
    %188 = math.exp %187 : vector<8x128xf32>
    %cst_60 = arith.constant 1.000000e+00 : f32
    %189 = vector.broadcast %cst_60 : f32 to vector<8x128xf32>
    %190 = arith.addf %189, %188 : vector<8x128xf32>
    %191 = arith.divf %189, %190 : vector<8x128xf32>
    %192 = vector.extract_strided_slice %181 {offsets = [0, 128], sizes = [8, 128], strides = [1, 1]} : vector<8x384xf32> to vector<8x128xf32>
    %193 = vector.extract_strided_slice %183 {offsets = [0, 128], sizes = [8, 128], strides = [1, 1]} : vector<8x384xf32> to vector<8x128xf32>
    %194 = arith.addf %192, %193 : vector<8x128xf32>
    %195 = arith.negf %194 : vector<8x128xf32>
    %196 = math.exp %195 : vector<8x128xf32>
    %cst_61 = arith.constant 1.000000e+00 : f32
    %197 = vector.broadcast %cst_61 : f32 to vector<8x128xf32>
    %198 = arith.addf %197, %196 : vector<8x128xf32>
    %199 = arith.divf %197, %198 : vector<8x128xf32>
    %200 = vector.extract_strided_slice %181 {offsets = [0, 256], sizes = [8, 128], strides = [1, 1]} : vector<8x384xf32> to vector<8x128xf32>
    %201 = vector.extract_strided_slice %183 {offsets = [0, 256], sizes = [8, 128], strides = [1, 1]} : vector<8x384xf32> to vector<8x128xf32>
    %202 = arith.addf %201, %32 : vector<8x128xf32>
    %203 = arith.mulf %191, %202 : vector<8x128xf32>
    %204 = arith.addf %200, %203 : vector<8x128xf32>
    %205 = math.tanh %204 : vector<8x128xf32>
    %cst_62 = arith.constant 1.000000e+00 : f32
    %206 = vector.broadcast %cst_62 : f32 to vector<8x128xf32>
    %207 = arith.subf %206, %199 : vector<8x128xf32>
    %208 = arith.mulf %207, %205 : vector<8x128xf32>
    %209 = arith.mulf %199, %179 : vector<8x128xf32>
    %210 = arith.addf %208, %209 : vector<8x128xf32>
    %211 = vector.shape_cast %20 : vector<8x1xi1> to vector<8x1xi1>
    %212 = vector.broadcast %211 : vector<8x1xi1> to vector<8x128xi1>
    %213 = arith.select %212, %210, %179 : vector<8x128xi1>, vector<8x128xf32>
    %c32_63 = arith.constant 32 : index
    %c0_64 = arith.constant 0 : index
    %214 = vector.load %arg12[%c32_63, %c0_64] : memref<64x128xf32, #tpu.memory_space<vmem>>, vector<8x128xf32>
    tpu.vector_store %arg12[%c32_63, %c0_64], %213 {strides = array<i32>} : memref<64x128xf32, #tpu.memory_space<vmem>>, vector<8x128xf32>,
    %c40 = arith.constant 40 : index
    %c0_65 = arith.constant 0 : index
    %215 = vector.load %arg13[%c40, %c0_65] : memref<64x384xf32, #tpu.memory_space<vmem>>, vector<8x384xf32>
    %216 = arith.truncf %213 : vector<8x128xf32> to vector<8x128xbf16>
    %cst_66 = arith.constant dense<0.000000e+00> : vector<8x384xf32>
    %217 = tpu.matmul %216, %28, %cst_66 {dimension_numbers = #tpu.dot_dimension_numbers<[1], [0], [0], [1], [0, 0, 1, 1], [], []>} : vector<8x128xbf16>, vector<128x384xbf16>, vector<8x384xf32> -> vector<8x384xf32>
    %218 = vector.extract_strided_slice %215 {offsets = [0, 0], sizes = [8, 128], strides = [1, 1]} : vector<8x384xf32> to vector<8x128xf32>
    %219 = vector.extract_strided_slice %217 {offsets = [0, 0], sizes = [8, 128], strides = [1, 1]} : vector<8x384xf32> to vector<8x128xf32>
    %220 = arith.addf %218, %219 : vector<8x128xf32>
    %221 = arith.negf %220 : vector<8x128xf32>
    %222 = math.exp %221 : vector<8x128xf32>
    %cst_67 = arith.constant 1.000000e+00 : f32
    %223 = vector.broadcast %cst_67 : f32 to vector<8x128xf32>
    %224 = arith.addf %223, %222 : vector<8x128xf32>
    %225 = arith.divf %223, %224 : vector<8x128xf32>
    %226 = vector.extract_strided_slice %215 {offsets = [0, 128], sizes = [8, 128], strides = [1, 1]} : vector<8x384xf32> to vector<8x128xf32>
    %227 = vector.extract_strided_slice %217 {offsets = [0, 128], sizes = [8, 128], strides = [1, 1]} : vector<8x384xf32> to vector<8x128xf32>
    %228 = arith.addf %226, %227 : vector<8x128xf32>
    %229 = arith.negf %228 : vector<8x128xf32>
    %230 = math.exp %229 : vector<8x128xf32>
    %cst_68 = arith.constant 1.000000e+00 : f32
    %231 = vector.broadcast %cst_68 : f32 to vector<8x128xf32>
    %232 = arith.addf %231, %230 : vector<8x128xf32>
    %233 = arith.divf %231, %232 : vector<8x128xf32>
    %234 = vector.extract_strided_slice %215 {offsets = [0, 256], sizes = [8, 128], strides = [1, 1]} : vector<8x384xf32> to vector<8x128xf32>
    %235 = vector.extract_strided_slice %217 {offsets = [0, 256], sizes = [8, 128], strides = [1, 1]} : vector<8x384xf32> to vector<8x128xf32>
    %236 = arith.addf %235, %32 : vector<8x128xf32>
    %237 = arith.mulf %225, %236 : vector<8x128xf32>
    %238 = arith.addf %234, %237 : vector<8x128xf32>
    %239 = math.tanh %238 : vector<8x128xf32>
    %cst_69 = arith.constant 1.000000e+00 : f32
    %240 = vector.broadcast %cst_69 : f32 to vector<8x128xf32>
    %241 = arith.subf %240, %233 : vector<8x128xf32>
    %242 = arith.mulf %241, %239 : vector<8x128xf32>
    %243 = arith.mulf %233, %213 : vector<8x128xf32>
    %244 = arith.addf %242, %243 : vector<8x128xf32>
    %245 = vector.shape_cast %22 : vector<8x1xi1> to vector<8x1xi1>
    %246 = vector.broadcast %245 : vector<8x1xi1> to vector<8x128xi1>
    %247 = arith.select %246, %244, %213 : vector<8x128xi1>, vector<8x128xf32>
    %c40_70 = arith.constant 40 : index
    %c0_71 = arith.constant 0 : index
    %248 = vector.load %arg12[%c40_70, %c0_71] : memref<64x128xf32, #tpu.memory_space<vmem>>, vector<8x128xf32>
    tpu.vector_store %arg12[%c40_70, %c0_71], %247 {strides = array<i32>} : memref<64x128xf32, #tpu.memory_space<vmem>>, vector<8x128xf32>,
    %c48 = arith.constant 48 : index
    %c0_72 = arith.constant 0 : index
    %249 = vector.load %arg13[%c48, %c0_72] : memref<64x384xf32, #tpu.memory_space<vmem>>, vector<8x384xf32>
    %250 = arith.truncf %247 : vector<8x128xf32> to vector<8x128xbf16>
    %cst_73 = arith.constant dense<0.000000e+00> : vector<8x384xf32>
    %251 = tpu.matmul %250, %28, %cst_73 {dimension_numbers = #tpu.dot_dimension_numbers<[1], [0], [0], [1], [0, 0, 1, 1], [], []>} : vector<8x128xbf16>, vector<128x384xbf16>, vector<8x384xf32> -> vector<8x384xf32>
    %252 = vector.extract_strided_slice %249 {offsets = [0, 0], sizes = [8, 128], strides = [1, 1]} : vector<8x384xf32> to vector<8x128xf32>
    %253 = vector.extract_strided_slice %251 {offsets = [0, 0], sizes = [8, 128], strides = [1, 1]} : vector<8x384xf32> to vector<8x128xf32>
    %254 = arith.addf %252, %253 : vector<8x128xf32>
    %255 = arith.negf %254 : vector<8x128xf32>
    %256 = math.exp %255 : vector<8x128xf32>
    %cst_74 = arith.constant 1.000000e+00 : f32
    %257 = vector.broadcast %cst_74 : f32 to vector<8x128xf32>
    %258 = arith.addf %257, %256 : vector<8x128xf32>
    %259 = arith.divf %257, %258 : vector<8x128xf32>
    %260 = vector.extract_strided_slice %249 {offsets = [0, 128], sizes = [8, 128], strides = [1, 1]} : vector<8x384xf32> to vector<8x128xf32>
    %261 = vector.extract_strided_slice %251 {offsets = [0, 128], sizes = [8, 128], strides = [1, 1]} : vector<8x384xf32> to vector<8x128xf32>
    %262 = arith.addf %260, %261 : vector<8x128xf32>
    %263 = arith.negf %262 : vector<8x128xf32>
    %264 = math.exp %263 : vector<8x128xf32>
    %cst_75 = arith.constant 1.000000e+00 : f32
    %265 = vector.broadcast %cst_75 : f32 to vector<8x128xf32>
    %266 = arith.addf %265, %264 : vector<8x128xf32>
    %267 = arith.divf %265, %266 : vector<8x128xf32>
    %268 = vector.extract_strided_slice %249 {offsets = [0, 256], sizes = [8, 128], strides = [1, 1]} : vector<8x384xf32> to vector<8x128xf32>
    %269 = vector.extract_strided_slice %251 {offsets = [0, 256], sizes = [8, 128], strides = [1, 1]} : vector<8x384xf32> to vector<8x128xf32>
    %270 = arith.addf %269, %32 : vector<8x128xf32>
    %271 = arith.mulf %259, %270 : vector<8x128xf32>
    %272 = arith.addf %268, %271 : vector<8x128xf32>
    %273 = math.tanh %272 : vector<8x128xf32>
    %cst_76 = arith.constant 1.000000e+00 : f32
    %274 = vector.broadcast %cst_76 : f32 to vector<8x128xf32>
    %275 = arith.subf %274, %267 : vector<8x128xf32>
    %276 = arith.mulf %275, %273 : vector<8x128xf32>
    %277 = arith.mulf %267, %247 : vector<8x128xf32>
    %278 = arith.addf %276, %277 : vector<8x128xf32>
    %279 = vector.shape_cast %24 : vector<8x1xi1> to vector<8x1xi1>
    %280 = vector.broadcast %279 : vector<8x1xi1> to vector<8x128xi1>
    %281 = arith.select %280, %278, %247 : vector<8x128xi1>, vector<8x128xf32>
    %c48_77 = arith.constant 48 : index
    %c0_78 = arith.constant 0 : index
    %282 = vector.load %arg12[%c48_77, %c0_78] : memref<64x128xf32, #tpu.memory_space<vmem>>, vector<8x128xf32>
    tpu.vector_store %arg12[%c48_77, %c0_78], %281 {strides = array<i32>} : memref<64x128xf32, #tpu.memory_space<vmem>>, vector<8x128xf32>,
    %c56 = arith.constant 56 : index
    %c0_79 = arith.constant 0 : index
    %283 = vector.load %arg13[%c56, %c0_79] : memref<64x384xf32, #tpu.memory_space<vmem>>, vector<8x384xf32>
    %284 = arith.truncf %281 : vector<8x128xf32> to vector<8x128xbf16>
    %cst_80 = arith.constant dense<0.000000e+00> : vector<8x384xf32>
    %285 = tpu.matmul %284, %28, %cst_80 {dimension_numbers = #tpu.dot_dimension_numbers<[1], [0], [0], [1], [0, 0, 1, 1], [], []>} : vector<8x128xbf16>, vector<128x384xbf16>, vector<8x384xf32> -> vector<8x384xf32>
    %286 = vector.extract_strided_slice %283 {offsets = [0, 0], sizes = [8, 128], strides = [1, 1]} : vector<8x384xf32> to vector<8x128xf32>
    %287 = vector.extract_strided_slice %285 {offsets = [0, 0], sizes = [8, 128], strides = [1, 1]} : vector<8x384xf32> to vector<8x128xf32>
    %288 = arith.addf %286, %287 : vector<8x128xf32>
    %289 = arith.negf %288 : vector<8x128xf32>
    %290 = math.exp %289 : vector<8x128xf32>
    %cst_81 = arith.constant 1.000000e+00 : f32
    %291 = vector.broadcast %cst_81 : f32 to vector<8x128xf32>
    %292 = arith.addf %291, %290 : vector<8x128xf32>
    %293 = arith.divf %291, %292 : vector<8x128xf32>
    %294 = vector.extract_strided_slice %283 {offsets = [0, 128], sizes = [8, 128], strides = [1, 1]} : vector<8x384xf32> to vector<8x128xf32>
    %295 = vector.extract_strided_slice %285 {offsets = [0, 128], sizes = [8, 128], strides = [1, 1]} : vector<8x384xf32> to vector<8x128xf32>
    %296 = arith.addf %294, %295 : vector<8x128xf32>
    %297 = arith.negf %296 : vector<8x128xf32>
    %298 = math.exp %297 : vector<8x128xf32>
    %cst_82 = arith.constant 1.000000e+00 : f32
    %299 = vector.broadcast %cst_82 : f32 to vector<8x128xf32>
    %300 = arith.addf %299, %298 : vector<8x128xf32>
    %301 = arith.divf %299, %300 : vector<8x128xf32>
    %302 = vector.extract_strided_slice %283 {offsets = [0, 256], sizes = [8, 128], strides = [1, 1]} : vector<8x384xf32> to vector<8x128xf32>
    %303 = vector.extract_strided_slice %285 {offsets = [0, 256], sizes = [8, 128], strides = [1, 1]} : vector<8x384xf32> to vector<8x128xf32>
    %304 = arith.addf %303, %32 : vector<8x128xf32>
    %305 = arith.mulf %293, %304 : vector<8x128xf32>
    %306 = arith.addf %302, %305 : vector<8x128xf32>
    %307 = math.tanh %306 : vector<8x128xf32>
    %cst_83 = arith.constant 1.000000e+00 : f32
    %308 = vector.broadcast %cst_83 : f32 to vector<8x128xf32>
    %309 = arith.subf %308, %301 : vector<8x128xf32>
    %310 = arith.mulf %309, %307 : vector<8x128xf32>
    %311 = arith.mulf %301, %281 : vector<8x128xf32>
    %312 = arith.addf %310, %311 : vector<8x128xf32>
    %313 = vector.shape_cast %26 : vector<8x1xi1> to vector<8x1xi1>
    %314 = vector.broadcast %313 : vector<8x1xi1> to vector<8x128xi1>
    %315 = arith.select %314, %312, %281 : vector<8x128xi1>, vector<8x128xf32>
    %c56_84 = arith.constant 56 : index
    %c0_85 = arith.constant 0 : index
    %316 = vector.load %arg12[%c56_84, %c0_85] : memref<64x128xf32, #tpu.memory_space<vmem>>, vector<8x128xf32>
    tpu.vector_store %arg12[%c56_84, %c0_85], %315 {strides = array<i32>} : memref<64x128xf32, #tpu.memory_space<vmem>>, vector<8x128xf32>,
    %c0_86 = arith.constant 0 : index
    %c0_87 = arith.constant 0 : index
    %c0_88 = arith.constant 0 : index
    %317 = vector.load %arg11[%c0_86, %c0_87, %c0_88] : memref<2x8x128xf32, #tpu.memory_space<vmem>>, vector<1x8x128xf32>
    %318 = vector.shape_cast %317 : vector<1x8x128xf32> to vector<8x128xf32>
    %319 = vector.shape_cast %315 : vector<8x128xf32> to vector<1x8x128xf32>
    tpu.vector_store %arg11[%c0_86, %c0_87, %c0_88], %319 {strides = array<i32>} : memref<2x8x128xf32, #tpu.memory_space<vmem>>, vector<1x8x128xf32>,
    %c1 = arith.constant 1 : index
    %c0_89 = arith.constant 0 : index
    %c0_90 = arith.constant 0 : index
    %320 = vector.load %arg4[%c1, %c0_89, %c0_90] : memref<2x128x384xbf16, #tpu.memory_space<vmem>>, vector<1x128x384xbf16>
    %321 = vector.shape_cast %320 : vector<1x128x384xbf16> to vector<128x384xbf16>
    %c1_91 = arith.constant 1 : index
    %c0_92 = arith.constant 0 : index
    %c0_93 = arith.constant 0 : index
    %322 = vector.load %arg6[%c1_91, %c0_92, %c0_93] : memref<2x1x128xf32, #tpu.memory_space<vmem>>, vector<1x1x128xf32>
    %323 = vector.shape_cast %322 : vector<1x1x128xf32> to vector<1x128xf32>
    %324 = vector.shape_cast %323 : vector<1x128xf32> to vector<1x128xf32>
    %325 = vector.broadcast %324 : vector<1x128xf32> to vector<8x128xf32>
    %c0_94 = arith.constant 0 : index
    %c0_95 = arith.constant 0 : index
    %326 = vector.load %arg12[%c0_94, %c0_95] : memref<64x128xf32, #tpu.memory_space<vmem>>, vector<64x128xf32>
    %327 = arith.truncf %326 : vector<64x128xf32> to vector<64x128xbf16>
    %c1_96 = arith.constant 1 : index
    %c0_97 = arith.constant 0 : index
    %c0_98 = arith.constant 0 : index
    %328 = vector.load %arg3[%c1_96, %c0_97, %c0_98] : memref<2x128x384xbf16, #tpu.memory_space<vmem>>, vector<1x128x384xbf16>
    %329 = vector.shape_cast %328 : vector<1x128x384xbf16> to vector<128x384xbf16>
    %cst_99 = arith.constant dense<0.000000e+00> : vector<64x384xf32>
    %330 = tpu.matmul %327, %329, %cst_99 {dimension_numbers = #tpu.dot_dimension_numbers<[1], [0], [0], [1], [0, 0, 1, 1], [], []>} : vector<64x128xbf16>, vector<128x384xbf16>, vector<64x384xf32> -> vector<64x384xf32>
    %c1_100 = arith.constant 1 : index
    %c0_101 = arith.constant 0 : index
    %c0_102 = arith.constant 0 : index
    %331 = vector.load %arg5[%c1_100, %c0_101, %c0_102] : memref<2x1x384xf32, #tpu.memory_space<vmem>>, vector<1x1x384xf32>
    %332 = vector.shape_cast %331 : vector<1x1x384xf32> to vector<1x384xf32>
    %333 = vector.broadcast %332 : vector<1x384xf32> to vector<64x384xf32>
    %334 = arith.addf %330, %333 : vector<64x384xf32>
    %c0_103 = arith.constant 0 : index
    %c0_104 = arith.constant 0 : index
    %335 = vector.load %arg13[%c0_103, %c0_104] : memref<64x384xf32, #tpu.memory_space<vmem>>, vector<64x384xf32>
    tpu.vector_store %arg13[%c0_103, %c0_104], %334 {strides = array<i32>} : memref<64x384xf32, #tpu.memory_space<vmem>>, vector<64x384xf32>,
    %c1_105 = arith.constant 1 : index
    %c0_106 = arith.constant 0 : index
    %c0_107 = arith.constant 0 : index
    %336 = vector.load %arg7[%c1_105, %c0_106, %c0_107] : memref<2x8x128xf32, #tpu.memory_space<vmem>>, vector<1x8x128xf32>
    %337 = vector.shape_cast %336 : vector<1x8x128xf32> to vector<8x128xf32>
    %c0_108 = arith.constant 0 : index
    %c0_109 = arith.constant 0 : index
    %338 = vector.load %arg13[%c0_108, %c0_109] : memref<64x384xf32, #tpu.memory_space<vmem>>, vector<8x384xf32>
    %339 = arith.truncf %337 : vector<8x128xf32> to vector<8x128xbf16>
    %cst_110 = arith.constant dense<0.000000e+00> : vector<8x384xf32>
    %340 = tpu.matmul %339, %321, %cst_110 {dimension_numbers = #tpu.dot_dimension_numbers<[1], [0], [0], [1], [0, 0, 1, 1], [], []>} : vector<8x128xbf16>, vector<128x384xbf16>, vector<8x384xf32> -> vector<8x384xf32>
    %341 = vector.extract_strided_slice %338 {offsets = [0, 0], sizes = [8, 128], strides = [1, 1]} : vector<8x384xf32> to vector<8x128xf32>
    %342 = vector.extract_strided_slice %340 {offsets = [0, 0], sizes = [8, 128], strides = [1, 1]} : vector<8x384xf32> to vector<8x128xf32>
    %343 = arith.addf %341, %342 : vector<8x128xf32>
    %344 = arith.negf %343 : vector<8x128xf32>
    %345 = math.exp %344 : vector<8x128xf32>
    %cst_111 = arith.constant 1.000000e+00 : f32
    %346 = vector.broadcast %cst_111 : f32 to vector<8x128xf32>
    %347 = arith.addf %346, %345 : vector<8x128xf32>
    %348 = arith.divf %346, %347 : vector<8x128xf32>
    %349 = vector.extract_strided_slice %338 {offsets = [0, 128], sizes = [8, 128], strides = [1, 1]} : vector<8x384xf32> to vector<8x128xf32>
    %350 = vector.extract_strided_slice %340 {offsets = [0, 128], sizes = [8, 128], strides = [1, 1]} : vector<8x384xf32> to vector<8x128xf32>
    %351 = arith.addf %349, %350 : vector<8x128xf32>
    %352 = arith.negf %351 : vector<8x128xf32>
    %353 = math.exp %352 : vector<8x128xf32>
    %cst_112 = arith.constant 1.000000e+00 : f32
    %354 = vector.broadcast %cst_112 : f32 to vector<8x128xf32>
    %355 = arith.addf %354, %353 : vector<8x128xf32>
    %356 = arith.divf %354, %355 : vector<8x128xf32>
    %357 = vector.extract_strided_slice %338 {offsets = [0, 256], sizes = [8, 128], strides = [1, 1]} : vector<8x384xf32> to vector<8x128xf32>
    %358 = vector.extract_strided_slice %340 {offsets = [0, 256], sizes = [8, 128], strides = [1, 1]} : vector<8x384xf32> to vector<8x128xf32>
    %359 = arith.addf %358, %325 : vector<8x128xf32>
    %360 = arith.mulf %348, %359 : vector<8x128xf32>
    %361 = arith.addf %357, %360 : vector<8x128xf32>
    %362 = math.tanh %361 : vector<8x128xf32>
    %cst_113 = arith.constant 1.000000e+00 : f32
    %363 = vector.broadcast %cst_113 : f32 to vector<8x128xf32>
    %364 = arith.subf %363, %356 : vector<8x128xf32>
    %365 = arith.mulf %364, %362 : vector<8x128xf32>
    %366 = arith.mulf %356, %337 : vector<8x128xf32>
    %367 = arith.addf %365, %366 : vector<8x128xf32>
    %368 = vector.shape_cast %12 : vector<8x1xi1> to vector<8x1xi1>
    %369 = vector.broadcast %368 : vector<8x1xi1> to vector<8x128xi1>
    %370 = arith.select %369, %367, %337 : vector<8x128xi1>, vector<8x128xf32>
    %c0_114 = arith.constant 0 : index
    %c0_115 = arith.constant 0 : index
    %371 = vector.load %arg12[%c0_114, %c0_115] : memref<64x128xf32, #tpu.memory_space<vmem>>, vector<8x128xf32>
    tpu.vector_store %arg12[%c0_114, %c0_115], %370 {strides = array<i32>} : memref<64x128xf32, #tpu.memory_space<vmem>>, vector<8x128xf32>,
    %c8_116 = arith.constant 8 : index
    %c0_117 = arith.constant 0 : index
    %372 = vector.load %arg13[%c8_116, %c0_117] : memref<64x384xf32, #tpu.memory_space<vmem>>, vector<8x384xf32>
    %373 = arith.truncf %370 : vector<8x128xf32> to vector<8x128xbf16>
    %cst_118 = arith.constant dense<0.000000e+00> : vector<8x384xf32>
    %374 = tpu.matmul %373, %321, %cst_118 {dimension_numbers = #tpu.dot_dimension_numbers<[1], [0], [0], [1], [0, 0, 1, 1], [], []>} : vector<8x128xbf16>, vector<128x384xbf16>, vector<8x384xf32> -> vector<8x384xf32>
    %375 = vector.extract_strided_slice %372 {offsets = [0, 0], sizes = [8, 128], strides = [1, 1]} : vector<8x384xf32> to vector<8x128xf32>
    %376 = vector.extract_strided_slice %374 {offsets = [0, 0], sizes = [8, 128], strides = [1, 1]} : vector<8x384xf32> to vector<8x128xf32>
    %377 = arith.addf %375, %376 : vector<8x128xf32>
    %378 = arith.negf %377 : vector<8x128xf32>
    %379 = math.exp %378 : vector<8x128xf32>
    %cst_119 = arith.constant 1.000000e+00 : f32
    %380 = vector.broadcast %cst_119 : f32 to vector<8x128xf32>
    %381 = arith.addf %380, %379 : vector<8x128xf32>
    %382 = arith.divf %380, %381 : vector<8x128xf32>
    %383 = vector.extract_strided_slice %372 {offsets = [0, 128], sizes = [8, 128], strides = [1, 1]} : vector<8x384xf32> to vector<8x128xf32>
    %384 = vector.extract_strided_slice %374 {offsets = [0, 128], sizes = [8, 128], strides = [1, 1]} : vector<8x384xf32> to vector<8x128xf32>
    %385 = arith.addf %383, %384 : vector<8x128xf32>
    %386 = arith.negf %385 : vector<8x128xf32>
    %387 = math.exp %386 : vector<8x128xf32>
    %cst_120 = arith.constant 1.000000e+00 : f32
    %388 = vector.broadcast %cst_120 : f32 to vector<8x128xf32>
    %389 = arith.addf %388, %387 : vector<8x128xf32>
    %390 = arith.divf %388, %389 : vector<8x128xf32>
    %391 = vector.extract_strided_slice %372 {offsets = [0, 256], sizes = [8, 128], strides = [1, 1]} : vector<8x384xf32> to vector<8x128xf32>
    %392 = vector.extract_strided_slice %374 {offsets = [0, 256], sizes = [8, 128], strides = [1, 1]} : vector<8x384xf32> to vector<8x128xf32>
    %393 = arith.addf %392, %325 : vector<8x128xf32>
    %394 = arith.mulf %382, %393 : vector<8x128xf32>
    %395 = arith.addf %391, %394 : vector<8x128xf32>
    %396 = math.tanh %395 : vector<8x128xf32>
    %cst_121 = arith.constant 1.000000e+00 : f32
    %397 = vector.broadcast %cst_121 : f32 to vector<8x128xf32>
    %398 = arith.subf %397, %390 : vector<8x128xf32>
    %399 = arith.mulf %398, %396 : vector<8x128xf32>
    %400 = arith.mulf %390, %370 : vector<8x128xf32>
    %401 = arith.addf %399, %400 : vector<8x128xf32>
    %402 = vector.shape_cast %14 : vector<8x1xi1> to vector<8x1xi1>
    %403 = vector.broadcast %402 : vector<8x1xi1> to vector<8x128xi1>
    %404 = arith.select %403, %401, %370 : vector<8x128xi1>, vector<8x128xf32>
    %c8_122 = arith.constant 8 : index
    %c0_123 = arith.constant 0 : index
    %405 = vector.load %arg12[%c8_122, %c0_123] : memref<64x128xf32, #tpu.memory_space<vmem>>, vector<8x128xf32>
    tpu.vector_store %arg12[%c8_122, %c0_123], %404 {strides = array<i32>} : memref<64x128xf32, #tpu.memory_space<vmem>>, vector<8x128xf32>,
    %c16_124 = arith.constant 16 : index
    %c0_125 = arith.constant 0 : index
    %406 = vector.load %arg13[%c16_124, %c0_125] : memref<64x384xf32, #tpu.memory_space<vmem>>, vector<8x384xf32>
    %407 = arith.truncf %404 : vector<8x128xf32> to vector<8x128xbf16>
    %cst_126 = arith.constant dense<0.000000e+00> : vector<8x384xf32>
    %408 = tpu.matmul %407, %321, %cst_126 {dimension_numbers = #tpu.dot_dimension_numbers<[1], [0], [0], [1], [0, 0, 1, 1], [], []>} : vector<8x128xbf16>, vector<128x384xbf16>, vector<8x384xf32> -> vector<8x384xf32>
    %409 = vector.extract_strided_slice %406 {offsets = [0, 0], sizes = [8, 128], strides = [1, 1]} : vector<8x384xf32> to vector<8x128xf32>
    %410 = vector.extract_strided_slice %408 {offsets = [0, 0], sizes = [8, 128], strides = [1, 1]} : vector<8x384xf32> to vector<8x128xf32>
    %411 = arith.addf %409, %410 : vector<8x128xf32>
    %412 = arith.negf %411 : vector<8x128xf32>
    %413 = math.exp %412 : vector<8x128xf32>
    %cst_127 = arith.constant 1.000000e+00 : f32
    %414 = vector.broadcast %cst_127 : f32 to vector<8x128xf32>
    %415 = arith.addf %414, %413 : vector<8x128xf32>
    %416 = arith.divf %414, %415 : vector<8x128xf32>
    %417 = vector.extract_strided_slice %406 {offsets = [0, 128], sizes = [8, 128], strides = [1, 1]} : vector<8x384xf32> to vector<8x128xf32>
    %418 = vector.extract_strided_slice %408 {offsets = [0, 128], sizes = [8, 128], strides = [1, 1]} : vector<8x384xf32> to vector<8x128xf32>
    %419 = arith.addf %417, %418 : vector<8x128xf32>
    %420 = arith.negf %419 : vector<8x128xf32>
    %421 = math.exp %420 : vector<8x128xf32>
    %cst_128 = arith.constant 1.000000e+00 : f32
    %422 = vector.broadcast %cst_128 : f32 to vector<8x128xf32>
    %423 = arith.addf %422, %421 : vector<8x128xf32>
    %424 = arith.divf %422, %423 : vector<8x128xf32>
    %425 = vector.extract_strided_slice %406 {offsets = [0, 256], sizes = [8, 128], strides = [1, 1]} : vector<8x384xf32> to vector<8x128xf32>
    %426 = vector.extract_strided_slice %408 {offsets = [0, 256], sizes = [8, 128], strides = [1, 1]} : vector<8x384xf32> to vector<8x128xf32>
    %427 = arith.addf %426, %325 : vector<8x128xf32>
    %428 = arith.mulf %416, %427 : vector<8x128xf32>
    %429 = arith.addf %425, %428 : vector<8x128xf32>
    %430 = math.tanh %429 : vector<8x128xf32>
    %cst_129 = arith.constant 1.000000e+00 : f32
    %431 = vector.broadcast %cst_129 : f32 to vector<8x128xf32>
    %432 = arith.subf %431, %424 : vector<8x128xf32>
    %433 = arith.mulf %432, %430 : vector<8x128xf32>
    %434 = arith.mulf %424, %404 : vector<8x128xf32>
    %435 = arith.addf %433, %434 : vector<8x128xf32>
    %436 = vector.shape_cast %16 : vector<8x1xi1> to vector<8x1xi1>
    %437 = vector.broadcast %436 : vector<8x1xi1> to vector<8x128xi1>
    %438 = arith.select %437, %435, %404 : vector<8x128xi1>, vector<8x128xf32>
    %c16_130 = arith.constant 16 : index
    %c0_131 = arith.constant 0 : index
    %439 = vector.load %arg12[%c16_130, %c0_131] : memref<64x128xf32, #tpu.memory_space<vmem>>, vector<8x128xf32>
    tpu.vector_store %arg12[%c16_130, %c0_131], %438 {strides = array<i32>} : memref<64x128xf32, #tpu.memory_space<vmem>>, vector<8x128xf32>,
    %c24_132 = arith.constant 24 : index
    %c0_133 = arith.constant 0 : index
    %440 = vector.load %arg13[%c24_132, %c0_133] : memref<64x384xf32, #tpu.memory_space<vmem>>, vector<8x384xf32>
    %441 = arith.truncf %438 : vector<8x128xf32> to vector<8x128xbf16>
    %cst_134 = arith.constant dense<0.000000e+00> : vector<8x384xf32>
    %442 = tpu.matmul %441, %321, %cst_134 {dimension_numbers = #tpu.dot_dimension_numbers<[1], [0], [0], [1], [0, 0, 1, 1], [], []>} : vector<8x128xbf16>, vector<128x384xbf16>, vector<8x384xf32> -> vector<8x384xf32>
    %443 = vector.extract_strided_slice %440 {offsets = [0, 0], sizes = [8, 128], strides = [1, 1]} : vector<8x384xf32> to vector<8x128xf32>
    %444 = vector.extract_strided_slice %442 {offsets = [0, 0], sizes = [8, 128], strides = [1, 1]} : vector<8x384xf32> to vector<8x128xf32>
    %445 = arith.addf %443, %444 : vector<8x128xf32>
    %446 = arith.negf %445 : vector<8x128xf32>
    %447 = math.exp %446 : vector<8x128xf32>
    %cst_135 = arith.constant 1.000000e+00 : f32
    %448 = vector.broadcast %cst_135 : f32 to vector<8x128xf32>
    %449 = arith.addf %448, %447 : vector<8x128xf32>
    %450 = arith.divf %448, %449 : vector<8x128xf32>
    %451 = vector.extract_strided_slice %440 {offsets = [0, 128], sizes = [8, 128], strides = [1, 1]} : vector<8x384xf32> to vector<8x128xf32>
    %452 = vector.extract_strided_slice %442 {offsets = [0, 128], sizes = [8, 128], strides = [1, 1]} : vector<8x384xf32> to vector<8x128xf32>
    %453 = arith.addf %451, %452 : vector<8x128xf32>
    %454 = arith.negf %453 : vector<8x128xf32>
    %455 = math.exp %454 : vector<8x128xf32>
    %cst_136 = arith.constant 1.000000e+00 : f32
    %456 = vector.broadcast %cst_136 : f32 to vector<8x128xf32>
    %457 = arith.addf %456, %455 : vector<8x128xf32>
    %458 = arith.divf %456, %457 : vector<8x128xf32>
    %459 = vector.extract_strided_slice %440 {offsets = [0, 256], sizes = [8, 128], strides = [1, 1]} : vector<8x384xf32> to vector<8x128xf32>
    %460 = vector.extract_strided_slice %442 {offsets = [0, 256], sizes = [8, 128], strides = [1, 1]} : vector<8x384xf32> to vector<8x128xf32>
    %461 = arith.addf %460, %325 : vector<8x128xf32>
    %462 = arith.mulf %450, %461 : vector<8x128xf32>
    %463 = arith.addf %459, %462 : vector<8x128xf32>
    %464 = math.tanh %463 : vector<8x128xf32>
    %cst_137 = arith.constant 1.000000e+00 : f32
    %465 = vector.broadcast %cst_137 : f32 to vector<8x128xf32>
    %466 = arith.subf %465, %458 : vector<8x128xf32>
    %467 = arith.mulf %466, %464 : vector<8x128xf32>
    %468 = arith.mulf %458, %438 : vector<8x128xf32>
    %469 = arith.addf %467, %468 : vector<8x128xf32>
    %470 = vector.shape_cast %18 : vector<8x1xi1> to vector<8x1xi1>
    %471 = vector.broadcast %470 : vector<8x1xi1> to vector<8x128xi1>
    %472 = arith.select %471, %469, %438 : vector<8x128xi1>, vector<8x128xf32>
    %c24_138 = arith.constant 24 : index
    %c0_139 = arith.constant 0 : index
    %473 = vector.load %arg12[%c24_138, %c0_139] : memref<64x128xf32, #tpu.memory_space<vmem>>, vector<8x128xf32>
    tpu.vector_store %arg12[%c24_138, %c0_139], %472 {strides = array<i32>} : memref<64x128xf32, #tpu.memory_space<vmem>>, vector<8x128xf32>,
    %c32_140 = arith.constant 32 : index
    %c0_141 = arith.constant 0 : index
    %474 = vector.load %arg13[%c32_140, %c0_141] : memref<64x384xf32, #tpu.memory_space<vmem>>, vector<8x384xf32>
    %475 = arith.truncf %472 : vector<8x128xf32> to vector<8x128xbf16>
    %cst_142 = arith.constant dense<0.000000e+00> : vector<8x384xf32>
    %476 = tpu.matmul %475, %321, %cst_142 {dimension_numbers = #tpu.dot_dimension_numbers<[1], [0], [0], [1], [0, 0, 1, 1], [], []>} : vector<8x128xbf16>, vector<128x384xbf16>, vector<8x384xf32> -> vector<8x384xf32>
    %477 = vector.extract_strided_slice %474 {offsets = [0, 0], sizes = [8, 128], strides = [1, 1]} : vector<8x384xf32> to vector<8x128xf32>
    %478 = vector.extract_strided_slice %476 {offsets = [0, 0], sizes = [8, 128], strides = [1, 1]} : vector<8x384xf32> to vector<8x128xf32>
    %479 = arith.addf %477, %478 : vector<8x128xf32>
    %480 = arith.negf %479 : vector<8x128xf32>
    %481 = math.exp %480 : vector<8x128xf32>
    %cst_143 = arith.constant 1.000000e+00 : f32
    %482 = vector.broadcast %cst_143 : f32 to vector<8x128xf32>
    %483 = arith.addf %482, %481 : vector<8x128xf32>
    %484 = arith.divf %482, %483 : vector<8x128xf32>
    %485 = vector.extract_strided_slice %474 {offsets = [0, 128], sizes = [8, 128], strides = [1, 1]} : vector<8x384xf32> to vector<8x128xf32>
    %486 = vector.extract_strided_slice %476 {offsets = [0, 128], sizes = [8, 128], strides = [1, 1]} : vector<8x384xf32> to vector<8x128xf32>
    %487 = arith.addf %485, %486 : vector<8x128xf32>
    %488 = arith.negf %487 : vector<8x128xf32>
    %489 = math.exp %488 : vector<8x128xf32>
    %cst_144 = arith.constant 1.000000e+00 : f32
    %490 = vector.broadcast %cst_144 : f32 to vector<8x128xf32>
    %491 = arith.addf %490, %489 : vector<8x128xf32>
    %492 = arith.divf %490, %491 : vector<8x128xf32>
    %493 = vector.extract_strided_slice %474 {offsets = [0, 256], sizes = [8, 128], strides = [1, 1]} : vector<8x384xf32> to vector<8x128xf32>
    %494 = vector.extract_strided_slice %476 {offsets = [0, 256], sizes = [8, 128], strides = [1, 1]} : vector<8x384xf32> to vector<8x128xf32>
    %495 = arith.addf %494, %325 : vector<8x128xf32>
    %496 = arith.mulf %484, %495 : vector<8x128xf32>
    %497 = arith.addf %493, %496 : vector<8x128xf32>
    %498 = math.tanh %497 : vector<8x128xf32>
    %cst_145 = arith.constant 1.000000e+00 : f32
    %499 = vector.broadcast %cst_145 : f32 to vector<8x128xf32>
    %500 = arith.subf %499, %492 : vector<8x128xf32>
    %501 = arith.mulf %500, %498 : vector<8x128xf32>
    %502 = arith.mulf %492, %472 : vector<8x128xf32>
    %503 = arith.addf %501, %502 : vector<8x128xf32>
    %504 = vector.shape_cast %20 : vector<8x1xi1> to vector<8x1xi1>
    %505 = vector.broadcast %504 : vector<8x1xi1> to vector<8x128xi1>
    %506 = arith.select %505, %503, %472 : vector<8x128xi1>, vector<8x128xf32>
    %c32_146 = arith.constant 32 : index
    %c0_147 = arith.constant 0 : index
    %507 = vector.load %arg12[%c32_146, %c0_147] : memref<64x128xf32, #tpu.memory_space<vmem>>, vector<8x128xf32>
    tpu.vector_store %arg12[%c32_146, %c0_147], %506 {strides = array<i32>} : memref<64x128xf32, #tpu.memory_space<vmem>>, vector<8x128xf32>,
    %c40_148 = arith.constant 40 : index
    %c0_149 = arith.constant 0 : index
    %508 = vector.load %arg13[%c40_148, %c0_149] : memref<64x384xf32, #tpu.memory_space<vmem>>, vector<8x384xf32>
    %509 = arith.truncf %506 : vector<8x128xf32> to vector<8x128xbf16>
    %cst_150 = arith.constant dense<0.000000e+00> : vector<8x384xf32>
    %510 = tpu.matmul %509, %321, %cst_150 {dimension_numbers = #tpu.dot_dimension_numbers<[1], [0], [0], [1], [0, 0, 1, 1], [], []>} : vector<8x128xbf16>, vector<128x384xbf16>, vector<8x384xf32> -> vector<8x384xf32>
    %511 = vector.extract_strided_slice %508 {offsets = [0, 0], sizes = [8, 128], strides = [1, 1]} : vector<8x384xf32> to vector<8x128xf32>
    %512 = vector.extract_strided_slice %510 {offsets = [0, 0], sizes = [8, 128], strides = [1, 1]} : vector<8x384xf32> to vector<8x128xf32>
    %513 = arith.addf %511, %512 : vector<8x128xf32>
    %514 = arith.negf %513 : vector<8x128xf32>
    %515 = math.exp %514 : vector<8x128xf32>
    %cst_151 = arith.constant 1.000000e+00 : f32
    %516 = vector.broadcast %cst_151 : f32 to vector<8x128xf32>
    %517 = arith.addf %516, %515 : vector<8x128xf32>
    %518 = arith.divf %516, %517 : vector<8x128xf32>
    %519 = vector.extract_strided_slice %508 {offsets = [0, 128], sizes = [8, 128], strides = [1, 1]} : vector<8x384xf32> to vector<8x128xf32>
    %520 = vector.extract_strided_slice %510 {offsets = [0, 128], sizes = [8, 128], strides = [1, 1]} : vector<8x384xf32> to vector<8x128xf32>
    %521 = arith.addf %519, %520 : vector<8x128xf32>
    %522 = arith.negf %521 : vector<8x128xf32>
    %523 = math.exp %522 : vector<8x128xf32>
    %cst_152 = arith.constant 1.000000e+00 : f32
    %524 = vector.broadcast %cst_152 : f32 to vector<8x128xf32>
    %525 = arith.addf %524, %523 : vector<8x128xf32>
    %526 = arith.divf %524, %525 : vector<8x128xf32>
    %527 = vector.extract_strided_slice %508 {offsets = [0, 256], sizes = [8, 128], strides = [1, 1]} : vector<8x384xf32> to vector<8x128xf32>
    %528 = vector.extract_strided_slice %510 {offsets = [0, 256], sizes = [8, 128], strides = [1, 1]} : vector<8x384xf32> to vector<8x128xf32>
    %529 = arith.addf %528, %325 : vector<8x128xf32>
    %530 = arith.mulf %518, %529 : vector<8x128xf32>
    %531 = arith.addf %527, %530 : vector<8x128xf32>
    %532 = math.tanh %531 : vector<8x128xf32>
    %cst_153 = arith.constant 1.000000e+00 : f32
    %533 = vector.broadcast %cst_153 : f32 to vector<8x128xf32>
    %534 = arith.subf %533, %526 : vector<8x128xf32>
    %535 = arith.mulf %534, %532 : vector<8x128xf32>
    %536 = arith.mulf %526, %506 : vector<8x128xf32>
    %537 = arith.addf %535, %536 : vector<8x128xf32>
    %538 = vector.shape_cast %22 : vector<8x1xi1> to vector<8x1xi1>
    %539 = vector.broadcast %538 : vector<8x1xi1> to vector<8x128xi1>
    %540 = arith.select %539, %537, %506 : vector<8x128xi1>, vector<8x128xf32>
    %c40_154 = arith.constant 40 : index
    %c0_155 = arith.constant 0 : index
    %541 = vector.load %arg12[%c40_154, %c0_155] : memref<64x128xf32, #tpu.memory_space<vmem>>, vector<8x128xf32>
    tpu.vector_store %arg12[%c40_154, %c0_155], %540 {strides = array<i32>} : memref<64x128xf32, #tpu.memory_space<vmem>>, vector<8x128xf32>,
    %c48_156 = arith.constant 48 : index
    %c0_157 = arith.constant 0 : index
    %542 = vector.load %arg13[%c48_156, %c0_157] : memref<64x384xf32, #tpu.memory_space<vmem>>, vector<8x384xf32>
    %543 = arith.truncf %540 : vector<8x128xf32> to vector<8x128xbf16>
    %cst_158 = arith.constant dense<0.000000e+00> : vector<8x384xf32>
    %544 = tpu.matmul %543, %321, %cst_158 {dimension_numbers = #tpu.dot_dimension_numbers<[1], [0], [0], [1], [0, 0, 1, 1], [], []>} : vector<8x128xbf16>, vector<128x384xbf16>, vector<8x384xf32> -> vector<8x384xf32>
    %545 = vector.extract_strided_slice %542 {offsets = [0, 0], sizes = [8, 128], strides = [1, 1]} : vector<8x384xf32> to vector<8x128xf32>
    %546 = vector.extract_strided_slice %544 {offsets = [0, 0], sizes = [8, 128], strides = [1, 1]} : vector<8x384xf32> to vector<8x128xf32>
    %547 = arith.addf %545, %546 : vector<8x128xf32>
    %548 = arith.negf %547 : vector<8x128xf32>
    %549 = math.exp %548 : vector<8x128xf32>
    %cst_159 = arith.constant 1.000000e+00 : f32
    %550 = vector.broadcast %cst_159 : f32 to vector<8x128xf32>
    %551 = arith.addf %550, %549 : vector<8x128xf32>
    %552 = arith.divf %550, %551 : vector<8x128xf32>
    %553 = vector.extract_strided_slice %542 {offsets = [0, 128], sizes = [8, 128], strides = [1, 1]} : vector<8x384xf32> to vector<8x128xf32>
    %554 = vector.extract_strided_slice %544 {offsets = [0, 128], sizes = [8, 128], strides = [1, 1]} : vector<8x384xf32> to vector<8x128xf32>
    %555 = arith.addf %553, %554 : vector<8x128xf32>
    %556 = arith.negf %555 : vector<8x128xf32>
    %557 = math.exp %556 : vector<8x128xf32>
    %cst_160 = arith.constant 1.000000e+00 : f32
    %558 = vector.broadcast %cst_160 : f32 to vector<8x128xf32>
    %559 = arith.addf %558, %557 : vector<8x128xf32>
    %560 = arith.divf %558, %559 : vector<8x128xf32>
    %561 = vector.extract_strided_slice %542 {offsets = [0, 256], sizes = [8, 128], strides = [1, 1]} : vector<8x384xf32> to vector<8x128xf32>
    %562 = vector.extract_strided_slice %544 {offsets = [0, 256], sizes = [8, 128], strides = [1, 1]} : vector<8x384xf32> to vector<8x128xf32>
    %563 = arith.addf %562, %325 : vector<8x128xf32>
    %564 = arith.mulf %552, %563 : vector<8x128xf32>
    %565 = arith.addf %561, %564 : vector<8x128xf32>
    %566 = math.tanh %565 : vector<8x128xf32>
    %cst_161 = arith.constant 1.000000e+00 : f32
    %567 = vector.broadcast %cst_161 : f32 to vector<8x128xf32>
    %568 = arith.subf %567, %560 : vector<8x128xf32>
    %569 = arith.mulf %568, %566 : vector<8x128xf32>
    %570 = arith.mulf %560, %540 : vector<8x128xf32>
    %571 = arith.addf %569, %570 : vector<8x128xf32>
    %572 = vector.shape_cast %24 : vector<8x1xi1> to vector<8x1xi1>
    %573 = vector.broadcast %572 : vector<8x1xi1> to vector<8x128xi1>
    %574 = arith.select %573, %571, %540 : vector<8x128xi1>, vector<8x128xf32>
    %c48_162 = arith.constant 48 : index
    %c0_163 = arith.constant 0 : index
    %575 = vector.load %arg12[%c48_162, %c0_163] : memref<64x128xf32, #tpu.memory_space<vmem>>, vector<8x128xf32>
    tpu.vector_store %arg12[%c48_162, %c0_163], %574 {strides = array<i32>} : memref<64x128xf32, #tpu.memory_space<vmem>>, vector<8x128xf32>,
    %c56_164 = arith.constant 56 : index
    %c0_165 = arith.constant 0 : index
    %576 = vector.load %arg13[%c56_164, %c0_165] : memref<64x384xf32, #tpu.memory_space<vmem>>, vector<8x384xf32>
    %577 = arith.truncf %574 : vector<8x128xf32> to vector<8x128xbf16>
    %cst_166 = arith.constant dense<0.000000e+00> : vector<8x384xf32>
    %578 = tpu.matmul %577, %321, %cst_166 {dimension_numbers = #tpu.dot_dimension_numbers<[1], [0], [0], [1], [0, 0, 1, 1], [], []>} : vector<8x128xbf16>, vector<128x384xbf16>, vector<8x384xf32> -> vector<8x384xf32>
    %579 = vector.extract_strided_slice %576 {offsets = [0, 0], sizes = [8, 128], strides = [1, 1]} : vector<8x384xf32> to vector<8x128xf32>
    %580 = vector.extract_strided_slice %578 {offsets = [0, 0], sizes = [8, 128], strides = [1, 1]} : vector<8x384xf32> to vector<8x128xf32>
    %581 = arith.addf %579, %580 : vector<8x128xf32>
    %582 = arith.negf %581 : vector<8x128xf32>
    %583 = math.exp %582 : vector<8x128xf32>
    %cst_167 = arith.constant 1.000000e+00 : f32
    %584 = vector.broadcast %cst_167 : f32 to vector<8x128xf32>
    %585 = arith.addf %584, %583 : vector<8x128xf32>
    %586 = arith.divf %584, %585 : vector<8x128xf32>
    %587 = vector.extract_strided_slice %576 {offsets = [0, 128], sizes = [8, 128], strides = [1, 1]} : vector<8x384xf32> to vector<8x128xf32>
    %588 = vector.extract_strided_slice %578 {offsets = [0, 128], sizes = [8, 128], strides = [1, 1]} : vector<8x384xf32> to vector<8x128xf32>
    %589 = arith.addf %587, %588 : vector<8x128xf32>
    %590 = arith.negf %589 : vector<8x128xf32>
    %591 = math.exp %590 : vector<8x128xf32>
    %cst_168 = arith.constant 1.000000e+00 : f32
    %592 = vector.broadcast %cst_168 : f32 to vector<8x128xf32>
    %593 = arith.addf %592, %591 : vector<8x128xf32>
    %594 = arith.divf %592, %593 : vector<8x128xf32>
    %595 = vector.extract_strided_slice %576 {offsets = [0, 256], sizes = [8, 128], strides = [1, 1]} : vector<8x384xf32> to vector<8x128xf32>
    %596 = vector.extract_strided_slice %578 {offsets = [0, 256], sizes = [8, 128], strides = [1, 1]} : vector<8x384xf32> to vector<8x128xf32>
    %597 = arith.addf %596, %325 : vector<8x128xf32>
    %598 = arith.mulf %586, %597 : vector<8x128xf32>
    %599 = arith.addf %595, %598 : vector<8x128xf32>
    %600 = math.tanh %599 : vector<8x128xf32>
    %cst_169 = arith.constant 1.000000e+00 : f32
    %601 = vector.broadcast %cst_169 : f32 to vector<8x128xf32>
    %602 = arith.subf %601, %594 : vector<8x128xf32>
    %603 = arith.mulf %602, %600 : vector<8x128xf32>
    %604 = arith.mulf %594, %574 : vector<8x128xf32>
    %605 = arith.addf %603, %604 : vector<8x128xf32>
    %606 = vector.shape_cast %26 : vector<8x1xi1> to vector<8x1xi1>
    %607 = vector.broadcast %606 : vector<8x1xi1> to vector<8x128xi1>
    %608 = arith.select %607, %605, %574 : vector<8x128xi1>, vector<8x128xf32>
    %c56_170 = arith.constant 56 : index
    %c0_171 = arith.constant 0 : index
    %609 = vector.load %arg12[%c56_170, %c0_171] : memref<64x128xf32, #tpu.memory_space<vmem>>, vector<8x128xf32>
    tpu.vector_store %arg12[%c56_170, %c0_171], %608 {strides = array<i32>} : memref<64x128xf32, #tpu.memory_space<vmem>>, vector<8x128xf32>,
    %c1_172 = arith.constant 1 : index
    %c0_173 = arith.constant 0 : index
    %c0_174 = arith.constant 0 : index
    %610 = vector.load %arg11[%c1_172, %c0_173, %c0_174] : memref<2x8x128xf32, #tpu.memory_space<vmem>>, vector<1x8x128xf32>
    %611 = vector.shape_cast %610 : vector<1x8x128xf32> to vector<8x128xf32>
    %612 = vector.shape_cast %608 : vector<8x128xf32> to vector<1x8x128xf32>
    tpu.vector_store %arg11[%c1_172, %c0_173, %c0_174], %612 {strides = array<i32>} : memref<2x8x128xf32, #tpu.memory_space<vmem>>, vector<1x8x128xf32>,
    %cst_175 = arith.constant 0.000000e+00 : f32
    %613 = vector.broadcast %cst_175 : f32 to vector<24x128xf32>
    %c0_176 = arith.constant 0 : index
    %c0_177 = arith.constant 0 : index
    %614 = vector.load %arg14[%c0_176, %c0_177] : memref<24x128xf32, #tpu.memory_space<vmem>>, vector<24x128xf32>
    tpu.vector_store %arg14[%c0_176, %c0_177], %613 {strides = array<i32>} : memref<24x128xf32, #tpu.memory_space<vmem>>, vector<24x128xf32>,
    %c0_178 = arith.constant 0 : index
    %c0_179 = arith.constant 0 : index
    %615 = vector.load %arg12[%c0_178, %c0_179] : memref<64x128xf32, #tpu.memory_space<vmem>>, vector<4x128xf32>
    %c0_180 = arith.constant 0 : index
    %c0_181 = arith.constant 0 : index
    %616 = vector.load %arg14[%c0_180, %c0_181] : memref<24x128xf32, #tpu.memory_space<vmem>>, vector<4x128xf32>
    tpu.vector_store %arg14[%c0_180, %c0_181], %615 {strides = array<i32>} : memref<24x128xf32, #tpu.memory_space<vmem>>, vector<4x128xf32>,
    %c8_182 = arith.constant 8 : index
    %c0_183 = arith.constant 0 : index
    %617 = vector.load %arg12[%c8_182, %c0_183] : memref<64x128xf32, #tpu.memory_space<vmem>>, vector<4x128xf32>
    %c4 = arith.constant 4 : index
    %c0_184 = arith.constant 0 : index
    %618 = vector.load %arg14[%c4, %c0_184] : memref<24x128xf32, #tpu.memory_space<vmem>>, vector<4x128xf32>
    tpu.vector_store %arg14[%c4, %c0_184], %617 {strides = array<i32>} : memref<24x128xf32, #tpu.memory_space<vmem>>, vector<4x128xf32>,
    %c16_185 = arith.constant 16 : index
    %c0_186 = arith.constant 0 : index
    %619 = vector.load %arg12[%c16_185, %c0_186] : memref<64x128xf32, #tpu.memory_space<vmem>>, vector<4x128xf32>
    %c8_187 = arith.constant 8 : index
    %c0_188 = arith.constant 0 : index
    %620 = vector.load %arg14[%c8_187, %c0_188] : memref<24x128xf32, #tpu.memory_space<vmem>>, vector<4x128xf32>
    tpu.vector_store %arg14[%c8_187, %c0_188], %619 {strides = array<i32>} : memref<24x128xf32, #tpu.memory_space<vmem>>, vector<4x128xf32>,
    %c24_189 = arith.constant 24 : index
    %c0_190 = arith.constant 0 : index
    %621 = vector.load %arg12[%c24_189, %c0_190] : memref<64x128xf32, #tpu.memory_space<vmem>>, vector<3x128xf32>
    %c12 = arith.constant 12 : index
    %c0_191 = arith.constant 0 : index
    %622 = vector.load %arg14[%c12, %c0_191] : memref<24x128xf32, #tpu.memory_space<vmem>>, vector<3x128xf32>
    tpu.vector_store %arg14[%c12, %c0_191], %621 {strides = array<i32>} : memref<24x128xf32, #tpu.memory_space<vmem>>, vector<3x128xf32>,
    %c32_192 = arith.constant 32 : index
    %c0_193 = arith.constant 0 : index
    %623 = vector.load %arg12[%c32_192, %c0_193] : memref<64x128xf32, #tpu.memory_space<vmem>>, vector<3x128xf32>
    %c15 = arith.constant 15 : index
    %c0_194 = arith.constant 0 : index
    %624 = vector.load %arg14[%c15, %c0_194] : memref<24x128xf32, #tpu.memory_space<vmem>>, vector<3x128xf32>
    tpu.vector_store %arg14[%c15, %c0_194], %623 {strides = array<i32>} : memref<24x128xf32, #tpu.memory_space<vmem>>, vector<3x128xf32>,
    %c40_195 = arith.constant 40 : index
    %c0_196 = arith.constant 0 : index
    %625 = vector.load %arg12[%c40_195, %c0_196] : memref<64x128xf32, #tpu.memory_space<vmem>>, vector<2x128xf32>
    %c18 = arith.constant 18 : index
    %c0_197 = arith.constant 0 : index
    %626 = vector.load %arg14[%c18, %c0_197] : memref<24x128xf32, #tpu.memory_space<vmem>>, vector<2x128xf32>
    tpu.vector_store %arg14[%c18, %c0_197], %625 {strides = array<i32>} : memref<24x128xf32, #tpu.memory_space<vmem>>, vector<2x128xf32>,
    %c48_198 = arith.constant 48 : index
    %c0_199 = arith.constant 0 : index
    %627 = vector.load %arg12[%c48_198, %c0_199] : memref<64x128xf32, #tpu.memory_space<vmem>>, vector<2x128xf32>
    %c20 = arith.constant 20 : index
    %c0_200 = arith.constant 0 : index
    %628 = vector.load %arg14[%c20, %c0_200] : memref<24x128xf32, #tpu.memory_space<vmem>>, vector<2x128xf32>
    tpu.vector_store %arg14[%c20, %c0_200], %627 {strides = array<i32>} : memref<24x128xf32, #tpu.memory_space<vmem>>, vector<2x128xf32>,
    %c56_201 = arith.constant 56 : index
    %c0_202 = arith.constant 0 : index
    %629 = vector.load %arg12[%c56_201, %c0_202] : memref<64x128xf32, #tpu.memory_space<vmem>>, vector<1x128xf32>
    %c22 = arith.constant 22 : index
    %c0_203 = arith.constant 0 : index
    %630 = vector.load %arg14[%c22, %c0_203] : memref<24x128xf32, #tpu.memory_space<vmem>>, vector<1x128xf32>
    tpu.vector_store %arg14[%c22, %c0_203], %629 {strides = array<i32>} : memref<24x128xf32, #tpu.memory_space<vmem>>, vector<1x128xf32>,
    %c0_204 = arith.constant 0 : index
    %c0_205 = arith.constant 0 : index
    %631 = vector.load %arg14[%c0_204, %c0_205] : memref<24x128xf32, #tpu.memory_space<vmem>>, vector<24x128xf32>
    %632 = arith.truncf %631 : vector<24x128xf32> to vector<24x128xbf16>
    %c0_206 = arith.constant 0 : index
    %c0_207 = arith.constant 0 : index
    %633 = vector.load %arg8[%c0_206, %c0_207] : memref<128x128xbf16, #tpu.memory_space<vmem>>, vector<128x128xbf16>
    %cst_208 = arith.constant dense<0.000000e+00> : vector<24x128xf32>
    %634 = tpu.matmul %632, %633, %cst_208 {dimension_numbers = #tpu.dot_dimension_numbers<[1], [0], [0], [1], [0, 0, 1, 1], [], []>} : vector<24x128xbf16>, vector<128x128xbf16>, vector<24x128xf32> -> vector<24x128xf32>
    %c0_209 = arith.constant 0 : index
    %c0_210 = arith.constant 0 : index
    %635 = vector.load %arg9[%c0_209, %c0_210] : memref<1x128xf32, #tpu.memory_space<vmem>>, vector<1x128xf32>
    %636 = vector.broadcast %635 : vector<1x128xf32> to vector<24x128xf32>
    %637 = arith.addf %634, %636 : vector<24x128xf32>
    %cst_211 = arith.constant dense<0xFF800000> : vector<24xf32>
    %638 = vector.multi_reduction <maximumf>, %637, %cst_211 [1] : vector<24x128xf32> to vector<24xf32>
    %639 = vector.shape_cast %638 : vector<24xf32> to vector<24x1xf32>
    %640 = vector.broadcast %639 : vector<24x1xf32> to vector<24x128xf32>
    %641 = arith.subf %637, %640 : vector<24x128xf32>
    %642 = math.exp %641 : vector<24x128xf32>
    %cst_212 = arith.constant dense<0.000000e+00> : vector<24xf32>
    %643 = vector.multi_reduction <add>, %642, %cst_212 [1] : vector<24x128xf32> to vector<24xf32>
    %644 = vector.shape_cast %643 : vector<24xf32> to vector<24x1xf32>
    %645 = math.log %644 : vector<24x1xf32>
    %646 = vector.broadcast %645 : vector<24x1xf32> to vector<24x128xf32>
    %647 = arith.subf %641, %646 : vector<24x128xf32>
    %c0_213 = arith.constant 0 : index
    %c0_214 = arith.constant 0 : index
    %648 = vector.load %arg10[%c0_213, %c0_214] : memref<24x128xf32, #tpu.memory_space<vmem>>, vector<24x128xf32>
    tpu.vector_store %arg10[%c0_213, %c0_214], %647 {strides = array<i32>} : memref<24x128xf32, #tpu.memory_space<vmem>>, vector<24x128xf32>,
    return
  }
}

</mosaic_0001>

<llo_original>
// kernel: tpu_custom_call.1
$region0: #{tpu_custom_call.1}
  #allocation0 [shape = 'u32[]', space=smem, size = 0x4, offset = 0x4, fixed_abs, tag = 'smem constant byte address 0x4 - core index']
  #allocation1 [shape = 'u32[144,128]{1,0:T(1,128)}', space=vmem, size = 0x12000, scoped, tag = 'internal scratch']
  #allocation2 [shape = 'f32[64,128]{1,0:T(8,128)}', space=vmem, size = 0x8000, scoped, tag = 'scratch operand']
  #allocation3 [shape = 'f32[64,384]{1,0:T(8,128)}', space=vmem, size = 0x18000, scoped, tag = 'scratch operand']
  #allocation4 [shape = 'f32[24,128]{1,0:T(8,128)}', space=vmem, size = 0x3000, scoped, tag = 'scratch operand']
  %s0 = inlined_call_operand.vmem [shape: s32[64,1], index: 0, kind: input, shape index: {}]
  %s1 = inlined_call_operand.vmem [shape: s32[8,1], index: 1, kind: input, shape index: {}]
  %s2 = inlined_call_operand.hbm [shape: f32[128,128], index: 2, kind: input, shape index: {}]
  %s3 = inlined_call_operand.hbm [shape: bf16[2,128,384], index: 3, kind: input, shape index: {}]
  %s4 = inlined_call_operand.hbm [shape: bf16[2,128,384], index: 4, kind: input, shape index: {}]
  %s5 = inlined_call_operand.vmem [shape: f32[2,1,384], index: 5, kind: input, shape index: {}]
  %s6 = inlined_call_operand.vmem [shape: f32[2,1,128], index: 6, kind: input, shape index: {}]
  %s7 = inlined_call_operand.vmem [shape: f32[2,8,128], index: 7, kind: input, shape index: {}]
  %s8 = inlined_call_operand.vmem [shape: bf16[128,128], index: 8, kind: input, shape index: {}]
  %s9 = inlined_call_operand.vmem [shape: f32[1,128], index: 9, kind: input, shape index: {}]
  %s10 = inlined_call_operand.hbm [shape: f32[24,128], index: 10, kind: output, shape index: {0}]
  %s11 = inlined_call_operand.hbm [shape: f32[2,8,128], index: 11, kind: output, shape index: {1}]
  %12 = xla_tuple %s10, %s11
  %s13 = sld [smem:[#allocation0]]
  $region70: #{tpu_custom_call.1} parent=0
    _
  %s15 = ssub.s32 1, %s13
  %s16 = scalar_select 0, %s15, %s13
  $region1: #{tpu_custom_call.1} parent=0
    #allocation5 [shape = 'u8[65536]{0}', space=vmem, size = 0x10000, scoped, tag = 'input window, operand 2, single buffered']
    #allocation6 [shape = 's32[1]{0}', space=sflag, size = 0x4, scoped, tag = 'scoped memory for tpu_custom_call.1']
    #allocation7 [shape = 's32[1]{0}', space=sflag, size = 0x4, scoped, tag = 'scoped memory for tpu_custom_call.1']
    #allocation8 [shape = 'u8[196608]{0}', space=vmem, size = 0x30000, scoped, tag = 'input window, operand 3, single buffered']
    #allocation9 [shape = 's32[1]{0}', space=sflag, size = 0x4, scoped, tag = 'scoped memory for tpu_custom_call.1']
    #allocation10 [shape = 'u8[196608]{0}', space=vmem, size = 0x30000, scoped, tag = 'input window, operand 4, single buffered']
    #allocation11 [shape = 'u8[12288]{0}', space=vmem, size = 0x3000, scoped, tag = 'output window, operand 0, single buffered']
    #allocation12 [shape = 'u8[8192]{0}', space=vmem, size = 0x2000, scoped, tag = 'output window, operand 1, single buffered']
    #allocation13 [shape = 's32[1]{0}', space=sflag, size = 0x4, scoped, tag = 'scoped memory for tpu_custom_call.1']
    %17 = vsyncpa [#allocation6], 0
    %18 = vsyncpa [#allocation9], 0
    %19 = vsyncpa [#allocation7], 0
    %20 = vsyncpa [#allocation13], 0
    // Predicated region
    $region2: #{tpu_custom_call.1} parent=1 // pred_check
      _
    $region3: #{tpu_custom_call.1} parent=1 // pred_check_branch
      %22 = sbr.rel (0) target = $region5
    $region4: #{tpu_custom_call.1} parent=1 // pred_region
      _
    $region5: #{tpu_custom_call.1} parent=1 // pred_fallthru
      _
    // Predicated region
    $region6: #{tpu_custom_call.1} parent=1 // pred_check
      _
    $region7: #{tpu_custom_call.1} parent=1 // pred_check_branch
      %24 = sbr.rel (0) target = $region9
    $region8: #{tpu_custom_call.1} parent=1 // pred_region
      _
    $region9: #{tpu_custom_call.1} parent=1 // pred_fallthru
      _
    // Predicated region
    $region10: #{tpu_custom_call.1} parent=1 // pred_check
      _
    $region11: #{tpu_custom_call.1} parent=1 // pred_check_branch
      %26 = sbr.rel (0) target = $region13
    $region12: #{tpu_custom_call.1} parent=1 // pred_region
      %s28 = ssub.s32 2048, 2048
      %29 = vsyncadd [#allocation6], %s28
      %s30 = sshll.u32 [#allocation5], 4
      %s31 = int_to_ptr.vmem [resolvable:$true] %s30
      %36 = dma.hbm_to_vmem [thread:$0]  %s2, 2048, %s31, [#allocation6], 128, 128, 8
    $region13: #{tpu_custom_call.1} parent=1 // pred_fallthru
      _
    // Predicated region
    $region14: #{tpu_custom_call.1} parent=1 // pred_check
      _
    $region15: #{tpu_custom_call.1} parent=1 // pred_check_branch
      %38 = sbr.rel (0) target = $region17
    $region16: #{tpu_custom_call.1} parent=1 // pred_region
      %s40 = ssub.s32 6144, 6144
      %41 = vsyncadd [#allocation9], %s40
      %s42 = sshll.u32 [#allocation8], 4
      %s43 = int_to_ptr.vmem [resolvable:$true] %s42
      %48 = dma.hbm_to_vmem [thread:$0]  %s3, 6144, %s43, [#allocation9], 192, 192, 12
    $region17: #{tpu_custom_call.1} parent=1 // pred_fallthru
      _
    // Predicated region
    $region18: #{tpu_custom_call.1} parent=1 // pred_check
      _
    $region19: #{tpu_custom_call.1} parent=1 // pred_check_branch
      %50 = sbr.rel (0) target = $region21
    $region20: #{tpu_custom_call.1} parent=1 // pred_region
      %s52 = ssub.s32 6144, 6144
      %53 = vsyncadd [#allocation9], %s52
      %s54 = sshll.u32 [#allocation10], 4
      %s55 = int_to_ptr.vmem [resolvable:$true] %s54
      %60 = dma.hbm_to_vmem [thread:$0]  %s4, 6144, %s55, [#allocation9], 192, 192, 12
    $region21: #{tpu_custom_call.1} parent=1 // pred_fallthru
      _
    // Predicated region
    $region22: #{tpu_custom_call.1} parent=1 // pred_check
      _
    $region23: #{tpu_custom_call.1} parent=1 // pred_check_branch
      %62 = sbr.rel (0) target = $region25
    $region24: #{tpu_custom_call.1} parent=1 // pred_region
      _
    $region25: #{tpu_custom_call.1} parent=1 // pred_fallthru
      _
    // Predicated region
    $region26: #{tpu_custom_call.1} parent=1 // pred_check
      _
    $region27: #{tpu_custom_call.1} parent=1 // pred_check_branch
      %64 = sbr.rel (0) target = $region29
    $region28: #{tpu_custom_call.1} parent=1 // pred_region
      _
    $region29: #{tpu_custom_call.1} parent=1 // pred_fallthru
      _
    // Predicated region
    $region30: #{tpu_custom_call.1} parent=1 // pred_check
      _
    $region31: #{tpu_custom_call.1} parent=1 // pred_check_branch
      %66 = sbr.rel (0) target = $region33
    $region32: #{tpu_custom_call.1} parent=1 // pred_region
      _
    $region33: #{tpu_custom_call.1} parent=1 // pred_fallthru
      _
    // Predicated region
    $region34: #{tpu_custom_call.1} parent=1 // pred_check
      _
    $region35: #{tpu_custom_call.1} parent=1 // pred_check_branch
      %68 = sbr.rel (0) target = $region37
    $region36: #{tpu_custom_call.1} parent=1 // pred_region
      _
    $region37: #{tpu_custom_call.1} parent=1 // pred_fallthru
      _
    // Predicated region
    $region38: #{tpu_custom_call.1} parent=1 // pred_check
      _
    $region39: #{tpu_custom_call.1} parent=1 // pred_check_branch
      %70 = sbr.rel (0) target = $region41
    $region40: #{tpu_custom_call.1} parent=1 // pred_region
      _
    $region41: #{tpu_custom_call.1} parent=1 // pred_fallthru
      _
    // Predicated region
    $region42: #{tpu_custom_call.1} parent=1 // pred_check
      _
    $region43: #{tpu_custom_call.1} parent=1 // pred_check_branch
      %72 = sbr.rel (0) target = $region45
    $region44: #{tpu_custom_call.1} parent=1 // pred_region
      %73 = dma.done [#allocation6], 2048
    $region45: #{tpu_custom_call.1} parent=1 // pred_fallthru
      _
    // Predicated region
    $region46: #{tpu_custom_call.1} parent=1 // pred_check
      _
    $region47: #{tpu_custom_call.1} parent=1 // pred_check_branch
      %75 = sbr.rel (0) target = $region49
    $region48: #{tpu_custom_call.1} parent=1 // pred_region
      %76 = dma.done [#allocation9], 6144
    $region49: #{tpu_custom_call.1} parent=1 // pred_fallthru
      _
    // Predicated region
    $region50: #{tpu_custom_call.1} parent=1 // pred_check
      _
    $region51: #{tpu_custom_call.1} parent=1 // pred_check_branch
      %78 = sbr.rel (0) target = $region53
    $region52: #{tpu_custom_call.1} parent=1 // pred_region
      %79 = dma.done [#allocation9], 6144
    $region53: #{tpu_custom_call.1} parent=1 // pred_fallthru
      _
    %v81 = vlaneseq
    %v82 = vand.u32 %v81, 127
    %v83 = vld [vmem:[%s0] sm:$0xff]
    %v84 = vld [vmem:[%s0 + $0x8] sm:$0xff]
    %v85 = vld [vmem:[%s0 + $0x10] sm:$0xff]
    %v86 = vld [vmem:[%s0 + $0x18] sm:$0xff]
    %v87 = vld [vmem:[%s0 + $0x20] sm:$0xff]
    %v88 = vld [vmem:[%s0 + $0x28] sm:$0xff]
    %v89 = vld [vmem:[%s0 + $0x30] sm:$0xff]
    %v90 = vld [vmem:[%s0 + $0x38] sm:$0xff]
    %91 = vset.pattern.permute.xlu0 0
    %92 = vperm.xlu0 %91, %v83
    %v93 = vpop.permute.xlu0 %92
    %94 = vset.pattern.permute.xlu0 0
    %95 = vperm.xlu0 %94, %v84
    %v96 = vpop.permute.xlu0 %95
    %97 = vset.pattern.permute.xlu0 0
    %98 = vperm.xlu0 %97, %v85
    %v99 = vpop.permute.xlu0 %98
    %100 = vset.pattern.permute.xlu0 0
    %101 = vperm.xlu0 %100, %v86
    %v102 = vpop.permute.xlu0 %101
    %103 = vset.pattern.permute.xlu0 0
    %104 = vperm.xlu0 %103, %v87
    %v105 = vpop.permute.xlu0 %104
    %106 = vset.pattern.permute.xlu0 0
    %107 = vperm.xlu0 %106, %v88
    %v108 = vpop.permute.xlu0 %107
    %109 = vset.pattern.permute.xlu0 0
    %110 = vperm.xlu0 %109, %v89
    %v111 = vpop.permute.xlu0 %110
    %112 = vset.pattern.permute.xlu0 0
    %113 = vperm.xlu0 %112, %v90
    %v114 = vpop.permute.xlu0 %113
    %vm115 = vcmp.eq.s32.totalorder %v93, %v82
    %vm116 = vcmp.eq.s32.totalorder %v96, %v82
    %vm117 = vcmp.eq.s32.totalorder %v99, %v82
    %vm118 = vcmp.eq.s32.totalorder %v102, %v82
    %vm119 = vcmp.eq.s32.totalorder %v105, %v82
    %vm120 = vcmp.eq.s32.totalorder %v108, %v82
    %vm121 = vcmp.eq.s32.totalorder %v111, %v82
    %vm122 = vcmp.eq.s32.totalorder %v114, %v82
    %v123 = vsel %vm115, 1.0, 0.0
    %v124 = vsel %vm116, 1.0, 0.0
    %v125 = vsel %vm117, 1.0, 0.0
    %v126 = vsel %vm118, 1.0, 0.0
    %v127 = vsel %vm119, 1.0, 0.0
    %v128 = vsel %vm120, 1.0, 0.0
    %v129 = vsel %vm121, 1.0, 0.0
    %v130 = vsel %vm122, 1.0, 0.0
    %v131 = vld [vmem:[#allocation5] sm:$0xff]
    %v132 = vld [vmem:[#allocation5 + $0x8] sm:$0xff]
    %v133 = vld [vmem:[#allocation5 + $0x10] sm:$0xff]
    %v134 = vld [vmem:[#allocation5 + $0x18] sm:$0xff]
    %v135 = vld [vmem:[#allocation5 + $0x20] sm:$0xff]
    %v136 = vld [vmem:[#allocation5 + $0x28] sm:$0xff]
    %v137 = vld [vmem:[#allocation5 + $0x30] sm:$0xff]
    %v138 = vld [vmem:[#allocation5 + $0x38] sm:$0xff]
    %v139 = vld [vmem:[#allocation5 + $0x40] sm:$0xff]
    %v140 = vld [vmem:[#allocation5 + $0x48] sm:$0xff]
    %v141 = vld [vmem:[#allocation5 + $0x50] sm:$0xff]
    %v142 = vld [vmem:[#allocation5 + $0x58] sm:$0xff]
    %v143 = vld [vmem:[#allocation5 + $0x60] sm:$0xff]
    %v144 = vld [vmem:[#allocation5 + $0x68] sm:$0xff]
    %v145 = vld [vmem:[#allocation5 + $0x70] sm:$0xff]
    %v146 = vld [vmem:[#allocation5 + $0x78] sm:$0xff]
    %147 = vmatprep.subr.mxu0 0.0
    %148 = vmatpush1.msra.mxu0 %v131
    %149 = vmatprep.subr.mxu0 0.0
    %150 = vmatpush1.msra.mxu0 %v132
    %151 = vmatprep.subr.mxu0 0.0
    %152 = vmatpush1.msra.mxu0 %v133
    %153 = vmatprep.subr.mxu0 0.0
    %154 = vmatpush1.msra.mxu0 %v134
    %155 = vmatprep.subr.mxu0 0.0
    %156 = vmatpush1.msra.mxu0 %v135
    %157 = vmatprep.subr.mxu0 0.0
    %158 = vmatpush1.msra.mxu0 %v136
    %159 = vmatprep.subr.mxu0 0.0
    %160 = vmatpush1.msra.mxu0 %v137
    %161 = vmatprep.subr.mxu0 0.0
    %162 = vmatpush1.msra.mxu0 %v138
    %163 = vmatprep.subr.mxu0 0.0
    %164 = vmatpush1.msra.mxu0 %v139
    %165 = vmatprep.subr.mxu0 0.0
    %166 = vmatpush1.msra.mxu0 %v140
    %167 = vmatprep.subr.mxu0 0.0
    %168 = vmatpush1.msra.mxu0 %v141
    %169 = vmatprep.subr.mxu0 0.0
    %170 = vmatpush1.msra.mxu0 %v142
    %171 = vmatprep.subr.mxu0 0.0
    %172 = vmatpush1.msra.mxu0 %v143
    %173 = vmatprep.subr.mxu0 0.0
    %174 = vmatpush1.msra.mxu0 %v144
    %175 = vmatprep.subr.mxu0 0.0
    %176 = vmatpush1.msra.mxu0 %v145
    %177 = vmatprep.subr.mxu0 0.0
    %178 = vmatpush1.msra.mxu0 %v146
    %179 = vmatprep.subr.mxu0 0.0
    %180 = vmatpush1.msra.mxu0 0.0
    %181 = vmatprep.subr.mxu0 0.0
    %182 = vmatpush1.msra.mxu0 0.0
    %183 = vmatprep.subr.mxu0 0.0
    %184 = vmatpush1.msra.mxu0 0.0
    %185 = vmatprep.subr.mxu0 0.0
    %186 = vmatpush1.msra.mxu0 0.0
    %187 = vmatprep.subr.mxu0 0.0
    %188 = vmatpush1.msra.mxu0 0.0
    %189 = vmatprep.subr.mxu0 0.0
    %190 = vmatpush1.msra.mxu0 0.0
    %191 = vmatprep.subr.mxu0 0.0
    %192 = vmatpush1.msra.mxu0 0.0
    %193 = vmatprep.subr.mxu0 0.0
    %194 = vmatpush1.msra.mxu0 0.0
    %195 = vmatprep.subr.mxu0 0.0
    %196 = vmatpush1.msra.mxu0 0.0
    %197 = vmatprep.subr.mxu0 0.0
    %198 = vmatpush1.msra.mxu0 0.0
    %199 = vmatprep.subr.mxu0 0.0
    %200 = vmatpush1.msra.mxu0 0.0
    %201 = vmatprep.subr.mxu0 0.0
    %202 = vmatpush1.msra.mxu0 0.0
    %203 = vmatprep.subr.mxu0 0.0
    %204 = vmatpush1.msra.mxu0 0.0
    %205 = vmatprep.subr.mxu0 0.0
    %206 = vmatpush1.msra.mxu0 0.0
    %207 = vmatprep.subr.mxu0 0.0
    %208 = vmatpush1.msra.mxu0 0.0
    %209 = vmatprep.subr.mxu0 0.0
    %210 = vmatpush1.msra.mxu0 0.0
    %211 = vmatprep.mubr.f32.mxu0 0.0
    %212 = vmatmul.mubr.f32.gmra.mrb[0].mxu0 %v123
    %v213 = vpop.f32.mrb[0].mxu0
    %v214 = vadd.f32 0.0, %v213
    %v215 = vpop.f32.mrb[0].mxu0
    %216 = vmatprep.mubr.f32.mxu0 0.0
    %217 = vmatmul.mubr.f32.gmra.mrb[0].mxu0 %v124
    %v218 = vpop.f32.mrb[0].mxu0
    %v219 = vadd.f32 0.0, %v218
    %v220 = vpop.f32.mrb[0].mxu0
    %221 = vmatprep.mubr.f32.mxu0 0.0
    %222 = vmatmul.mubr.f32.gmra.mrb[0].mxu0 %v125
    %v223 = vpop.f32.mrb[0].mxu0
    %v224 = vadd.f32 0.0, %v223
    %v225 = vpop.f32.mrb[0].mxu0
    %226 = vmatprep.mubr.f32.mxu0 0.0
    %227 = vmatmul.mubr.f32.gmra.mrb[0].mxu0 %v126
    %v228 = vpop.f32.mrb[0].mxu0
    %v229 = vadd.f32 0.0, %v228
    %v230 = vpop.f32.mrb[0].mxu0
    %231 = vmatprep.mubr.f32.mxu0 0.0
    %232 = vmatmul.mubr.f32.gmra.mrb[0].mxu0 %v127
    %v233 = vpop.f32.mrb[0].mxu0
    %v234 = vadd.f32 0.0, %v233
    %v235 = vpop.f32.mrb[0].mxu0
    %236 = vmatprep.mubr.f32.mxu0 0.0
    %237 = vmatmul.mubr.f32.gmra.mrb[0].mxu0 %v128
    %v238 = vpop.f32.mrb[0].mxu0
    %v239 = vadd.f32 0.0, %v238
    %v240 = vpop.f32.mrb[0].mxu0
    %241 = vmatprep.mubr.f32.mxu0 0.0
    %242 = vmatmul.mubr.f32.gmra.mrb[0].mxu0 %v129
    %v243 = vpop.f32.mrb[0].mxu0
    %v244 = vadd.f32 0.0, %v243
    %v245 = vpop.f32.mrb[0].mxu0
    %246 = vmatprep.mubr.f32.mxu0 0.0
    %247 = vmatmul.mubr.f32.gmra.mrb[0].mxu0 %v130
    %v248 = vpop.f32.mrb[0].mxu0
    %v249 = vadd.f32 0.0, %v248
    %v250 = vpop.f32.mrb[0].mxu0
    %251 = vdwg.mxu0
    %252 = vst [vmem:[#allocation2] sm:$0xff] %v214
    %253 = vst [vmem:[#allocation2 + $0x8] sm:$0xff] %v219
    %254 = vst [vmem:[#allocation2 + $0x10] sm:$0xff] %v224
    %255 = vst [vmem:[#allocation2 + $0x18] sm:$0xff] %v229
    %256 = vst [vmem:[#allocation2 + $0x20] sm:$0xff] %v234
    %257 = vst [vmem:[#allocation2 + $0x28] sm:$0xff] %v239
    %258 = vst [vmem:[#allocation2 + $0x30] sm:$0xff] %v244
    %259 = vst [vmem:[#allocation2 + $0x38] sm:$0xff] %v249
    %v260 = vld [vmem:[%s1] sm:$0xff]
    %vm261 = vcmp.gt.s32.totalorder %v260, 0
    %vm262 = vcmp.gt.s32.totalorder %v260, 1
    %vm263 = vcmp.gt.s32.totalorder %v260, 2
    %vm264 = vcmp.gt.s32.totalorder %v260, 3
    %vm265 = vcmp.gt.s32.totalorder %v260, 4
    %vm266 = vcmp.gt.s32.totalorder %v260, 5
    %vm267 = vcmp.gt.s32.totalorder %v260, 6
    %vm268 = vcmp.gt.s32.totalorder %v260, 7
    %v269 = vld [vmem:[#allocation10] sm:$0xff]
    %v270 = vld [vmem:[#allocation10 + $0x8] sm:$0xf]
    %v271 = vld [vmem:[#allocation10 + $0xc] sm:$0xff]
    %v272 = vld [vmem:[#allocation10 + $0x14] sm:$0xf]
    %v273 = vld [vmem:[#allocation10 + $0x18] sm:$0xff]
    %v274 = vld [vmem:[#allocation10 + $0x20] sm:$0xf]
    %v275 = vld [vmem:[#allocation10 + $0x24] sm:$0xff]
    %v276 = vld [vmem:[#allocation10 + $0x2c] sm:$0xf]
    %v277 = vld [vmem:[#allocation10 + $0x30] sm:$0xff]
    %v278 = vld [vmem:[#allocation10 + $0x38] sm:$0xf]
    %v279 = vld [vmem:[#allocation10 + $0x3c] sm:$0xff]
    %v280 = vld [vmem:[#allocation10 + $0x44] sm:$0xf]
    %v281 = vld [vmem:[#allocation10 + $0x48] sm:$0xff]
    %v282 = vld [vmem:[#allocation10 + $0x50] sm:$0xf]
    %v283 = vld [vmem:[#allocation10 + $0x54] sm:$0xff]
    %v284 = vld [vmem:[#allocation10 + $0x5c] sm:$0xf]
    %v285 = vld [vmem:[#allocation10 + $0x60] sm:$0xff]
    %v286 = vld [vmem:[#allocation10 + $0x68] sm:$0xf]
    %v287 = vld [vmem:[#allocation10 + $0x6c] sm:$0xff]
    %v288 = vld [vmem:[#allocation10 + $0x74] sm:$0xf]
    %v289 = vld [vmem:[#allocation10 + $0x78] sm:$0xff]
    %v290 = vld [vmem:[#allocation10 + $0x80] sm:$0xf]
    %v291 = vld [vmem:[#allocation10 + $0x84] sm:$0xff]
    %v292 = vld [vmem:[#allocation10 + $0x8c] sm:$0xf]
    %v293 = vld [vmem:[#allocation10 + $0x90] sm:$0xff]
    %v294 = vld [vmem:[#allocation10 + $0x98] sm:$0xf]
    %v295 = vld [vmem:[#allocation10 + $0x9c] sm:$0xff]
    %v296 = vld [vmem:[#allocation10 + $0xa4] sm:$0xf]
    %v297 = vld [vmem:[#allocation10 + $0xa8] sm:$0xff]
    %v298 = vld [vmem:[#allocation10 + $0xb0] sm:$0xf]
    %v299 = vld [vmem:[#allocation10 + $0xb4] sm:$0xff]
    %v300 = vld [vmem:[#allocation10 + $0xbc] sm:$0xf]
    %v301 = vld [vmem:[%s6] sm:$0x1]
    %v303 = vlaneseq
    %v304 = vshrl.u32 %v303, 7
    %v305 = vsub.s32 0, %v304
    %v306 = vrot.slane %v301, %v305
    %v308 = vld [vmem:[#allocation2] sm:$0xff]
    %v309 = vld [vmem:[#allocation2 + $0x8] sm:$0xff]
    %v310 = vld [vmem:[#allocation2 + $0x10] sm:$0xff]
    %v311 = vld [vmem:[#allocation2 + $0x18] sm:$0xff]
    %v312 = vld [vmem:[#allocation2 + $0x20] sm:$0xff]
    %v313 = vld [vmem:[#allocation2 + $0x28] sm:$0xff]
    %v314 = vld [vmem:[#allocation2 + $0x30] sm:$0xff]
    %v315 = vld [vmem:[#allocation2 + $0x38] sm:$0xff]
    %v316 = vpack.c.bf16 %v309, %v308
    %v317 = vpack.c.bf16 %v311, %v310
    %v318 = vpack.c.bf16 %v313, %v312
    %v319 = vpack.c.bf16 %v315, %v314
    %v320 = vld [vmem:[#allocation8] sm:$0xff]
    %v321 = vld [vmem:[#allocation8 + $0x8] sm:$0xf]
    %v322 = vld [vmem:[#allocation8 + $0xc] sm:$0xff]
    %v323 = vld [vmem:[#allocation8 + $0x14] sm:$0xf]
    %v324 = vld [vmem:[#allocation8 + $0x18] sm:$0xff]
    %v325 = vld [vmem:[#allocation8 + $0x20] sm:$0xf]
    %v326 = vld [vmem:[#allocation8 + $0x24] sm:$0xff]
    %v327 = vld [vmem:[#allocation8 + $0x2c] sm:$0xf]
    %v328 = vld [vmem:[#allocation8 + $0x30] sm:$0xff]
    %v329 = vld [vmem:[#allocation8 + $0x38] sm:$0xf]
    %v330 = vld [vmem:[#allocation8 + $0x3c] sm:$0xff]
    %v331 = vld [vmem:[#allocation8 + $0x44] sm:$0xf]
    %v332 = vld [vmem:[#allocation8 + $0x48] sm:$0xff]
    %v333 = vld [vmem:[#allocation8 + $0x50] sm:$0xf]
    %v334 = vld [vmem:[#allocation8 + $0x54] sm:$0xff]
    %v335 = vld [vmem:[#allocation8 + $0x5c] sm:$0xf]
    %v336 = vld [vmem:[#allocation8 + $0x60] sm:$0xff]
    %v337 = vld [vmem:[#allocation8 + $0x68] sm:$0xf]
    %v338 = vld [vmem:[#allocation8 + $0x6c] sm:$0xff]
    %v339 = vld [vmem:[#allocation8 + $0x74] sm:$0xf]
    %v340 = vld [vmem:[#allocation8 + $0x78] sm:$0xff]
    %v341 = vld [vmem:[#allocation8 + $0x80] sm:$0xf]
    %v342 = vld [vmem:[#allocation8 + $0x84] sm:$0xff]
    %v343 = vld [vmem:[#allocation8 + $0x8c] sm:$0xf]
    %v344 = vld [vmem:[#allocation8 + $0x90] sm:$0xff]
    %v345 = vld [vmem:[#allocation8 + $0x98] sm:$0xf]
    %v346 = vld [vmem:[#allocation8 + $0x9c] sm:$0xff]
    %v347 = vld [vmem:[#allocation8 + $0xa4] sm:$0xf]
    %v348 = vld [vmem:[#allocation8 + $0xa8] sm:$0xff]
    %v349 = vld [vmem:[#allocation8 + $0xb0] sm:$0xf]
    %v350 = vld [vmem:[#allocation8 + $0xb4] sm:$0xff]
    %v351 = vld [vmem:[#allocation8 + $0xbc] sm:$0xf]
    %v352 = vld [vmem:[%s5] sm:$0x7]
    %v354 = vlaneseq
    %v355 = vshrl.u32 %v354, 7
    %v356 = vsub.s32 0, %v355
    %v357 = vrot.slane %v352, %v356
    %v358 = vlaneseq
    %v359 = vshrl.u32 %v358, 7
    %v360 = vsub.s32 1, %v359
    %v361 = vrot.slane %v352, %v360
    %v362 = vlaneseq
    %v363 = vshrl.u32 %v362, 7
    %v364 = vsub.s32 2, %v363
    %v365 = vrot.slane %v352, %v364
    %v401 = vunpack.c.l.b16 %v320
    %v402 = vunpack.c.h.b16 %v320
    %v403 = vunpack.c.l.b16 %v321
    %v404 = vunpack.c.l.b16 %v322
    %v405 = vunpack.c.h.b16 %v322
    %v406 = vunpack.c.l.b16 %v323
    %v407 = vunpack.c.l.b16 %v324
    %v408 = vunpack.c.h.b16 %v324
    %v409 = vunpack.c.l.b16 %v325
    %v410 = vunpack.c.l.b16 %v326
    %v411 = vunpack.c.h.b16 %v326
    %v412 = vunpack.c.l.b16 %v327
    %v413 = vunpack.c.l.b16 %v328
    %v414 = vunpack.c.h.b16 %v328
    %v415 = vunpack.c.l.b16 %v329
    %v416 = vunpack.c.l.b16 %v330
    %v417 = vunpack.c.h.b16 %v330
    %v418 = vunpack.c.l.b16 %v331
    %v419 = vunpack.c.l.b16 %v332
    %v420 = vunpack.c.h.b16 %v332
    %v421 = vunpack.c.l.b16 %v333
    %v422 = vunpack.c.l.b16 %v334
    %v423 = vunpack.c.h.b16 %v334
    %v424 = vunpack.c.l.b16 %v335
    %v425 = vunpack.c.l.b16 %v336
    %v426 = vunpack.c.h.b16 %v336
    %v427 = vunpack.c.l.b16 %v337
    %v428 = vunpack.c.l.b16 %v338
    %v429 = vunpack.c.h.b16 %v338
    %v430 = vunpack.c.l.b16 %v339
    %v431 = vunpack.c.l.b16 %v340
    %v432 = vunpack.c.h.b16 %v340
    %v433 = vunpack.c.l.b16 %v341
    %v434 = vunpack.c.l.b16 %v342
    %v435 = vunpack.c.h.b16 %v342
    %v436 = vunpack.c.l.b16 %v343
    %v437 = vunpack.c.l.b16 %v344
    %v438 = vunpack.c.h.b16 %v344
    %v439 = vunpack.c.l.b16 %v345
    %v440 = vunpack.c.l.b16 %v346
    %v441 = vunpack.c.h.b16 %v346
    %v442 = vunpack.c.l.b16 %v347
    %v443 = vunpack.c.l.b16 %v348
    %v444 = vunpack.c.h.b16 %v348
    %v445 = vunpack.c.l.b16 %v349
    %v446 = vunpack.c.l.b16 %v350
    %v447 = vunpack.c.h.b16 %v350
    %v448 = vunpack.c.l.b16 %v351
    %v449 = vpack.c.b16 %v404, %v401
    %v450 = vpack.c.b16 %v405, %v402
    %v451 = vpack.c.b16 %v406, %v403
    %v452 = vpack.c.b16 %v410, %v407
    %v453 = vpack.c.b16 %v411, %v408
    %v454 = vpack.c.b16 %v412, %v409
    %v455 = vpack.c.b16 %v416, %v413
    %v456 = vpack.c.b16 %v417, %v414
    %v457 = vpack.c.b16 %v418, %v415
    %v458 = vpack.c.b16 %v422, %v419
    %v459 = vpack.c.b16 %v423, %v420
    %v460 = vpack.c.b16 %v424, %v421
    %v461 = vpack.c.b16 %v428, %v425
    %v462 = vpack.c.b16 %v429, %v426
    %v463 = vpack.c.b16 %v430, %v427
    %v464 = vpack.c.b16 %v434, %v431
    %v465 = vpack.c.b16 %v435, %v432
    %v466 = vpack.c.b16 %v436, %v433
    %v467 = vpack.c.b16 %v440, %v437
    %v468 = vpack.c.b16 %v441, %v438
    %v469 = vpack.c.b16 %v442, %v439
    %v470 = vpack.c.b16 %v446, %v443
    %v471 = vpack.c.b16 %v447, %v444
    %v472 = vpack.c.b16 %v448, %v445
    %497 = vmatprep.subr.bf16.mxu0 %v450
    %498 = vmatpush1.bf16.msra.mxu0 %v449
    %499 = vmatprep.subr.bf16.mxu0 %v453
    %500 = vmatpush1.bf16.msra.mxu0 %v452
    %501 = vmatprep.subr.bf16.mxu0 %v456
    %502 = vmatpush1.bf16.msra.mxu0 %v455
    %503 = vmatprep.subr.bf16.mxu0 %v459
    %504 = vmatpush1.bf16.msra.mxu0 %v458
    %505 = vmatprep.subr.bf16.mxu0 %v462
    %506 = vmatpush1.bf16.msra.mxu0 %v461
    %507 = vmatprep.subr.bf16.mxu0 %v465
    %508 = vmatpush1.bf16.msra.mxu0 %v464
    %509 = vmatprep.subr.bf16.mxu0 %v468
    %510 = vmatpush1.bf16.msra.mxu0 %v467
    %511 = vmatprep.subr.bf16.mxu0 %v471
    %512 = vmatpush1.bf16.msra.mxu0 %v470
    %513 = vmatprep.subr.bf16.mxu0 0
    %514 = vmatpush1.bf16.msra.mxu0 0
    %515 = vmatprep.subr.bf16.mxu0 0
    %516 = vmatpush1.bf16.msra.mxu0 0
    %517 = vmatprep.subr.bf16.mxu0 0
    %518 = vmatpush1.bf16.msra.mxu0 0
    %519 = vmatprep.subr.bf16.mxu0 0
    %520 = vmatpush1.bf16.msra.mxu0 0
    %521 = vmatprep.subr.bf16.mxu0 0
    %522 = vmatpush1.bf16.msra.mxu0 0
    %523 = vmatprep.subr.bf16.mxu0 0
    %524 = vmatpush1.bf16.msra.mxu0 0
    %525 = vmatprep.subr.bf16.mxu0 0
    %526 = vmatpush1.bf16.msra.mxu0 0
    %527 = vmatprep.subr.bf16.mxu0 0
    %528 = vmatpush1.bf16.msra.mxu0 0
    %529 = vmatprep.mubr.bf16.mxu0 0
    %530 = vmatmul.mubr.bf16.gmra.mrb[0].mxu0 %v316
    %v531 = vpop.f32.mrb[0].mxu0
    %v532 = vadd.f32 %v357, %v531
    %v533 = vpop.f32.mrb[0].mxu0
    %v534 = vadd.f32 %v361, %v533
    %v535 = vpop.f32.mrb[0].mxu0
    %v536 = vadd.f32 %v357, %v535
    %v537 = vpop.f32.mrb[0].mxu0
    %v538 = vadd.f32 %v361, %v537
    %539 = vmatprep.mubr.bf16.mxu0 0
    %540 = vmatmul.mubr.bf16.gmra.mrb[0].mxu0 %v317
    %v541 = vpop.f32.mrb[0].mxu0
    %v542 = vadd.f32 %v357, %v541
    %v543 = vpop.f32.mrb[0].mxu0
    %v544 = vadd.f32 %v361, %v543
    %v545 = vpop.f32.mrb[0].mxu0
    %v546 = vadd.f32 %v357, %v545
    %v547 = vpop.f32.mrb[0].mxu0
    %v548 = vadd.f32 %v361, %v547
    %549 = vmatprep.mubr.bf16.mxu0 0
    %550 = vmatmul.mubr.bf16.gmra.mrb[0].mxu0 %v318
    %v551 = vpop.f32.mrb[0].mxu0
    %v552 = vadd.f32 %v357, %v551
    %v553 = vpop.f32.mrb[0].mxu0
    %v554 = vadd.f32 %v361, %v553
    %v555 = vpop.f32.mrb[0].mxu0
    %v556 = vadd.f32 %v357, %v555
    %v557 = vpop.f32.mrb[0].mxu0
    %v558 = vadd.f32 %v361, %v557
    %559 = vmatprep.mubr.bf16.mxu0 0
    %560 = vmatmul.mubr.bf16.gmra.mrb[0].mxu0 %v319
    %v561 = vpop.f32.mrb[0].mxu0
    %v562 = vadd.f32 %v357, %v561
    %v563 = vpop.f32.mrb[0].mxu0
    %v564 = vadd.f32 %v361, %v563
    %v565 = vpop.f32.mrb[0].mxu0
    %v566 = vadd.f32 %v357, %v565
    %v567 = vpop.f32.mrb[0].mxu0
    %v568 = vadd.f32 %v361, %v567
    %569 = vdwg.mxu0
    %570 = vmatprep.subr.bf16.mxu0 0
    %571 = vmatpush1.bf16.msra.mxu0 %v451
    %572 = vmatprep.subr.bf16.mxu0 0
    %573 = vmatpush1.bf16.msra.mxu0 %v454
    %574 = vmatprep.subr.bf16.mxu0 0
    %575 = vmatpush1.bf16.msra.mxu0 %v457
    %576 = vmatprep.subr.bf16.mxu0 0
    %577 = vmatpush1.bf16.msra.mxu0 %v460
    %578 = vmatprep.subr.bf16.mxu0 0
    %579 = vmatpush1.bf16.msra.mxu0 %v463
    %580 = vmatprep.subr.bf16.mxu0 0
    %581 = vmatpush1.bf16.msra.mxu0 %v466
    %582 = vmatprep.subr.bf16.mxu0 0
    %583 = vmatpush1.bf16.msra.mxu0 %v469
    %584 = vmatprep.subr.bf16.mxu0 0
    %585 = vmatpush1.bf16.msra.mxu0 %v472
    %586 = vmatprep.subr.bf16.mxu0 0
    %587 = vmatpush1.bf16.msra.mxu0 0
    %588 = vmatprep.subr.bf16.mxu0 0
    %589 = vmatpush1.bf16.msra.mxu0 0
    %590 = vmatprep.subr.bf16.mxu0 0
    %591 = vmatpush1.bf16.msra.mxu0 0
    %592 = vmatprep.subr.bf16.mxu0 0
    %593 = vmatpush1.bf16.msra.mxu0 0
    %594 = vmatprep.subr.bf16.mxu0 0
    %595 = vmatpush1.bf16.msra.mxu0 0
    %596 = vmatprep.subr.bf16.mxu0 0
    %597 = vmatpush1.bf16.msra.mxu0 0
    %598 = vmatprep.subr.bf16.mxu0 0
    %599 = vmatpush1.bf16.msra.mxu0 0
    %600 = vmatprep.subr.bf16.mxu0 0
    %601 = vmatpush1.bf16.msra.mxu0 0
    %602 = vmatprep.mubr.bf16.mxu0 0
    %603 = vmatmul.mubr.bf16.gmra.mrb[0].mxu0 %v316
    %v604 = vpop.f32.mrb[0].mxu0
    %v605 = vadd.f32 %v365, %v604
    %v606 = vpop.f32.mrb[0].mxu0
    %v607 = vpop.f32.mrb[0].mxu0
    %v608 = vadd.f32 %v365, %v607
    %v609 = vpop.f32.mrb[0].mxu0
    %610 = vmatprep.mubr.bf16.mxu0 0
    %611 = vmatmul.mubr.bf16.gmra.mrb[0].mxu0 %v317
    %v612 = vpop.f32.mrb[0].mxu0
    %v613 = vadd.f32 %v365, %v612
    %v614 = vpop.f32.mrb[0].mxu0
    %v615 = vpop.f32.mrb[0].mxu0
    %v616 = vadd.f32 %v365, %v615
    %v617 = vpop.f32.mrb[0].mxu0
    %618 = vmatprep.mubr.bf16.mxu0 0
    %619 = vmatmul.mubr.bf16.gmra.mrb[0].mxu0 %v318
    %v620 = vpop.f32.mrb[0].mxu0
    %v621 = vadd.f32 %v365, %v620
    %v622 = vpop.f32.mrb[0].mxu0
    %v623 = vpop.f32.mrb[0].mxu0
    %v624 = vadd.f32 %v365, %v623
    %v625 = vpop.f32.mrb[0].mxu0
    %626 = vmatprep.mubr.bf16.mxu0 0
    %627 = vmatmul.mubr.bf16.gmra.mrb[0].mxu0 %v319
    %v628 = vpop.f32.mrb[0].mxu0
    %v629 = vadd.f32 %v365, %v628
    %v630 = vpop.f32.mrb[0].mxu0
    %v631 = vpop.f32.mrb[0].mxu0
    %v632 = vadd.f32 %v365, %v631
    %v633 = vpop.f32.mrb[0].mxu0
    %634 = vdwg.mxu0
    %635 = vst [vmem:[#allocation3] sm:$0xff] %v532
    %636 = vst [vmem:[#allocation3 + $0x8] sm:$0xff] %v534
    %637 = vst [vmem:[#allocation3 + $0x10] sm:$0xff] %v605
    %638 = vst [vmem:[#allocation3 + $0x18] sm:$0xff] %v536
    %639 = vst [vmem:[#allocation3 + $0x20] sm:$0xff] %v538
    %640 = vst [vmem:[#allocation3 + $0x28] sm:$0xff] %v608
    %641 = vst [vmem:[#allocation3 + $0x30] sm:$0xff] %v542
    %642 = vst [vmem:[#allocation3 + $0x38] sm:$0xff] %v544
    %643 = vst [vmem:[#allocation3 + $0x40] sm:$0xff] %v613
    %644 = vst [vmem:[#allocation3 + $0x48] sm:$0xff] %v546
    %645 = vst [vmem:[#allocation3 + $0x50] sm:$0xff] %v548
    %646 = vst [vmem:[#allocation3 + $0x58] sm:$0xff] %v616
    %647 = vst [vmem:[#allocation3 + $0x60] sm:$0xff] %v552
    %648 = vst [vmem:[#allocation3 + $0x68] sm:$0xff] %v554
    %649 = vst [vmem:[#allocation3 + $0x70] sm:$0xff] %v621
    %650 = vst [vmem:[#allocation3 + $0x78] sm:$0xff] %v556
    %651 = vst [vmem:[#allocation3 + $0x80] sm:$0xff] %v558
    %652 = vst [vmem:[#allocation3 + $0x88] sm:$0xff] %v624
    %653 = vst [vmem:[#allocation3 + $0x90] sm:$0xff] %v562
    %654 = vst [vmem:[#allocation3 + $0x98] sm:$0xff] %v564
    %655 = vst [vmem:[#allocation3 + $0xa0] sm:$0xff] %v629
    %656 = vst [vmem:[#allocation3 + $0xa8] sm:$0xff] %v566
    %657 = vst [vmem:[#allocation3 + $0xb0] sm:$0xff] %v568
    %658 = vst [vmem:[#allocation3 + $0xb8] sm:$0xff] %v632
    %v659 = vld [vmem:[%s7] sm:$0xff]
    %v660 = vld [vmem:[#allocation3] sm:$0xff]
    %v661 = vld [vmem:[#allocation3 + $0x8] sm:$0xff]
    %v662 = vld [vmem:[#allocation3 + $0x10] sm:$0xff]
    %v663 = vpack.c.bf16 %v659, %v659
    %v696 = vunpack.c.l.b16 %v269
    %v697 = vunpack.c.h.b16 %v269
    %v698 = vunpack.c.l.b16 %v270
    %v699 = vunpack.c.l.b16 %v271
    %v700 = vunpack.c.h.b16 %v271
    %v701 = vunpack.c.l.b16 %v272
    %v702 = vunpack.c.l.b16 %v273
    %v703 = vunpack.c.h.b16 %v273
    %v704 = vunpack.c.l.b16 %v274
    %v705 = vunpack.c.l.b16 %v275
    %v706 = vunpack.c.h.b16 %v275
    %v707 = vunpack.c.l.b16 %v276
    %v708 = vunpack.c.l.b16 %v277
    %v709 = vunpack.c.h.b16 %v277
    %v710 = vunpack.c.l.b16 %v278
    %v711 = vunpack.c.l.b16 %v279
    %v712 = vunpack.c.h.b16 %v279
    %v713 = vunpack.c.l.b16 %v280
    %v714 = vunpack.c.l.b16 %v281
    %v715 = vunpack.c.h.b16 %v281
    %v716 = vunpack.c.l.b16 %v282
    %v717 = vunpack.c.l.b16 %v283
    %v718 = vunpack.c.h.b16 %v283
    %v719 = vunpack.c.l.b16 %v284
    %v720 = vunpack.c.l.b16 %v285
    %v721 = vunpack.c.h.b16 %v285
    %v722 = vunpack.c.l.b16 %v286
    %v723 = vunpack.c.l.b16 %v287
    %v724 = vunpack.c.h.b16 %v287
    %v725 = vunpack.c.l.b16 %v288
    %v726 = vunpack.c.l.b16 %v289
    %v727 = vunpack.c.h.b16 %v289
    %v728 = vunpack.c.l.b16 %v290
    %v729 = vunpack.c.l.b16 %v291
    %v730 = vunpack.c.h.b16 %v291
    %v731 = vunpack.c.l.b16 %v292
    %v732 = vunpack.c.l.b16 %v293
    %v733 = vunpack.c.h.b16 %v293
    %v734 = vunpack.c.l.b16 %v294
    %v735 = vunpack.c.l.b16 %v295
    %v736 = vunpack.c.h.b16 %v295
    %v737 = vunpack.c.l.b16 %v296
    %v738 = vunpack.c.l.b16 %v297
    %v739 = vunpack.c.h.b16 %v297
    %v740 = vunpack.c.l.b16 %v298
    %v741 = vunpack.c.l.b16 %v299
    %v742 = vunpack.c.h.b16 %v299
    %v743 = vunpack.c.l.b16 %v300
    %v744 = vpack.c.b16 %v699, %v696
    %v745 = vpack.c.b16 %v700, %v697
    %v746 = vpack.c.b16 %v701, %v698
    %v747 = vpack.c.b16 %v705, %v702
    %v748 = vpack.c.b16 %v706, %v703
    %v749 = vpack.c.b16 %v707, %v704
    %v750 = vpack.c.b16 %v711, %v708
    %v751 = vpack.c.b16 %v712, %v709
    %v752 = vpack.c.b16 %v713, %v710
    %v753 = vpack.c.b16 %v717, %v714
    %v754 = vpack.c.b16 %v718, %v715
    %v755 = vpack.c.b16 %v719, %v716
    %v756 = vpack.c.b16 %v723, %v720
    %v757 = vpack.c.b16 %v724, %v721
    %v758 = vpack.c.b16 %v725, %v722
    %v759 = vpack.c.b16 %v729, %v726
    %v760 = vpack.c.b16 %v730, %v727
    %v761 = vpack.c.b16 %v731, %v728
    %v762 = vpack.c.b16 %v735, %v732
    %v763 = vpack.c.b16 %v736, %v733
    %v764 = vpack.c.b16 %v737, %v734
    %v765 = vpack.c.b16 %v741, %v738
    %v766 = vpack.c.b16 %v742, %v739
    %v767 = vpack.c.b16 %v743, %v740
    %792 = vmatprep.subr.bf16.mxu0 %v745
    %793 = vmatpush1.bf16.msra.mxu0 %v744
    %794 = vmatprep.subr.bf16.mxu0 %v748
    %795 = vmatpush1.bf16.msra.mxu0 %v747
    %796 = vmatprep.subr.bf16.mxu0 %v751
    %797 = vmatpush1.bf16.msra.mxu0 %v750
    %798 = vmatprep.subr.bf16.mxu0 %v754
    %799 = vmatpush1.bf16.msra.mxu0 %v753
    %800 = vmatprep.subr.bf16.mxu0 %v757
    %801 = vmatpush1.bf16.msra.mxu0 %v756
    %802 = vmatprep.subr.bf16.mxu0 %v760
    %803 = vmatpush1.bf16.msra.mxu0 %v759
    %804 = vmatprep.subr.bf16.mxu0 %v763
    %805 = vmatpush1.bf16.msra.mxu0 %v762
    %806 = vmatprep.subr.bf16.mxu0 %v766
    %807 = vmatpush1.bf16.msra.mxu0 %v765
    %808 = vmatprep.subr.bf16.mxu0 0
    %809 = vmatpush1.bf16.msra.mxu0 0
    %810 = vmatprep.subr.bf16.mxu0 0
    %811 = vmatpush1.bf16.msra.mxu0 0
    %812 = vmatprep.subr.bf16.mxu0 0
    %813 = vmatpush1.bf16.msra.mxu0 0
    %814 = vmatprep.subr.bf16.mxu0 0
    %815 = vmatpush1.bf16.msra.mxu0 0
    %816 = vmatprep.subr.bf16.mxu0 0
    %817 = vmatpush1.bf16.msra.mxu0 0
    %818 = vmatprep.subr.bf16.mxu0 0
    %819 = vmatpush1.bf16.msra.mxu0 0
    %820 = vmatprep.subr.bf16.mxu0 0
    %821 = vmatpush1.bf16.msra.mxu0 0
    %822 = vmatprep.subr.bf16.mxu0 0
    %823 = vmatpush1.bf16.msra.mxu0 0
    %824 = vmatprep.mubr.bf16.mxu0 0
    %825 = vmatmul.mubr.bf16.gmra.mrb[0].mxu0 %v663
    %v826 = vpop.f32.mrb[0].mxu0
    %v827 = vadd.f32 0.0, %v826
    %v828 = vpop.f32.mrb[0].mxu0
    %v829 = vadd.f32 0.0, %v828
    %v830 = vpop.f32.mrb[0].mxu0
    %v831 = vpop.f32.mrb[0].mxu0
    %832 = vdwg.mxu0
    %833 = vmatprep.subr.bf16.mxu0 0
    %834 = vmatpush1.bf16.msra.mxu0 %v746
    %835 = vmatprep.subr.bf16.mxu0 0
    %836 = vmatpush1.bf16.msra.mxu0 %v749
    %837 = vmatprep.subr.bf16.mxu0 0
    %838 = vmatpush1.bf16.msra.mxu0 %v752
    %839 = vmatprep.subr.bf16.mxu0 0
    %840 = vmatpush1.bf16.msra.mxu0 %v755
    %841 = vmatprep.subr.bf16.mxu0 0
    %842 = vmatpush1.bf16.msra.mxu0 %v758
    %843 = vmatprep.subr.bf16.mxu0 0
    %844 = vmatpush1.bf16.msra.mxu0 %v761
    %845 = vmatprep.subr.bf16.mxu0 0
    %846 = vmatpush1.bf16.msra.mxu0 %v764
    %847 = vmatprep.subr.bf16.mxu0 0
    %848 = vmatpush1.bf16.msra.mxu0 %v767
    %849 = vmatprep.subr.bf16.mxu0 0
    %850 = vmatpush1.bf16.msra.mxu0 0
    %851 = vmatprep.subr.bf16.mxu0 0
    %852 = vmatpush1.bf16.msra.mxu0 0
    %853 = vmatprep.subr.bf16.mxu0 0
    %854 = vmatpush1.bf16.msra.mxu0 0
    %855 = vmatprep.subr.bf16.mxu0 0
    %856 = vmatpush1.bf16.msra.mxu0 0
    %857 = vmatprep.subr.bf16.mxu0 0
    %858 = vmatpush1.bf16.msra.mxu0 0
    %859 = vmatprep.subr.bf16.mxu0 0
    %860 = vmatpush1.bf16.msra.mxu0 0
    %861 = vmatprep.subr.bf16.mxu0 0
    %862 = vmatpush1.bf16.msra.mxu0 0
    %863 = vmatprep.subr.bf16.mxu0 0
    %864 = vmatpush1.bf16.msra.mxu0 0
    %865 = vmatprep.mubr.bf16.mxu0 0
    %866 = vmatmul.mubr.bf16.gmra.mrb[0].mxu0 %v663
    %v867 = vpop.f32.mrb[0].mxu0
    %v868 = vadd.f32 0.0, %v867
    %v869 = vpop.f32.mrb[0].mxu0
    %v870 = vpop.f32.mrb[0].mxu0
    %v871 = vpop.f32.mrb[0].mxu0
    %872 = vdwg.mxu0
    %v873 = vadd.f32 %v660, %v827
    %v874 = vxor.u32 %v873, 2147483648
    %v875 = vmul.f32 %v874, 1.442695
    %v876 = vpow.pop %v875
    %v877 = vadd.f32 %v876, 1.0
    %v878 = vrcp.pop %v877
    %v879 = vmul.f32 1.0, %v878
    %v880 = vadd.f32 %v661, %v829
    %v881 = vxor.u32 %v880, 2147483648
    %v882 = vmul.f32 %v881, 1.442695
    %v883 = vpow.pop %v882
    %v884 = vadd.f32 %v883, 1.0
    %v885 = vrcp.pop %v884
    %v886 = vmul.f32 1.0, %v885
    %v887 = vadd.f32 %v868, %v306
    %v888 = vmul.f32 %v879, %v887
    %v889 = vadd.f32 %v662, %v888
    %v890 = vtanh.pop %v889
    %v891 = vsub.f32 1.0, %v886
    %v892 = vmul.f32 %v891, %v890
    %v893 = vmul.f32 %v886, %v659
    %v894 = vadd.f32 %v892, %v893
    %v895 = vsel %vm261, 1, 0
    %896 = vset.pattern.permute.xlu0 0
    %897 = vperm.xlu0 %896, %v895
    %v898 = vpop.permute.xlu0 %897
    %vm899 = vcmp.eq.s32.totalorder %v898, 1
    %v900 = vsel %vm899, %v894, %v659
    %901 = vst [vmem:[#allocation2] sm:$0xff] %v900
    %v902 = vld [vmem:[#allocation3 + $0x18] sm:$0xff]
    %v903 = vld [vmem:[#allocation3 + $0x20] sm:$0xff]
    %v904 = vld [vmem:[#allocation3 + $0x28] sm:$0xff]
    %v905 = vpack.c.bf16 %v900, %v900
    %906 = vmatprep.subr.bf16.mxu0 %v745
    %907 = vmatpush1.bf16.msra.mxu0 %v744
    %908 = vmatprep.subr.bf16.mxu0 %v748
    %909 = vmatpush1.bf16.msra.mxu0 %v747
    %910 = vmatprep.subr.bf16.mxu0 %v751
    %911 = vmatpush1.bf16.msra.mxu0 %v750
    %912 = vmatprep.subr.bf16.mxu0 %v754
    %913 = vmatpush1.bf16.msra.mxu0 %v753
    %914 = vmatprep.subr.bf16.mxu0 %v757
    %915 = vmatpush1.bf16.msra.mxu0 %v756
    %916 = vmatprep.subr.bf16.mxu0 %v760
    %917 = vmatpush1.bf16.msra.mxu0 %v759
    %918 = vmatprep.subr.bf16.mxu0 %v763
    %919 = vmatpush1.bf16.msra.mxu0 %v762
    %920 = vmatprep.subr.bf16.mxu0 %v766
    %921 = vmatpush1.bf16.msra.mxu0 %v765
    %922 = vmatprep.subr.bf16.mxu0 0
    %923 = vmatpush1.bf16.msra.mxu0 0
    %924 = vmatprep.subr.bf16.mxu0 0
    %925 = vmatpush1.bf16.msra.mxu0 0
    %926 = vmatprep.subr.bf16.mxu0 0
    %927 = vmatpush1.bf16.msra.mxu0 0
    %928 = vmatprep.subr.bf16.mxu0 0
    %929 = vmatpush1.bf16.msra.mxu0 0
    %930 = vmatprep.subr.bf16.mxu0 0
    %931 = vmatpush1.bf16.msra.mxu0 0
    %932 = vmatprep.subr.bf16.mxu0 0
    %933 = vmatpush1.bf16.msra.mxu0 0
    %934 = vmatprep.subr.bf16.mxu0 0
    %935 = vmatpush1.bf16.msra.mxu0 0
    %936 = vmatprep.subr.bf16.mxu0 0
    %937 = vmatpush1.bf16.msra.mxu0 0
    %938 = vmatprep.mubr.bf16.mxu0 0
    %939 = vmatmul.mubr.bf16.gmra.mrb[0].mxu0 %v905
    %v940 = vpop.f32.mrb[0].mxu0
    %v941 = vadd.f32 0.0, %v940
    %v942 = vpop.f32.mrb[0].mxu0
    %v943 = vadd.f32 0.0, %v942
    %v944 = vpop.f32.mrb[0].mxu0
    %v945 = vpop.f32.mrb[0].mxu0
    %946 = vdwg.mxu0
    %947 = vmatprep.subr.bf16.mxu0 0
    %948 = vmatpush1.bf16.msra.mxu0 %v746
    %949 = vmatprep.subr.bf16.mxu0 0
    %950 = vmatpush1.bf16.msra.mxu0 %v749
    %951 = vmatprep.subr.bf16.mxu0 0
    %952 = vmatpush1.bf16.msra.mxu0 %v752
    %953 = vmatprep.subr.bf16.mxu0 0
    %954 = vmatpush1.bf16.msra.mxu0 %v755
    %955 = vmatprep.subr.bf16.mxu0 0
    %956 = vmatpush1.bf16.msra.mxu0 %v758
    %957 = vmatprep.subr.bf16.mxu0 0
    %958 = vmatpush1.bf16.msra.mxu0 %v761
    %959 = vmatprep.subr.bf16.mxu0 0
    %960 = vmatpush1.bf16.msra.mxu0 %v764
    %961 = vmatprep.subr.bf16.mxu0 0
    %962 = vmatpush1.bf16.msra.mxu0 %v767
    %963 = vmatprep.subr.bf16.mxu0 0
    %964 = vmatpush1.bf16.msra.mxu0 0
    %965 = vmatprep.subr.bf16.mxu0 0
    %966 = vmatpush1.bf16.msra.mxu0 0
    %967 = vmatprep.subr.bf16.mxu0 0
    %968 = vmatpush1.bf16.msra.mxu0 0
    %969 = vmatprep.subr.bf16.mxu0 0
    %970 = vmatpush1.bf16.msra.mxu0 0
    %971 = vmatprep.subr.bf16.mxu0 0
    %972 = vmatpush1.bf16.msra.mxu0 0
    %973 = vmatprep.subr.bf16.mxu0 0
    %974 = vmatpush1.bf16.msra.mxu0 0
    %975 = vmatprep.subr.bf16.mxu0 0
    %976 = vmatpush1.bf16.msra.mxu0 0
    %977 = vmatprep.subr.bf16.mxu0 0
    %978 = vmatpush1.bf16.msra.mxu0 0
    %979 = vmatprep.mubr.bf16.mxu0 0
    %980 = vmatmul.mubr.bf16.gmra.mrb[0].mxu0 %v905
    %v981 = vpop.f32.mrb[0].mxu0
    %v982 = vadd.f32 0.0, %v981
    %v983 = vpop.f32.mrb[0].mxu0
    %v984 = vpop.f32.mrb[0].mxu0
    %v985 = vpop.f32.mrb[0].mxu0
    %986 = vdwg.mxu0
    %v987 = vadd.f32 %v902, %v941
    %v988 = vxor.u32 %v987, 2147483648
    %v989 = vmul.f32 %v988, 1.442695
    %v990 = vpow.pop %v989
    %v991 = vadd.f32 %v990, 1.0
    %v992 = vrcp.pop %v991
    %v993 = vmul.f32 1.0, %v992
    %v994 = vadd.f32 %v903, %v943
    %v995 = vxor.u32 %v994, 2147483648
    %v996 = vmul.f32 %v995, 1.442695
    %v997 = vpow.pop %v996
    %v998 = vadd.f32 %v997, 1.0
    %v999 = vrcp.pop %v998
    %v1000 = vmul.f32 1.0, %v999
    %v1001 = vadd.f32 %v982, %v306
    %v1002 = vmul.f32 %v993, %v1001
    %v1003 = vadd.f32 %v904, %v1002
    %v1004 = vtanh.pop %v1003
    %v1005 = vsub.f32 1.0, %v1000
    %v1006 = vmul.f32 %v1005, %v1004
    %v1007 = vmul.f32 %v1000, %v900
    %v1008 = vadd.f32 %v1006, %v1007
    %v1009 = vsel %vm262, 1, 0
    %1010 = vset.pattern.permute.xlu0 0
    %1011 = vperm.xlu0 %1010, %v1009
    %v1012 = vpop.permute.xlu0 %1011
    %vm1013 = vcmp.eq.s32.totalorder %v1012, 1
    %v1014 = vsel %vm1013, %v1008, %v900
    %1015 = vst [vmem:[#allocation2 + $0x8] sm:$0xff] %v1014
    %v1016 = vld [vmem:[#allocation3 + $0x30] sm:$0xff]
    %v1017 = vld [vmem:[#allocation3 + $0x38] sm:$0xff]
    %v1018 = vld [vmem:[#allocation3 + $0x40] sm:$0xff]
    %v1019 = vpack.c.bf16 %v1014, %v1014
    %1020 = vmatprep.subr.bf16.mxu0 %v745
    %1021 = vmatpush1.bf16.msra.mxu0 %v744
    %1022 = vmatprep.subr.bf16.mxu0 %v748
    %1023 = vmatpush1.bf16.msra.mxu0 %v747
    %1024 = vmatprep.subr.bf16.mxu0 %v751
    %1025 = vmatpush1.bf16.msra.mxu0 %v750
    %1026 = vmatprep.subr.bf16.mxu0 %v754
    %1027 = vmatpush1.bf16.msra.mxu0 %v753
    %1028 = vmatprep.subr.bf16.mxu0 %v757
    %1029 = vmatpush1.bf16.msra.mxu0 %v756
    %1030 = vmatprep.subr.bf16.mxu0 %v760
    %1031 = vmatpush1.bf16.msra.mxu0 %v759
    %1032 = vmatprep.subr.bf16.mxu0 %v763
    %1033 = vmatpush1.bf16.msra.mxu0 %v762
    %1034 = vmatprep.subr.bf16.mxu0 %v766
    %1035 = vmatpush1.bf16.msra.mxu0 %v765
    %1036 = vmatprep.subr.bf16.mxu0 0
    %1037 = vmatpush1.bf16.msra.mxu0 0
    %1038 = vmatprep.subr.bf16.mxu0 0
    %1039 = vmatpush1.bf16.msra.mxu0 0
    %1040 = vmatprep.subr.bf16.mxu0 0
    %1041 = vmatpush1.bf16.msra.mxu0 0
    %1042 = vmatprep.subr.bf16.mxu0 0
    %1043 = vmatpush1.bf16.msra.mxu0 0
    %1044 = vmatprep.subr.bf16.mxu0 0
    %1045 = vmatpush1.bf16.msra.mxu0 0
    %1046 = vmatprep.subr.bf16.mxu0 0
    %1047 = vmatpush1.bf16.msra.mxu0 0
    %1048 = vmatprep.subr.bf16.mxu0 0
    %1049 = vmatpush1.bf16.msra.mxu0 0
    %1050 = vmatprep.subr.bf16.mxu0 0
    %1051 = vmatpush1.bf16.msra.mxu0 0
    %1052 = vmatprep.mubr.bf16.mxu0 0
    %1053 = vmatmul.mubr.bf16.gmra.mrb[0].mxu0 %v1019
    %v1054 = vpop.f32.mrb[0].mxu0
    %v1055 = vadd.f32 0.0, %v1054
    %v1056 = vpop.f32.mrb[0].mxu0
    %v1057 = vadd.f32 0.0, %v1056
    %v1058 = vpop.f32.mrb[0].mxu0
    %v1059 = vpop.f32.mrb[0].mxu0
    %1060 = vdwg.mxu0
    %1061 = vmatprep.subr.bf16.mxu0 0
    %1062 = vmatpush1.bf16.msra.mxu0 %v746
    %1063 = vmatprep.subr.bf16.mxu0 0
    %1064 = vmatpush1.bf16.msra.mxu0 %v749
    %1065 = vmatprep.subr.bf16.mxu0 0
    %1066 = vmatpush1.bf16.msra.mxu0 %v752
    %1067 = vmatprep.subr.bf16.mxu0 0
    %1068 = vmatpush1.bf16.msra.mxu0 %v755
    %1069 = vmatprep.subr.bf16.mxu0 0
    %1070 = vmatpush1.bf16.msra.mxu0 %v758
    %1071 = vmatprep.subr.bf16.mxu0 0
    %1072 = vmatpush1.bf16.msra.mxu0 %v761
    %1073 = vmatprep.subr.bf16.mxu0 0
    %1074 = vmatpush1.bf16.msra.mxu0 %v764
    %1075 = vmatprep.subr.bf16.mxu0 0
    %1076 = vmatpush1.bf16.msra.mxu0 %v767
    %1077 = vmatprep.subr.bf16.mxu0 0
    %1078 = vmatpush1.bf16.msra.mxu0 0
    %1079 = vmatprep.subr.bf16.mxu0 0
    %1080 = vmatpush1.bf16.msra.mxu0 0
    %1081 = vmatprep.subr.bf16.mxu0 0
    %1082 = vmatpush1.bf16.msra.mxu0 0
    %1083 = vmatprep.subr.bf16.mxu0 0
    %1084 = vmatpush1.bf16.msra.mxu0 0
    %1085 = vmatprep.subr.bf16.mxu0 0
    %1086 = vmatpush1.bf16.msra.mxu0 0
    %1087 = vmatprep.subr.bf16.mxu0 0
    %1088 = vmatpush1.bf16.msra.mxu0 0
    %1089 = vmatprep.subr.bf16.mxu0 0
    %1090 = vmatpush1.bf16.msra.mxu0 0
    %1091 = vmatprep.subr.bf16.mxu0 0
    %1092 = vmatpush1.bf16.msra.mxu0 0
    %1093 = vmatprep.mubr.bf16.mxu0 0
    %1094 = vmatmul.mubr.bf16.gmra.mrb[0].mxu0 %v1019
    %v1095 = vpop.f32.mrb[0].mxu0
    %v1096 = vadd.f32 0.0, %v1095
    %v1097 = vpop.f32.mrb[0].mxu0
    %v1098 = vpop.f32.mrb[0].mxu0
    %v1099 = vpop.f32.mrb[0].mxu0
    %1100 = vdwg.mxu0
    %v1101 = vadd.f32 %v1016, %v1055
    %v1102 = vxor.u32 %v1101, 2147483648
    %v1103 = vmul.f32 %v1102, 1.442695
    %v1104 = vpow.pop %v1103
    %v1105 = vadd.f32 %v1104, 1.0
    %v1106 = vrcp.pop %v1105
    %v1107 = vmul.f32 1.0, %v1106
    %v1108 = vadd.f32 %v1017, %v1057
    %v1109 = vxor.u32 %v1108, 2147483648
    %v1110 = vmul.f32 %v1109, 1.442695
    %v1111 = vpow.pop %v1110
    %v1112 = vadd.f32 %v1111, 1.0
    %v1113 = vrcp.pop %v1112
    %v1114 = vmul.f32 1.0, %v1113
    %v1115 = vadd.f32 %v1096, %v306
    %v1116 = vmul.f32 %v1107, %v1115
    %v1117 = vadd.f32 %v1018, %v1116
    %v1118 = vtanh.pop %v1117
    %v1119 = vsub.f32 1.0, %v1114
    %v1120 = vmul.f32 %v1119, %v1118
    %v1121 = vmul.f32 %v1114, %v1014
    %v1122 = vadd.f32 %v1120, %v1121
    %v1123 = vsel %vm263, 1, 0
    %1124 = vset.pattern.permute.xlu0 0
    %1125 = vperm.xlu0 %1124, %v1123
    %v1126 = vpop.permute.xlu0 %1125
    %vm1127 = vcmp.eq.s32.totalorder %v1126, 1
    %v1128 = vsel %vm1127, %v1122, %v1014
    %1129 = vst [vmem:[#allocation2 + $0x10] sm:$0xff] %v1128
    %v1130 = vld [vmem:[#allocation3 + $0x48] sm:$0xff]
    %v1131 = vld [vmem:[#allocation3 + $0x50] sm:$0xff]
    %v1132 = vld [vmem:[#allocation3 + $0x58] sm:$0xff]
    %v1133 = vpack.c.bf16 %v1128, %v1128
    %1134 = vmatprep.subr.bf16.mxu0 %v745
    %1135 = vmatpush1.bf16.msra.mxu0 %v744
    %1136 = vmatprep.subr.bf16.mxu0 %v748
    %1137 = vmatpush1.bf16.msra.mxu0 %v747
    %1138 = vmatprep.subr.bf16.mxu0 %v751
    %1139 = vmatpush1.bf16.msra.mxu0 %v750
    %1140 = vmatprep.subr.bf16.mxu0 %v754
    %1141 = vmatpush1.bf16.msra.mxu0 %v753
    %1142 = vmatprep.subr.bf16.mxu0 %v757
    %1143 = vmatpush1.bf16.msra.mxu0 %v756
    %1144 = vmatprep.subr.bf16.mxu0 %v760
    %1145 = vmatpush1.bf16.msra.mxu0 %v759
    %1146 = vmatprep.subr.bf16.mxu0 %v763
    %1147 = vmatpush1.bf16.msra.mxu0 %v762
    %1148 = vmatprep.subr.bf16.mxu0 %v766
    %1149 = vmatpush1.bf16.msra.mxu0 %v765
    %1150 = vmatprep.subr.bf16.mxu0 0
    %1151 = vmatpush1.bf16.msra.mxu0 0
    %1152 = vmatprep.subr.bf16.mxu0 0
    %1153 = vmatpush1.bf16.msra.mxu0 0
    %1154 = vmatprep.subr.bf16.mxu0 0
    %1155 = vmatpush1.bf16.msra.mxu0 0
    %1156 = vmatprep.subr.bf16.mxu0 0
    %1157 = vmatpush1.bf16.msra.mxu0 0
    %1158 = vmatprep.subr.bf16.mxu0 0
    %1159 = vmatpush1.bf16.msra.mxu0 0
    %1160 = vmatprep.subr.bf16.mxu0 0
    %1161 = vmatpush1.bf16.msra.mxu0 0
    %1162 = vmatprep.subr.bf16.mxu0 0
    %1163 = vmatpush1.bf16.msra.mxu0 0
    %1164 = vmatprep.subr.bf16.mxu0 0
    %1165 = vmatpush1.bf16.msra.mxu0 0
    %1166 = vmatprep.mubr.bf16.mxu0 0
    %1167 = vmatmul.mubr.bf16.gmra.mrb[0].mxu0 %v1133
    %v1168 = vpop.f32.mrb[0].mxu0
    %v1169 = vadd.f32 0.0, %v1168
    %v1170 = vpop.f32.mrb[0].mxu0
    %v1171 = vadd.f32 0.0, %v1170
    %v1172 = vpop.f32.mrb[0].mxu0
    %v1173 = vpop.f32.mrb[0].mxu0
    %1174 = vdwg.mxu0
    %1175 = vmatprep.subr.bf16.mxu0 0
    %1176 = vmatpush1.bf16.msra.mxu0 %v746
    %1177 = vmatprep.subr.bf16.mxu0 0
    %1178 = vmatpush1.bf16.msra.mxu0 %v749
    %1179 = vmatprep.subr.bf16.mxu0 0
    %1180 = vmatpush1.bf16.msra.mxu0 %v752
    %1181 = vmatprep.subr.bf16.mxu0 0
    %1182 = vmatpush1.bf16.msra.mxu0 %v755
    %1183 = vmatprep.subr.bf16.mxu0 0
    %1184 = vmatpush1.bf16.msra.mxu0 %v758
    %1185 = vmatprep.subr.bf16.mxu0 0
    %1186 = vmatpush1.bf16.msra.mxu0 %v761
    %1187 = vmatprep.subr.bf16.mxu0 0
    %1188 = vmatpush1.bf16.msra.mxu0 %v764
    %1189 = vmatprep.subr.bf16.mxu0 0
    %1190 = vmatpush1.bf16.msra.mxu0 %v767
    %1191 = vmatprep.subr.bf16.mxu0 0
    %1192 = vmatpush1.bf16.msra.mxu0 0
    %1193 = vmatprep.subr.bf16.mxu0 0
    %1194 = vmatpush1.bf16.msra.mxu0 0
    %1195 = vmatprep.subr.bf16.mxu0 0
    %1196 = vmatpush1.bf16.msra.mxu0 0
    %1197 = vmatprep.subr.bf16.mxu0 0
    %1198 = vmatpush1.bf16.msra.mxu0 0
    %1199 = vmatprep.subr.bf16.mxu0 0
    %1200 = vmatpush1.bf16.msra.mxu0 0
    %1201 = vmatprep.subr.bf16.mxu0 0
    %1202 = vmatpush1.bf16.msra.mxu0 0
    %1203 = vmatprep.subr.bf16.mxu0 0
    %1204 = vmatpush1.bf16.msra.mxu0 0
    %1205 = vmatprep.subr.bf16.mxu0 0
    %1206 = vmatpush1.bf16.msra.mxu0 0
    %1207 = vmatprep.mubr.bf16.mxu0 0
    %1208 = vmatmul.mubr.bf16.gmra.mrb[0].mxu0 %v1133
    %v1209 = vpop.f32.mrb[0].mxu0
    %v1210 = vadd.f32 0.0, %v1209
    %v1211 = vpop.f32.mrb[0].mxu0
    %v1212 = vpop.f32.mrb[0].mxu0
    %v1213 = vpop.f32.mrb[0].mxu0
    %1214 = vdwg.mxu0
    %v1215 = vadd.f32 %v1130, %v1169
    %v1216 = vxor.u32 %v1215, 2147483648
    %v1217 = vmul.f32 %v1216, 1.442695
    %v1218 = vpow.pop %v1217
    %v1219 = vadd.f32 %v1218, 1.0
    %v1220 = vrcp.pop %v1219
    %v1221 = vmul.f32 1.0, %v1220
    %v1222 = vadd.f32 %v1131, %v1171
    %v1223 = vxor.u32 %v1222, 2147483648
    %v1224 = vmul.f32 %v1223, 1.442695
    %v1225 = vpow.pop %v1224
    %v1226 = vadd.f32 %v1225, 1.0
    %v1227 = vrcp.pop %v1226
    %v1228 = vmul.f32 1.0, %v1227
    %v1229 = vadd.f32 %v1210, %v306
    %v1230 = vmul.f32 %v1221, %v1229
    %v1231 = vadd.f32 %v1132, %v1230
    %v1232 = vtanh.pop %v1231
    %v1233 = vsub.f32 1.0, %v1228
    %v1234 = vmul.f32 %v1233, %v1232
    %v1235 = vmul.f32 %v1228, %v1128
    %v1236 = vadd.f32 %v1234, %v1235
    %v1237 = vsel %vm264, 1, 0
    %1238 = vset.pattern.permute.xlu0 0
    %1239 = vperm.xlu0 %1238, %v1237
    %v1240 = vpop.permute.xlu0 %1239
    %vm1241 = vcmp.eq.s32.totalorder %v1240, 1
    %v1242 = vsel %vm1241, %v1236, %v1128
    %1243 = vst [vmem:[#allocation2 + $0x18] sm:$0xff] %v1242
    %v1244 = vld [vmem:[#allocation3 + $0x60] sm:$0xff]
    %v1245 = vld [vmem:[#allocation3 + $0x68] sm:$0xff]
    %v1246 = vld [vmem:[#allocation3 + $0x70] sm:$0xff]
    %v1247 = vpack.c.bf16 %v1242, %v1242
    %1248 = vmatprep.subr.bf16.mxu0 %v745
    %1249 = vmatpush1.bf16.msra.mxu0 %v744
    %1250 = vmatprep.subr.bf16.mxu0 %v748
    %1251 = vmatpush1.bf16.msra.mxu0 %v747
    %1252 = vmatprep.subr.bf16.mxu0 %v751
    %1253 = vmatpush1.bf16.msra.mxu0 %v750
    %1254 = vmatprep.subr.bf16.mxu0 %v754
    %1255 = vmatpush1.bf16.msra.mxu0 %v753
    %1256 = vmatprep.subr.bf16.mxu0 %v757
    %1257 = vmatpush1.bf16.msra.mxu0 %v756
    %1258 = vmatprep.subr.bf16.mxu0 %v760
    %1259 = vmatpush1.bf16.msra.mxu0 %v759
    %1260 = vmatprep.subr.bf16.mxu0 %v763
    %1261 = vmatpush1.bf16.msra.mxu0 %v762
    %1262 = vmatprep.subr.bf16.mxu0 %v766
    %1263 = vmatpush1.bf16.msra.mxu0 %v765
    %1264 = vmatprep.subr.bf16.mxu0 0
    %1265 = vmatpush1.bf16.msra.mxu0 0
    %1266 = vmatprep.subr.bf16.mxu0 0
    %1267 = vmatpush1.bf16.msra.mxu0 0
    %1268 = vmatprep.subr.bf16.mxu0 0
    %1269 = vmatpush1.bf16.msra.mxu0 0
    %1270 = vmatprep.subr.bf16.mxu0 0
    %1271 = vmatpush1.bf16.msra.mxu0 0
    %1272 = vmatprep.subr.bf16.mxu0 0
    %1273 = vmatpush1.bf16.msra.mxu0 0
    %1274 = vmatprep.subr.bf16.mxu0 0
    %1275 = vmatpush1.bf16.msra.mxu0 0
    %1276 = vmatprep.subr.bf16.mxu0 0
    %1277 = vmatpush1.bf16.msra.mxu0 0
    %1278 = vmatprep.subr.bf16.mxu0 0
    %1279 = vmatpush1.bf16.msra.mxu0 0
    %1280 = vmatprep.mubr.bf16.mxu0 0
    %1281 = vmatmul.mubr.bf16.gmra.mrb[0].mxu0 %v1247
    %v1282 = vpop.f32.mrb[0].mxu0
    %v1283 = vadd.f32 0.0, %v1282
    %v1284 = vpop.f32.mrb[0].mxu0
    %v1285 = vadd.f32 0.0, %v1284
    %v1286 = vpop.f32.mrb[0].mxu0
    %v1287 = vpop.f32.mrb[0].mxu0
    %1288 = vdwg.mxu0
    %1289 = vmatprep.subr.bf16.mxu0 0
    %1290 = vmatpush1.bf16.msra.mxu0 %v746
    %1291 = vmatprep.subr.bf16.mxu0 0
    %1292 = vmatpush1.bf16.msra.mxu0 %v749
    %1293 = vmatprep.subr.bf16.mxu0 0
    %1294 = vmatpush1.bf16.msra.mxu0 %v752
    %1295 = vmatprep.subr.bf16.mxu0 0
    %1296 = vmatpush1.bf16.msra.mxu0 %v755
    %1297 = vmatprep.subr.bf16.mxu0 0
    %1298 = vmatpush1.bf16.msra.mxu0 %v758
    %1299 = vmatprep.subr.bf16.mxu0 0
    %1300 = vmatpush1.bf16.msra.mxu0 %v761
    %1301 = vmatprep.subr.bf16.mxu0 0
    %1302 = vmatpush1.bf16.msra.mxu0 %v764
    %1303 = vmatprep.subr.bf16.mxu0 0
    %1304 = vmatpush1.bf16.msra.mxu0 %v767
    %1305 = vmatprep.subr.bf16.mxu0 0
    %1306 = vmatpush1.bf16.msra.mxu0 0
    %1307 = vmatprep.subr.bf16.mxu0 0
    %1308 = vmatpush1.bf16.msra.mxu0 0
    %1309 = vmatprep.subr.bf16.mxu0 0
    %1310 = vmatpush1.bf16.msra.mxu0 0
    %1311 = vmatprep.subr.bf16.mxu0 0
    %1312 = vmatpush1.bf16.msra.mxu0 0
    %1313 = vmatprep.subr.bf16.mxu0 0
    %1314 = vmatpush1.bf16.msra.mxu0 0
    %1315 = vmatprep.subr.bf16.mxu0 0
    %1316 = vmatpush1.bf16.msra.mxu0 0
    %1317 = vmatprep.subr.bf16.mxu0 0
    %1318 = vmatpush1.bf16.msra.mxu0 0
    %1319 = vmatprep.subr.bf16.mxu0 0
    %1320 = vmatpush1.bf16.msra.mxu0 0
    %1321 = vmatprep.mubr.bf16.mxu0 0
    %1322 = vmatmul.mubr.bf16.gmra.mrb[0].mxu0 %v1247
    %v1323 = vpop.f32.mrb[0].mxu0
    %v1324 = vadd.f32 0.0, %v1323
    %v1325 = vpop.f32.mrb[0].mxu0
    %v1326 = vpop.f32.mrb[0].mxu0
    %v1327 = vpop.f32.mrb[0].mxu0
    %1328 = vdwg.mxu0
    %v1329 = vadd.f32 %v1244, %v1283
    %v1330 = vxor.u32 %v1329, 2147483648
    %v1331 = vmul.f32 %v1330, 1.442695
    %v1332 = vpow.pop %v1331
    %v1333 = vadd.f32 %v1332, 1.0
    %v1334 = vrcp.pop %v1333
    %v1335 = vmul.f32 1.0, %v1334
    %v1336 = vadd.f32 %v1245, %v1285
    %v1337 = vxor.u32 %v1336, 2147483648
    %v1338 = vmul.f32 %v1337, 1.442695
    %v1339 = vpow.pop %v1338
    %v1340 = vadd.f32 %v1339, 1.0
    %v1341 = vrcp.pop %v1340
    %v1342 = vmul.f32 1.0, %v1341
    %v1343 = vadd.f32 %v1324, %v306
    %v1344 = vmul.f32 %v1335, %v1343
    %v1345 = vadd.f32 %v1246, %v1344
    %v1346 = vtanh.pop %v1345
    %v1347 = vsub.f32 1.0, %v1342
    %v1348 = vmul.f32 %v1347, %v1346
    %v1349 = vmul.f32 %v1342, %v1242
    %v1350 = vadd.f32 %v1348, %v1349
    %v1351 = vsel %vm265, 1, 0
    %1352 = vset.pattern.permute.xlu0 0
    %1353 = vperm.xlu0 %1352, %v1351
    %v1354 = vpop.permute.xlu0 %1353
    %vm1355 = vcmp.eq.s32.totalorder %v1354, 1
    %v1356 = vsel %vm1355, %v1350, %v1242
    %1357 = vst [vmem:[#allocation2 + $0x20] sm:$0xff] %v1356
    %v1358 = vld [vmem:[#allocation3 + $0x78] sm:$0xff]
    %v1359 = vld [vmem:[#allocation3 + $0x80] sm:$0xff]
    %v1360 = vld [vmem:[#allocation3 + $0x88] sm:$0xff]
    %v1361 = vpack.c.bf16 %v1356, %v1356
    %1362 = vmatprep.subr.bf16.mxu0 %v745
    %1363 = vmatpush1.bf16.msra.mxu0 %v744
    %1364 = vmatprep.subr.bf16.mxu0 %v748
    %1365 = vmatpush1.bf16.msra.mxu0 %v747
    %1366 = vmatprep.subr.bf16.mxu0 %v751
    %1367 = vmatpush1.bf16.msra.mxu0 %v750
    %1368 = vmatprep.subr.bf16.mxu0 %v754
    %1369 = vmatpush1.bf16.msra.mxu0 %v753
    %1370 = vmatprep.subr.bf16.mxu0 %v757
    %1371 = vmatpush1.bf16.msra.mxu0 %v756
    %1372 = vmatprep.subr.bf16.mxu0 %v760
    %1373 = vmatpush1.bf16.msra.mxu0 %v759
    %1374 = vmatprep.subr.bf16.mxu0 %v763
    %1375 = vmatpush1.bf16.msra.mxu0 %v762
    %1376 = vmatprep.subr.bf16.mxu0 %v766
    %1377 = vmatpush1.bf16.msra.mxu0 %v765
    %1378 = vmatprep.subr.bf16.mxu0 0
    %1379 = vmatpush1.bf16.msra.mxu0 0
    %1380 = vmatprep.subr.bf16.mxu0 0
    %1381 = vmatpush1.bf16.msra.mxu0 0
    %1382 = vmatprep.subr.bf16.mxu0 0
    %1383 = vmatpush1.bf16.msra.mxu0 0
    %1384 = vmatprep.subr.bf16.mxu0 0
    %1385 = vmatpush1.bf16.msra.mxu0 0
    %1386 = vmatprep.subr.bf16.mxu0 0
    %1387 = vmatpush1.bf16.msra.mxu0 0
    %1388 = vmatprep.subr.bf16.mxu0 0
    %1389 = vmatpush1.bf16.msra.mxu0 0
    %1390 = vmatprep.subr.bf16.mxu0 0
    %1391 = vmatpush1.bf16.msra.mxu0 0
    %1392 = vmatprep.subr.bf16.mxu0 0
    %1393 = vmatpush1.bf16.msra.mxu0 0
    %1394 = vmatprep.mubr.bf16.mxu0 0
    %1395 = vmatmul.mubr.bf16.gmra.mrb[0].mxu0 %v1361
    %v1396 = vpop.f32.mrb[0].mxu0
    %v1397 = vadd.f32 0.0, %v1396
    %v1398 = vpop.f32.mrb[0].mxu0
    %v1399 = vadd.f32 0.0, %v1398
    %v1400 = vpop.f32.mrb[0].mxu0
    %v1401 = vpop.f32.mrb[0].mxu0
    %1402 = vdwg.mxu0
    %1403 = vmatprep.subr.bf16.mxu0 0
    %1404 = vmatpush1.bf16.msra.mxu0 %v746
    %1405 = vmatprep.subr.bf16.mxu0 0
    %1406 = vmatpush1.bf16.msra.mxu0 %v749
    %1407 = vmatprep.subr.bf16.mxu0 0
    %1408 = vmatpush1.bf16.msra.mxu0 %v752
    %1409 = vmatprep.subr.bf16.mxu0 0
    %1410 = vmatpush1.bf16.msra.mxu0 %v755
    %1411 = vmatprep.subr.bf16.mxu0 0
    %1412 = vmatpush1.bf16.msra.mxu0 %v758
    %1413 = vmatprep.subr.bf16.mxu0 0
    %1414 = vmatpush1.bf16.msra.mxu0 %v761
    %1415 = vmatprep.subr.bf16.mxu0 0
    %1416 = vmatpush1.bf16.msra.mxu0 %v764
    %1417 = vmatprep.subr.bf16.mxu0 0
    %1418 = vmatpush1.bf16.msra.mxu0 %v767
    %1419 = vmatprep.subr.bf16.mxu0 0
    %1420 = vmatpush1.bf16.msra.mxu0 0
    %1421 = vmatprep.subr.bf16.mxu0 0
    %1422 = vmatpush1.bf16.msra.mxu0 0
    %1423 = vmatprep.subr.bf16.mxu0 0
    %1424 = vmatpush1.bf16.msra.mxu0 0
    %1425 = vmatprep.subr.bf16.mxu0 0
    %1426 = vmatpush1.bf16.msra.mxu0 0
    %1427 = vmatprep.subr.bf16.mxu0 0
    %1428 = vmatpush1.bf16.msra.mxu0 0
    %1429 = vmatprep.subr.bf16.mxu0 0
    %1430 = vmatpush1.bf16.msra.mxu0 0
    %1431 = vmatprep.subr.bf16.mxu0 0
    %1432 = vmatpush1.bf16.msra.mxu0 0
    %1433 = vmatprep.subr.bf16.mxu0 0
    %1434 = vmatpush1.bf16.msra.mxu0 0
    %1435 = vmatprep.mubr.bf16.mxu0 0
    %1436 = vmatmul.mubr.bf16.gmra.mrb[0].mxu0 %v1361
    %v1437 = vpop.f32.mrb[0].mxu0
    %v1438 = vadd.f32 0.0, %v1437
    %v1439 = vpop.f32.mrb[0].mxu0
    %v1440 = vpop.f32.mrb[0].mxu0
    %v1441 = vpop.f32.mrb[0].mxu0
    %1442 = vdwg.mxu0
    %v1443 = vadd.f32 %v1358, %v1397
    %v1444 = vxor.u32 %v1443, 2147483648
    %v1445 = vmul.f32 %v1444, 1.442695
    %v1446 = vpow.pop %v1445
    %v1447 = vadd.f32 %v1446, 1.0
    %v1448 = vrcp.pop %v1447
    %v1449 = vmul.f32 1.0, %v1448
    %v1450 = vadd.f32 %v1359, %v1399
    %v1451 = vxor.u32 %v1450, 2147483648
    %v1452 = vmul.f32 %v1451, 1.442695
    %v1453 = vpow.pop %v1452
    %v1454 = vadd.f32 %v1453, 1.0
    %v1455 = vrcp.pop %v1454
    %v1456 = vmul.f32 1.0, %v1455
    %v1457 = vadd.f32 %v1438, %v306
    %v1458 = vmul.f32 %v1449, %v1457
    %v1459 = vadd.f32 %v1360, %v1458
    %v1460 = vtanh.pop %v1459
    %v1461 = vsub.f32 1.0, %v1456
    %v1462 = vmul.f32 %v1461, %v1460
    %v1463 = vmul.f32 %v1456, %v1356
    %v1464 = vadd.f32 %v1462, %v1463
    %v1465 = vsel %vm266, 1, 0
    %1466 = vset.pattern.permute.xlu0 0
    %1467 = vperm.xlu0 %1466, %v1465
    %v1468 = vpop.permute.xlu0 %1467
    %vm1469 = vcmp.eq.s32.totalorder %v1468, 1
    %v1470 = vsel %vm1469, %v1464, %v1356
    %1471 = vst [vmem:[#allocation2 + $0x28] sm:$0xff] %v1470
    %v1472 = vld [vmem:[#allocation3 + $0x90] sm:$0xff]
    %v1473 = vld [vmem:[#allocation3 + $0x98] sm:$0xff]
    %v1474 = vld [vmem:[#allocation3 + $0xa0] sm:$0xff]
    %v1475 = vpack.c.bf16 %v1470, %v1470
    %1476 = vmatprep.subr.bf16.mxu0 %v745
    %1477 = vmatpush1.bf16.msra.mxu0 %v744
    %1478 = vmatprep.subr.bf16.mxu0 %v748
    %1479 = vmatpush1.bf16.msra.mxu0 %v747
    %1480 = vmatprep.subr.bf16.mxu0 %v751
    %1481 = vmatpush1.bf16.msra.mxu0 %v750
    %1482 = vmatprep.subr.bf16.mxu0 %v754
    %1483 = vmatpush1.bf16.msra.mxu0 %v753
    %1484 = vmatprep.subr.bf16.mxu0 %v757
    %1485 = vmatpush1.bf16.msra.mxu0 %v756
    %1486 = vmatprep.subr.bf16.mxu0 %v760
    %1487 = vmatpush1.bf16.msra.mxu0 %v759
    %1488 = vmatprep.subr.bf16.mxu0 %v763
    %1489 = vmatpush1.bf16.msra.mxu0 %v762
    %1490 = vmatprep.subr.bf16.mxu0 %v766
    %1491 = vmatpush1.bf16.msra.mxu0 %v765
    %1492 = vmatprep.subr.bf16.mxu0 0
    %1493 = vmatpush1.bf16.msra.mxu0 0
    %1494 = vmatprep.subr.bf16.mxu0 0
    %1495 = vmatpush1.bf16.msra.mxu0 0
    %1496 = vmatprep.subr.bf16.mxu0 0
    %1497 = vmatpush1.bf16.msra.mxu0 0
    %1498 = vmatprep.subr.bf16.mxu0 0
    %1499 = vmatpush1.bf16.msra.mxu0 0
    %1500 = vmatprep.subr.bf16.mxu0 0
    %1501 = vmatpush1.bf16.msra.mxu0 0
    %1502 = vmatprep.subr.bf16.mxu0 0
    %1503 = vmatpush1.bf16.msra.mxu0 0
    %1504 = vmatprep.subr.bf16.mxu0 0
    %1505 = vmatpush1.bf16.msra.mxu0 0
    %1506 = vmatprep.subr.bf16.mxu0 0
    %1507 = vmatpush1.bf16.msra.mxu0 0
    %1508 = vmatprep.mubr.bf16.mxu0 0
    %1509 = vmatmul.mubr.bf16.gmra.mrb[0].mxu0 %v1475
    %v1510 = vpop.f32.mrb[0].mxu0
    %v1511 = vadd.f32 0.0, %v1510
    %v1512 = vpop.f32.mrb[0].mxu0
    %v1513 = vadd.f32 0.0, %v1512
    %v1514 = vpop.f32.mrb[0].mxu0
    %v1515 = vpop.f32.mrb[0].mxu0
    %1516 = vdwg.mxu0
    %1517 = vmatprep.subr.bf16.mxu0 0
    %1518 = vmatpush1.bf16.msra.mxu0 %v746
    %1519 = vmatprep.subr.bf16.mxu0 0
    %1520 = vmatpush1.bf16.msra.mxu0 %v749
    %1521 = vmatprep.subr.bf16.mxu0 0
    %1522 = vmatpush1.bf16.msra.mxu0 %v752
    %1523 = vmatprep.subr.bf16.mxu0 0
    %1524 = vmatpush1.bf16.msra.mxu0 %v755
    %1525 = vmatprep.subr.bf16.mxu0 0
    %1526 = vmatpush1.bf16.msra.mxu0 %v758
    %1527 = vmatprep.subr.bf16.mxu0 0
    %1528 = vmatpush1.bf16.msra.mxu0 %v761
    %1529 = vmatprep.subr.bf16.mxu0 0
    %1530 = vmatpush1.bf16.msra.mxu0 %v764
    %1531 = vmatprep.subr.bf16.mxu0 0
    %1532 = vmatpush1.bf16.msra.mxu0 %v767
    %1533 = vmatprep.subr.bf16.mxu0 0
    %1534 = vmatpush1.bf16.msra.mxu0 0
    %1535 = vmatprep.subr.bf16.mxu0 0
    %1536 = vmatpush1.bf16.msra.mxu0 0
    %1537 = vmatprep.subr.bf16.mxu0 0
    %1538 = vmatpush1.bf16.msra.mxu0 0
    %1539 = vmatprep.subr.bf16.mxu0 0
    %1540 = vmatpush1.bf16.msra.mxu0 0
    %1541 = vmatprep.subr.bf16.mxu0 0
    %1542 = vmatpush1.bf16.msra.mxu0 0
    %1543 = vmatprep.subr.bf16.mxu0 0
    %1544 = vmatpush1.bf16.msra.mxu0 0
    %1545 = vmatprep.subr.bf16.mxu0 0
    %1546 = vmatpush1.bf16.msra.mxu0 0
    %1547 = vmatprep.subr.bf16.mxu0 0
    %1548 = vmatpush1.bf16.msra.mxu0 0
    %1549 = vmatprep.mubr.bf16.mxu0 0
    %1550 = vmatmul.mubr.bf16.gmra.mrb[0].mxu0 %v1475
    %v1551 = vpop.f32.mrb[0].mxu0
    %v1552 = vadd.f32 0.0, %v1551
    %v1553 = vpop.f32.mrb[0].mxu0
    %v1554 = vpop.f32.mrb[0].mxu0
    %v1555 = vpop.f32.mrb[0].mxu0
    %1556 = vdwg.mxu0
    %v1557 = vadd.f32 %v1472, %v1511
    %v1558 = vxor.u32 %v1557, 2147483648
    %v1559 = vmul.f32 %v1558, 1.442695
    %v1560 = vpow.pop %v1559
    %v1561 = vadd.f32 %v1560, 1.0
    %v1562 = vrcp.pop %v1561
    %v1563 = vmul.f32 1.0, %v1562
    %v1564 = vadd.f32 %v1473, %v1513
    %v1565 = vxor.u32 %v1564, 2147483648
    %v1566 = vmul.f32 %v1565, 1.442695
    %v1567 = vpow.pop %v1566
    %v1568 = vadd.f32 %v1567, 1.0
    %v1569 = vrcp.pop %v1568
    %v1570 = vmul.f32 1.0, %v1569
    %v1571 = vadd.f32 %v1552, %v306
    %v1572 = vmul.f32 %v1563, %v1571
    %v1573 = vadd.f32 %v1474, %v1572
    %v1574 = vtanh.pop %v1573
    %v1575 = vsub.f32 1.0, %v1570
    %v1576 = vmul.f32 %v1575, %v1574
    %v1577 = vmul.f32 %v1570, %v1470
    %v1578 = vadd.f32 %v1576, %v1577
    %v1579 = vsel %vm267, 1, 0
    %1580 = vset.pattern.permute.xlu0 0
    %1581 = vperm.xlu0 %1580, %v1579
    %v1582 = vpop.permute.xlu0 %1581
    %vm1583 = vcmp.eq.s32.totalorder %v1582, 1
    %v1584 = vsel %vm1583, %v1578, %v1470
    %1585 = vst [vmem:[#allocation2 + $0x30] sm:$0xff] %v1584
    %v1586 = vld [vmem:[#allocation3 + $0xa8] sm:$0xff]
    %v1587 = vld [vmem:[#allocation3 + $0xb0] sm:$0xff]
    %v1588 = vld [vmem:[#allocation3 + $0xb8] sm:$0xff]
    %v1589 = vpack.c.bf16 %v1584, %v1584
    %1590 = vmatprep.subr.bf16.mxu0 %v745
    %1591 = vmatpush1.bf16.msra.mxu0 %v744
    %1592 = vmatprep.subr.bf16.mxu0 %v748
    %1593 = vmatpush1.bf16.msra.mxu0 %v747
    %1594 = vmatprep.subr.bf16.mxu0 %v751
    %1595 = vmatpush1.bf16.msra.mxu0 %v750
    %1596 = vmatprep.subr.bf16.mxu0 %v754
    %1597 = vmatpush1.bf16.msra.mxu0 %v753
    %1598 = vmatprep.subr.bf16.mxu0 %v757
    %1599 = vmatpush1.bf16.msra.mxu0 %v756
    %1600 = vmatprep.subr.bf16.mxu0 %v760
    %1601 = vmatpush1.bf16.msra.mxu0 %v759
    %1602 = vmatprep.subr.bf16.mxu0 %v763
    %1603 = vmatpush1.bf16.msra.mxu0 %v762
    %1604 = vmatprep.subr.bf16.mxu0 %v766
    %1605 = vmatpush1.bf16.msra.mxu0 %v765
    %1606 = vmatprep.subr.bf16.mxu0 0
    %1607 = vmatpush1.bf16.msra.mxu0 0
    %1608 = vmatprep.subr.bf16.mxu0 0
    %1609 = vmatpush1.bf16.msra.mxu0 0
    %1610 = vmatprep.subr.bf16.mxu0 0
    %1611 = vmatpush1.bf16.msra.mxu0 0
    %1612 = vmatprep.subr.bf16.mxu0 0
    %1613 = vmatpush1.bf16.msra.mxu0 0
    %1614 = vmatprep.subr.bf16.mxu0 0
    %1615 = vmatpush1.bf16.msra.mxu0 0
    %1616 = vmatprep.subr.bf16.mxu0 0
    %1617 = vmatpush1.bf16.msra.mxu0 0
    %1618 = vmatprep.subr.bf16.mxu0 0
    %1619 = vmatpush1.bf16.msra.mxu0 0
    %1620 = vmatprep.subr.bf16.mxu0 0
    %1621 = vmatpush1.bf16.msra.mxu0 0
    %1622 = vmatprep.mubr.bf16.mxu0 0
    %1623 = vmatmul.mubr.bf16.gmra.mrb[0].mxu0 %v1589
    %v1624 = vpop.f32.mrb[0].mxu0
    %v1625 = vadd.f32 0.0, %v1624
    %v1626 = vpop.f32.mrb[0].mxu0
    %v1627 = vadd.f32 0.0, %v1626
    %v1628 = vpop.f32.mrb[0].mxu0
    %v1629 = vpop.f32.mrb[0].mxu0
    %1630 = vdwg.mxu0
    %1631 = vmatprep.subr.bf16.mxu0 0
    %1632 = vmatpush1.bf16.msra.mxu0 %v746
    %1633 = vmatprep.subr.bf16.mxu0 0
    %1634 = vmatpush1.bf16.msra.mxu0 %v749
    %1635 = vmatprep.subr.bf16.mxu0 0
    %1636 = vmatpush1.bf16.msra.mxu0 %v752
    %1637 = vmatprep.subr.bf16.mxu0 0
    %1638 = vmatpush1.bf16.msra.mxu0 %v755
    %1639 = vmatprep.subr.bf16.mxu0 0
    %1640 = vmatpush1.bf16.msra.mxu0 %v758
    %1641 = vmatprep.subr.bf16.mxu0 0
    %1642 = vmatpush1.bf16.msra.mxu0 %v761
    %1643 = vmatprep.subr.bf16.mxu0 0
    %1644 = vmatpush1.bf16.msra.mxu0 %v764
    %1645 = vmatprep.subr.bf16.mxu0 0
    %1646 = vmatpush1.bf16.msra.mxu0 %v767
    %1647 = vmatprep.subr.bf16.mxu0 0
    %1648 = vmatpush1.bf16.msra.mxu0 0
    %1649 = vmatprep.subr.bf16.mxu0 0
    %1650 = vmatpush1.bf16.msra.mxu0 0
    %1651 = vmatprep.subr.bf16.mxu0 0
    %1652 = vmatpush1.bf16.msra.mxu0 0
    %1653 = vmatprep.subr.bf16.mxu0 0
    %1654 = vmatpush1.bf16.msra.mxu0 0
    %1655 = vmatprep.subr.bf16.mxu0 0
    %1656 = vmatpush1.bf16.msra.mxu0 0
    %1657 = vmatprep.subr.bf16.mxu0 0
    %1658 = vmatpush1.bf16.msra.mxu0 0
    %1659 = vmatprep.subr.bf16.mxu0 0
    %1660 = vmatpush1.bf16.msra.mxu0 0
    %1661 = vmatprep.subr.bf16.mxu0 0
    %1662 = vmatpush1.bf16.msra.mxu0 0
    %1663 = vmatprep.mubr.bf16.mxu0 0
    %1664 = vmatmul.mubr.bf16.gmra.mrb[0].mxu0 %v1589
    %v1665 = vpop.f32.mrb[0].mxu0
    %v1666 = vadd.f32 0.0, %v1665
    %v1667 = vpop.f32.mrb[0].mxu0
    %v1668 = vpop.f32.mrb[0].mxu0
    %v1669 = vpop.f32.mrb[0].mxu0
    %1670 = vdwg.mxu0
    %v1671 = vadd.f32 %v1586, %v1625
    %v1672 = vxor.u32 %v1671, 2147483648
    %v1673 = vmul.f32 %v1672, 1.442695
    %v1674 = vpow.pop %v1673
    %v1675 = vadd.f32 %v1674, 1.0
    %v1676 = vrcp.pop %v1675
    %v1677 = vmul.f32 1.0, %v1676
    %v1678 = vadd.f32 %v1587, %v1627
    %v1679 = vxor.u32 %v1678, 2147483648
    %v1680 = vmul.f32 %v1679, 1.442695
    %v1681 = vpow.pop %v1680
    %v1682 = vadd.f32 %v1681, 1.0
    %v1683 = vrcp.pop %v1682
    %v1684 = vmul.f32 1.0, %v1683
    %v1685 = vadd.f32 %v1666, %v306
    %v1686 = vmul.f32 %v1677, %v1685
    %v1687 = vadd.f32 %v1588, %v1686
    %v1688 = vtanh.pop %v1687
    %v1689 = vsub.f32 1.0, %v1684
    %v1690 = vmul.f32 %v1689, %v1688
    %v1691 = vmul.f32 %v1684, %v1584
    %v1692 = vadd.f32 %v1690, %v1691
    %v1693 = vsel %vm268, 1, 0
    %1694 = vset.pattern.permute.xlu0 0
    %1695 = vperm.xlu0 %1694, %v1693
    %v1696 = vpop.permute.xlu0 %1695
    %vm1697 = vcmp.eq.s32.totalorder %v1696, 1
    %v1698 = vsel %vm1697, %v1692, %v1584
    %1699 = vst [vmem:[#allocation2 + $0x38] sm:$0xff] %v1698
    %1700 = vst [vmem:[#allocation12] sm:$0xff] %v1698
    %s1701 = scalar_lea.vmem [#allocation10], 192
    %v1702 = vld [vmem:[%s1701] sm:$0xff]
    %v1703 = vld [vmem:[%s1701 + $0x8] sm:$0xf]
    %v1704 = vld [vmem:[%s1701 + $0xc] sm:$0xff]
    %v1705 = vld [vmem:[%s1701 + $0x14] sm:$0xf]
    %v1706 = vld [vmem:[%s1701 + $0x18] sm:$0xff]
    %v1707 = vld [vmem:[%s1701 + $0x20] sm:$0xf]
    %v1708 = vld [vmem:[%s1701 + $0x24] sm:$0xff]
    %v1709 = vld [vmem:[%s1701 + $0x2c] sm:$0xf]
    %v1710 = vld [vmem:[%s1701 + $0x30] sm:$0xff]
    %v1711 = vld [vmem:[%s1701 + $0x38] sm:$0xf]
    %v1712 = vld [vmem:[%s1701 + $0x3c] sm:$0xff]
    %v1713 = vld [vmem:[%s1701 + $0x44] sm:$0xf]
    %v1714 = vld [vmem:[%s1701 + $0x48] sm:$0xff]
    %v1715 = vld [vmem:[%s1701 + $0x50] sm:$0xf]
    %v1716 = vld [vmem:[%s1701 + $0x54] sm:$0xff]
    %v1717 = vld [vmem:[%s1701 + $0x5c] sm:$0xf]
    %v1718 = vld [vmem:[%s1701 + $0x60] sm:$0xff]
    %v1719 = vld [vmem:[%s1701 + $0x68] sm:$0xf]
    %v1720 = vld [vmem:[%s1701 + $0x6c] sm:$0xff]
    %v1721 = vld [vmem:[%s1701 + $0x74] sm:$0xf]
    %v1722 = vld [vmem:[%s1701 + $0x78] sm:$0xff]
    %v1723 = vld [vmem:[%s1701 + $0x80] sm:$0xf]
    %v1724 = vld [vmem:[%s1701 + $0x84] sm:$0xff]
    %v1725 = vld [vmem:[%s1701 + $0x8c] sm:$0xf]
    %v1726 = vld [vmem:[%s1701 + $0x90] sm:$0xff]
    %v1727 = vld [vmem:[%s1701 + $0x98] sm:$0xf]
    %v1728 = vld [vmem:[%s1701 + $0x9c] sm:$0xff]
    %v1729 = vld [vmem:[%s1701 + $0xa4] sm:$0xf]
    %v1730 = vld [vmem:[%s1701 + $0xa8] sm:$0xff]
    %v1731 = vld [vmem:[%s1701 + $0xb0] sm:$0xf]
    %v1732 = vld [vmem:[%s1701 + $0xb4] sm:$0xff]
    %v1733 = vld [vmem:[%s1701 + $0xbc] sm:$0xf]
    %s1734 = scalar_lea.vmem %s6, 1
    %v1735 = vld [vmem:[%s1734] sm:$0x1]
    %v1737 = vlaneseq
    %v1738 = vshrl.u32 %v1737, 7
    %v1739 = vsub.s32 0, %v1738
    %v1740 = vrot.slane %v1735, %v1739
    %v1742 = vld [vmem:[#allocation2] sm:$0xff]
    %v1743 = vld [vmem:[#allocation2 + $0x8] sm:$0xff]
    %v1744 = vld [vmem:[#allocation2 + $0x10] sm:$0xff]
    %v1745 = vld [vmem:[#allocation2 + $0x18] sm:$0xff]
    %v1746 = vld [vmem:[#allocation2 + $0x20] sm:$0xff]
    %v1747 = vld [vmem:[#allocation2 + $0x28] sm:$0xff]
    %v1748 = vld [vmem:[#allocation2 + $0x30] sm:$0xff]
    %v1749 = vld [vmem:[#allocation2 + $0x38] sm:$0xff]
    %v1750 = vpack.c.bf16 %v1743, %v1742
    %v1751 = vpack.c.bf16 %v1745, %v1744
    %v1752 = vpack.c.bf16 %v1747, %v1746
    %v1753 = vpack.c.bf16 %v1749, %v1748
    %s1754 = scalar_lea.vmem [#allocation8], 192
    %v1755 = vld [vmem:[%s1754] sm:$0xff]
    %v1756 = vld [vmem:[%s1754 + $0x8] sm:$0xf]
    %v1757 = vld [vmem:[%s1754 + $0xc] sm:$0xff]
    %v1758 = vld [vmem:[%s1754 + $0x14] sm:$0xf]
    %v1759 = vld [vmem:[%s1754 + $0x18] sm:$0xff]
    %v1760 = vld [vmem:[%s1754 + $0x20] sm:$0xf]
    %v1761 = vld [vmem:[%s1754 + $0x24] sm:$0xff]
    %v1762 = vld [vmem:[%s1754 + $0x2c] sm:$0xf]
    %v1763 = vld [vmem:[%s1754 + $0x30] sm:$0xff]
    %v1764 = vld [vmem:[%s1754 + $0x38] sm:$0xf]
    %v1765 = vld [vmem:[%s1754 + $0x3c] sm:$0xff]
    %v1766 = vld [vmem:[%s1754 + $0x44] sm:$0xf]
    %v1767 = vld [vmem:[%s1754 + $0x48] sm:$0xff]
    %v1768 = vld [vmem:[%s1754 + $0x50] sm:$0xf]
    %v1769 = vld [vmem:[%s1754 + $0x54] sm:$0xff]
    %v1770 = vld [vmem:[%s1754 + $0x5c] sm:$0xf]
    %v1771 = vld [vmem:[%s1754 + $0x60] sm:$0xff]
    %v1772 = vld [vmem:[%s1754 + $0x68] sm:$0xf]
    %v1773 = vld [vmem:[%s1754 + $0x6c] sm:$0xff]
    %v1774 = vld [vmem:[%s1754 + $0x74] sm:$0xf]
    %v1775 = vld [vmem:[%s1754 + $0x78] sm:$0xff]
    %v1776 = vld [vmem:[%s1754 + $0x80] sm:$0xf]
    %v1777 = vld [vmem:[%s1754 + $0x84] sm:$0xff]
    %v1778 = vld [vmem:[%s1754 + $0x8c] sm:$0xf]
    %v1779 = vld [vmem:[%s1754 + $0x90] sm:$0xff]
    %v1780 = vld [vmem:[%s1754 + $0x98] sm:$0xf]
    %v1781 = vld [vmem:[%s1754 + $0x9c] sm:$0xff]
    %v1782 = vld [vmem:[%s1754 + $0xa4] sm:$0xf]
    %v1783 = vld [vmem:[%s1754 + $0xa8] sm:$0xff]
    %v1784 = vld [vmem:[%s1754 + $0xb0] sm:$0xf]
    %v1785 = vld [vmem:[%s1754 + $0xb4] sm:$0xff]
    %v1786 = vld [vmem:[%s1754 + $0xbc] sm:$0xf]
    %s1787 = scalar_lea.vmem %s5, 3
    %v1788 = vld [vmem:[%s1787] sm:$0x7]
    %v1790 = vlaneseq
    %v1791 = vshrl.u32 %v1790, 7
    %v1792 = vsub.s32 0, %v1791
    %v1793 = vrot.slane %v1788, %v1792
    %v1794 = vlaneseq
    %v1795 = vshrl.u32 %v1794, 7
    %v1796 = vsub.s32 1, %v1795
    %v1797 = vrot.slane %v1788, %v1796
    %v1798 = vlaneseq
    %v1799 = vshrl.u32 %v1798, 7
    %v1800 = vsub.s32 2, %v1799
    %v1801 = vrot.slane %v1788, %v1800
    %v1837 = vunpack.c.l.b16 %v1755
    %v1838 = vunpack.c.h.b16 %v1755
    %v1839 = vunpack.c.l.b16 %v1756
    %v1840 = vunpack.c.l.b16 %v1757
    %v1841 = vunpack.c.h.b16 %v1757
    %v1842 = vunpack.c.l.b16 %v1758
    %v1843 = vunpack.c.l.b16 %v1759
    %v1844 = vunpack.c.h.b16 %v1759
    %v1845 = vunpack.c.l.b16 %v1760
    %v1846 = vunpack.c.l.b16 %v1761
    %v1847 = vunpack.c.h.b16 %v1761
    %v1848 = vunpack.c.l.b16 %v1762
    %v1849 = vunpack.c.l.b16 %v1763
    %v1850 = vunpack.c.h.b16 %v1763
    %v1851 = vunpack.c.l.b16 %v1764
    %v1852 = vunpack.c.l.b16 %v1765
    %v1853 = vunpack.c.h.b16 %v1765
    %v1854 = vunpack.c.l.b16 %v1766
    %v1855 = vunpack.c.l.b16 %v1767
    %v1856 = vunpack.c.h.b16 %v1767
    %v1857 = vunpack.c.l.b16 %v1768
    %v1858 = vunpack.c.l.b16 %v1769
    %v1859 = vunpack.c.h.b16 %v1769
    %v1860 = vunpack.c.l.b16 %v1770
    %v1861 = vunpack.c.l.b16 %v1771
    %v1862 = vunpack.c.h.b16 %v1771
    %v1863 = vunpack.c.l.b16 %v1772
    %v1864 = vunpack.c.l.b16 %v1773
    %v1865 = vunpack.c.h.b16 %v1773
    %v1866 = vunpack.c.l.b16 %v1774
    %v1867 = vunpack.c.l.b16 %v1775
    %v1868 = vunpack.c.h.b16 %v1775
    %v1869 = vunpack.c.l.b16 %v1776
    %v1870 = vunpack.c.l.b16 %v1777
    %v1871 = vunpack.c.h.b16 %v1777
    %v1872 = vunpack.c.l.b16 %v1778
    %v1873 = vunpack.c.l.b16 %v1779
    %v1874 = vunpack.c.h.b16 %v1779
    %v1875 = vunpack.c.l.b16 %v1780
    %v1876 = vunpack.c.l.b16 %v1781
    %v1877 = vunpack.c.h.b16 %v1781
    %v1878 = vunpack.c.l.b16 %v1782
    %v1879 = vunpack.c.l.b16 %v1783
    %v1880 = vunpack.c.h.b16 %v1783
    %v1881 = vunpack.c.l.b16 %v1784
    %v1882 = vunpack.c.l.b16 %v1785
    %v1883 = vunpack.c.h.b16 %v1785
    %v1884 = vunpack.c.l.b16 %v1786
    %v1885 = vpack.c.b16 %v1840, %v1837
    %v1886 = vpack.c.b16 %v1841, %v1838
    %v1887 = vpack.c.b16 %v1842, %v1839
    %v1888 = vpack.c.b16 %v1846, %v1843
    %v1889 = vpack.c.b16 %v1847, %v1844
    %v1890 = vpack.c.b16 %v1848, %v1845
    %v1891 = vpack.c.b16 %v1852, %v1849
    %v1892 = vpack.c.b16 %v1853, %v1850
    %v1893 = vpack.c.b16 %v1854, %v1851
    %v1894 = vpack.c.b16 %v1858, %v1855
    %v1895 = vpack.c.b16 %v1859, %v1856
    %v1896 = vpack.c.b16 %v1860, %v1857
    %v1897 = vpack.c.b16 %v1864, %v1861
    %v1898 = vpack.c.b16 %v1865, %v1862
    %v1899 = vpack.c.b16 %v1866, %v1863
    %v1900 = vpack.c.b16 %v1870, %v1867
    %v1901 = vpack.c.b16 %v1871, %v1868
    %v1902 = vpack.c.b16 %v1872, %v1869
    %v1903 = vpack.c.b16 %v1876, %v1873
    %v1904 = vpack.c.b16 %v1877, %v1874
    %v1905 = vpack.c.b16 %v1878, %v1875
    %v1906 = vpack.c.b16 %v1882, %v1879
    %v1907 = vpack.c.b16 %v1883, %v1880
    %v1908 = vpack.c.b16 %v1884, %v1881
    %1933 = vmatprep.subr.bf16.mxu0 %v1886
    %1934 = vmatpush1.bf16.msra.mxu0 %v1885
    %1935 = vmatprep.subr.bf16.mxu0 %v1889
    %1936 = vmatpush1.bf16.msra.mxu0 %v1888
    %1937 = vmatprep.subr.bf16.mxu0 %v1892
    %1938 = vmatpush1.bf16.msra.mxu0 %v1891
    %1939 = vmatprep.subr.bf16.mxu0 %v1895
    %1940 = vmatpush1.bf16.msra.mxu0 %v1894
    %1941 = vmatprep.subr.bf16.mxu0 %v1898
    %1942 = vmatpush1.bf16.msra.mxu0 %v1897
    %1943 = vmatprep.subr.bf16.mxu0 %v1901
    %1944 = vmatpush1.bf16.msra.mxu0 %v1900
    %1945 = vmatprep.subr.bf16.mxu0 %v1904
    %1946 = vmatpush1.bf16.msra.mxu0 %v1903
    %1947 = vmatprep.subr.bf16.mxu0 %v1907
    %1948 = vmatpush1.bf16.msra.mxu0 %v1906
    %1949 = vmatprep.subr.bf16.mxu0 0
    %1950 = vmatpush1.bf16.msra.mxu0 0
    %1951 = vmatprep.subr.bf16.mxu0 0
    %1952 = vmatpush1.bf16.msra.mxu0 0
    %1953 = vmatprep.subr.bf16.mxu0 0
    %1954 = vmatpush1.bf16.msra.mxu0 0
    %1955 = vmatprep.subr.bf16.mxu0 0
    %1956 = vmatpush1.bf16.msra.mxu0 0
    %1957 = vmatprep.subr.bf16.mxu0 0
    %1958 = vmatpush1.bf16.msra.mxu0 0
    %1959 = vmatprep.subr.bf16.mxu0 0
    %1960 = vmatpush1.bf16.msra.mxu0 0
    %1961 = vmatprep.subr.bf16.mxu0 0
    %1962 = vmatpush1.bf16.msra.mxu0 0
    %1963 = vmatprep.subr.bf16.mxu0 0
    %1964 = vmatpush1.bf16.msra.mxu0 0
    %1965 = vmatprep.mubr.bf16.mxu0 0
    %1966 = vmatmul.mubr.bf16.gmra.mrb[0].mxu0 %v1750
    %v1967 = vpop.f32.mrb[0].mxu0
    %v1968 = vadd.f32 %v1793, %v1967
    %v1969 = vpop.f32.mrb[0].mxu0
    %v1970 = vadd.f32 %v1797, %v1969
    %v1971 = vpop.f32.mrb[0].mxu0
    %v1972 = vadd.f32 %v1793, %v1971
    %v1973 = vpop.f32.mrb[0].mxu0
    %v1974 = vadd.f32 %v1797, %v1973
    %1975 = vmatprep.mubr.bf16.mxu0 0
    %1976 = vmatmul.mubr.bf16.gmra.mrb[0].mxu0 %v1751
    %v1977 = vpop.f32.mrb[0].mxu0
    %v1978 = vadd.f32 %v1793, %v1977
    %v1979 = vpop.f32.mrb[0].mxu0
    %v1980 = vadd.f32 %v1797, %v1979
    %v1981 = vpop.f32.mrb[0].mxu0
    %v1982 = vadd.f32 %v1793, %v1981
    %v1983 = vpop.f32.mrb[0].mxu0
    %v1984 = vadd.f32 %v1797, %v1983
    %1985 = vmatprep.mubr.bf16.mxu0 0
    %1986 = vmatmul.mubr.bf16.gmra.mrb[0].mxu0 %v1752
    %v1987 = vpop.f32.mrb[0].mxu0
    %v1988 = vadd.f32 %v1793, %v1987
    %v1989 = vpop.f32.mrb[0].mxu0
    %v1990 = vadd.f32 %v1797, %v1989
    %v1991 = vpop.f32.mrb[0].mxu0
    %v1992 = vadd.f32 %v1793, %v1991
    %v1993 = vpop.f32.mrb[0].mxu0
    %v1994 = vadd.f32 %v1797, %v1993
    %1995 = vmatprep.mubr.bf16.mxu0 0
    %1996 = vmatmul.mubr.bf16.gmra.mrb[0].mxu0 %v1753
    %v1997 = vpop.f32.mrb[0].mxu0
    %v1998 = vadd.f32 %v1793, %v1997
    %v1999 = vpop.f32.mrb[0].mxu0
    %v2000 = vadd.f32 %v1797, %v1999
    %v2001 = vpop.f32.mrb[0].mxu0
    %v2002 = vadd.f32 %v1793, %v2001
    %v2003 = vpop.f32.mrb[0].mxu0
    %v2004 = vadd.f32 %v1797, %v2003
    %2005 = vdwg.mxu0
    %2006 = vmatprep.subr.bf16.mxu0 0
    %2007 = vmatpush1.bf16.msra.mxu0 %v1887
    %2008 = vmatprep.subr.bf16.mxu0 0
    %2009 = vmatpush1.bf16.msra.mxu0 %v1890
    %2010 = vmatprep.subr.bf16.mxu0 0
    %2011 = vmatpush1.bf16.msra.mxu0 %v1893
    %2012 = vmatprep.subr.bf16.mxu0 0
    %2013 = vmatpush1.bf16.msra.mxu0 %v1896
    %2014 = vmatprep.subr.bf16.mxu0 0
    %2015 = vmatpush1.bf16.msra.mxu0 %v1899
    %2016 = vmatprep.subr.bf16.mxu0 0
    %2017 = vmatpush1.bf16.msra.mxu0 %v1902
    %2018 = vmatprep.subr.bf16.mxu0 0
    %2019 = vmatpush1.bf16.msra.mxu0 %v1905
    %2020 = vmatprep.subr.bf16.mxu0 0
    %2021 = vmatpush1.bf16.msra.mxu0 %v1908
    %2022 = vmatprep.subr.bf16.mxu0 0
    %2023 = vmatpush1.bf16.msra.mxu0 0
    %2024 = vmatprep.subr.bf16.mxu0 0
    %2025 = vmatpush1.bf16.msra.mxu0 0
    %2026 = vmatprep.subr.bf16.mxu0 0
    %2027 = vmatpush1.bf16.msra.mxu0 0
    %2028 = vmatprep.subr.bf16.mxu0 0
    %2029 = vmatpush1.bf16.msra.mxu0 0
    %2030 = vmatprep.subr.bf16.mxu0 0
    %2031 = vmatpush1.bf16.msra.mxu0 0
    %2032 = vmatprep.subr.bf16.mxu0 0
    %2033 = vmatpush1.bf16.msra.mxu0 0
    %2034 = vmatprep.subr.bf16.mxu0 0
    %2035 = vmatpush1.bf16.msra.mxu0 0
    %2036 = vmatprep.subr.bf16.mxu0 0
    %2037 = vmatpush1.bf16.msra.mxu0 0
    %2038 = vmatprep.mubr.bf16.mxu0 0
    %2039 = vmatmul.mubr.bf16.gmra.mrb[0].mxu0 %v1750
    %v2040 = vpop.f32.mrb[0].mxu0
    %v2041 = vadd.f32 %v1801, %v2040
    %v2042 = vpop.f32.mrb[0].mxu0
    %v2043 = vpop.f32.mrb[0].mxu0
    %v2044 = vadd.f32 %v1801, %v2043
    %v2045 = vpop.f32.mrb[0].mxu0
    %2046 = vmatprep.mubr.bf16.mxu0 0
    %2047 = vmatmul.mubr.bf16.gmra.mrb[0].mxu0 %v1751
    %v2048 = vpop.f32.mrb[0].mxu0
    %v2049 = vadd.f32 %v1801, %v2048
    %v2050 = vpop.f32.mrb[0].mxu0
    %v2051 = vpop.f32.mrb[0].mxu0
    %v2052 = vadd.f32 %v1801, %v2051
    %v2053 = vpop.f32.mrb[0].mxu0
    %2054 = vmatprep.mubr.bf16.mxu0 0
    %2055 = vmatmul.mubr.bf16.gmra.mrb[0].mxu0 %v1752
    %v2056 = vpop.f32.mrb[0].mxu0
    %v2057 = vadd.f32 %v1801, %v2056
    %v2058 = vpop.f32.mrb[0].mxu0
    %v2059 = vpop.f32.mrb[0].mxu0
    %v2060 = vadd.f32 %v1801, %v2059
    %v2061 = vpop.f32.mrb[0].mxu0
    %2062 = vmatprep.mubr.bf16.mxu0 0
    %2063 = vmatmul.mubr.bf16.gmra.mrb[0].mxu0 %v1753
    %v2064 = vpop.f32.mrb[0].mxu0
    %v2065 = vadd.f32 %v1801, %v2064
    %v2066 = vpop.f32.mrb[0].mxu0
    %v2067 = vpop.f32.mrb[0].mxu0
    %v2068 = vadd.f32 %v1801, %v2067
    %v2069 = vpop.f32.mrb[0].mxu0
    %2070 = vdwg.mxu0
    %2071 = vst [vmem:[#allocation3] sm:$0xff] %v1968
    %2072 = vst [vmem:[#allocation3 + $0x8] sm:$0xff] %v1970
    %2073 = vst [vmem:[#allocation3 + $0x10] sm:$0xff] %v2041
    %2074 = vst [vmem:[#allocation3 + $0x18] sm:$0xff] %v1972
    %2075 = vst [vmem:[#allocation3 + $0x20] sm:$0xff] %v1974
    %2076 = vst [vmem:[#allocation3 + $0x28] sm:$0xff] %v2044
    %2077 = vst [vmem:[#allocation3 + $0x30] sm:$0xff] %v1978
    %2078 = vst [vmem:[#allocation3 + $0x38] sm:$0xff] %v1980
    %2079 = vst [vmem:[#allocation3 + $0x40] sm:$0xff] %v2049
    %2080 = vst [vmem:[#allocation3 + $0x48] sm:$0xff] %v1982
    %2081 = vst [vmem:[#allocation3 + $0x50] sm:$0xff] %v1984
    %2082 = vst [vmem:[#allocation3 + $0x58] sm:$0xff] %v2052
    %2083 = vst [vmem:[#allocation3 + $0x60] sm:$0xff] %v1988
    %2084 = vst [vmem:[#allocation3 + $0x68] sm:$0xff] %v1990
    %2085 = vst [vmem:[#allocation3 + $0x70] sm:$0xff] %v2057
    %2086 = vst [vmem:[#allocation3 + $0x78] sm:$0xff] %v1992
    %2087 = vst [vmem:[#allocation3 + $0x80] sm:$0xff] %v1994
    %2088 = vst [vmem:[#allocation3 + $0x88] sm:$0xff] %v2060
    %2089 = vst [vmem:[#allocation3 + $0x90] sm:$0xff] %v1998
    %2090 = vst [vmem:[#allocation3 + $0x98] sm:$0xff] %v2000
    %2091 = vst [vmem:[#allocation3 + $0xa0] sm:$0xff] %v2065
    %2092 = vst [vmem:[#allocation3 + $0xa8] sm:$0xff] %v2002
    %2093 = vst [vmem:[#allocation3 + $0xb0] sm:$0xff] %v2004
    %2094 = vst [vmem:[#allocation3 + $0xb8] sm:$0xff] %v2068
    %s2095 = scalar_lea.vmem %s7, 8
    %v2096 = vld [vmem:[%s2095] sm:$0xff]
    %v2097 = vld [vmem:[#allocation3] sm:$0xff]
    %v2098 = vld [vmem:[#allocation3 + $0x8] sm:$0xff]
    %v2099 = vld [vmem:[#allocation3 + $0x10] sm:$0xff]
    %v2100 = vpack.c.bf16 %v2096, %v2096
    %v2133 = vunpack.c.l.b16 %v1702
    %v2134 = vunpack.c.h.b16 %v1702
    %v2135 = vunpack.c.l.b16 %v1703
    %v2136 = vunpack.c.l.b16 %v1704
    %v2137 = vunpack.c.h.b16 %v1704
    %v2138 = vunpack.c.l.b16 %v1705
    %v2139 = vunpack.c.l.b16 %v1706
    %v2140 = vunpack.c.h.b16 %v1706
    %v2141 = vunpack.c.l.b16 %v1707
    %v2142 = vunpack.c.l.b16 %v1708
    %v2143 = vunpack.c.h.b16 %v1708
    %v2144 = vunpack.c.l.b16 %v1709
    %v2145 = vunpack.c.l.b16 %v1710
    %v2146 = vunpack.c.h.b16 %v1710
    %v2147 = vunpack.c.l.b16 %v1711
    %v2148 = vunpack.c.l.b16 %v1712
    %v2149 = vunpack.c.h.b16 %v1712
    %v2150 = vunpack.c.l.b16 %v1713
    %v2151 = vunpack.c.l.b16 %v1714
    %v2152 = vunpack.c.h.b16 %v1714
    %v2153 = vunpack.c.l.b16 %v1715
    %v2154 = vunpack.c.l.b16 %v1716
    %v2155 = vunpack.c.h.b16 %v1716
    %v2156 = vunpack.c.l.b16 %v1717
    %v2157 = vunpack.c.l.b16 %v1718
    %v2158 = vunpack.c.h.b16 %v1718
    %v2159 = vunpack.c.l.b16 %v1719
    %v2160 = vunpack.c.l.b16 %v1720
    %v2161 = vunpack.c.h.b16 %v1720
    %v2162 = vunpack.c.l.b16 %v1721
    %v2163 = vunpack.c.l.b16 %v1722
    %v2164 = vunpack.c.h.b16 %v1722
    %v2165 = vunpack.c.l.b16 %v1723
    %v2166 = vunpack.c.l.b16 %v1724
    %v2167 = vunpack.c.h.b16 %v1724
    %v2168 = vunpack.c.l.b16 %v1725
    %v2169 = vunpack.c.l.b16 %v1726
    %v2170 = vunpack.c.h.b16 %v1726
    %v2171 = vunpack.c.l.b16 %v1727
    %v2172 = vunpack.c.l.b16 %v1728
    %v2173 = vunpack.c.h.b16 %v1728
    %v2174 = vunpack.c.l.b16 %v1729
    %v2175 = vunpack.c.l.b16 %v1730
    %v2176 = vunpack.c.h.b16 %v1730
    %v2177 = vunpack.c.l.b16 %v1731
    %v2178 = vunpack.c.l.b16 %v1732
    %v2179 = vunpack.c.h.b16 %v1732
    %v2180 = vunpack.c.l.b16 %v1733
    %v2181 = vpack.c.b16 %v2136, %v2133
    %v2182 = vpack.c.b16 %v2137, %v2134
    %v2183 = vpack.c.b16 %v2138, %v2135
    %v2184 = vpack.c.b16 %v2142, %v2139
    %v2185 = vpack.c.b16 %v2143, %v2140
    %v2186 = vpack.c.b16 %v2144, %v2141
    %v2187 = vpack.c.b16 %v2148, %v2145
    %v2188 = vpack.c.b16 %v2149, %v2146
    %v2189 = vpack.c.b16 %v2150, %v2147
    %v2190 = vpack.c.b16 %v2154, %v2151
    %v2191 = vpack.c.b16 %v2155, %v2152
    %v2192 = vpack.c.b16 %v2156, %v2153
    %v2193 = vpack.c.b16 %v2160, %v2157
    %v2194 = vpack.c.b16 %v2161, %v2158
    %v2195 = vpack.c.b16 %v2162, %v2159
    %v2196 = vpack.c.b16 %v2166, %v2163
    %v2197 = vpack.c.b16 %v2167, %v2164
    %v2198 = vpack.c.b16 %v2168, %v2165
    %v2199 = vpack.c.b16 %v2172, %v2169
    %v2200 = vpack.c.b16 %v2173, %v2170
    %v2201 = vpack.c.b16 %v2174, %v2171
    %v2202 = vpack.c.b16 %v2178, %v2175
    %v2203 = vpack.c.b16 %v2179, %v2176
    %v2204 = vpack.c.b16 %v2180, %v2177
    %2229 = vmatprep.subr.bf16.mxu0 %v2182
    %2230 = vmatpush1.bf16.msra.mxu0 %v2181
    %2231 = vmatprep.subr.bf16.mxu0 %v2185
    %2232 = vmatpush1.bf16.msra.mxu0 %v2184
    %2233 = vmatprep.subr.bf16.mxu0 %v2188
    %2234 = vmatpush1.bf16.msra.mxu0 %v2187
    %2235 = vmatprep.subr.bf16.mxu0 %v2191
    %2236 = vmatpush1.bf16.msra.mxu0 %v2190
    %2237 = vmatprep.subr.bf16.mxu0 %v2194
    %2238 = vmatpush1.bf16.msra.mxu0 %v2193
    %2239 = vmatprep.subr.bf16.mxu0 %v2197
    %2240 = vmatpush1.bf16.msra.mxu0 %v2196
    %2241 = vmatprep.subr.bf16.mxu0 %v2200
    %2242 = vmatpush1.bf16.msra.mxu0 %v2199
    %2243 = vmatprep.subr.bf16.mxu0 %v2203
    %2244 = vmatpush1.bf16.msra.mxu0 %v2202
    %2245 = vmatprep.subr.bf16.mxu0 0
    %2246 = vmatpush1.bf16.msra.mxu0 0
    %2247 = vmatprep.subr.bf16.mxu0 0
    %2248 = vmatpush1.bf16.msra.mxu0 0
    %2249 = vmatprep.subr.bf16.mxu0 0
    %2250 = vmatpush1.bf16.msra.mxu0 0
    %2251 = vmatprep.subr.bf16.mxu0 0
    %2252 = vmatpush1.bf16.msra.mxu0 0
    %2253 = vmatprep.subr.bf16.mxu0 0
    %2254 = vmatpush1.bf16.msra.mxu0 0
    %2255 = vmatprep.subr.bf16.mxu0 0
    %2256 = vmatpush1.bf16.msra.mxu0 0
    %2257 = vmatprep.subr.bf16.mxu0 0
    %2258 = vmatpush1.bf16.msra.mxu0 0
    %2259 = vmatprep.subr.bf16.mxu0 0
    %2260 = vmatpush1.bf16.msra.mxu0 0
    %2261 = vmatprep.mubr.bf16.mxu0 0
    %2262 = vmatmul.mubr.bf16.gmra.mrb[0].mxu0 %v2100
    %v2263 = vpop.f32.mrb[0].mxu0
    %v2264 = vadd.f32 0.0, %v2263
    %v2265 = vpop.f32.mrb[0].mxu0
    %v2266 = vadd.f32 0.0, %v2265
    %v2267 = vpop.f32.mrb[0].mxu0
    %v2268 = vpop.f32.mrb[0].mxu0
    %2269 = vdwg.mxu0
    %2270 = vmatprep.subr.bf16.mxu0 0
    %2271 = vmatpush1.bf16.msra.mxu0 %v2183
    %2272 = vmatprep.subr.bf16.mxu0 0
    %2273 = vmatpush1.bf16.msra.mxu0 %v2186
    %2274 = vmatprep.subr.bf16.mxu0 0
    %2275 = vmatpush1.bf16.msra.mxu0 %v2189
    %2276 = vmatprep.subr.bf16.mxu0 0
    %2277 = vmatpush1.bf16.msra.mxu0 %v2192
    %2278 = vmatprep.subr.bf16.mxu0 0
    %2279 = vmatpush1.bf16.msra.mxu0 %v2195
    %2280 = vmatprep.subr.bf16.mxu0 0
    %2281 = vmatpush1.bf16.msra.mxu0 %v2198
    %2282 = vmatprep.subr.bf16.mxu0 0
    %2283 = vmatpush1.bf16.msra.mxu0 %v2201
    %2284 = vmatprep.subr.bf16.mxu0 0
    %2285 = vmatpush1.bf16.msra.mxu0 %v2204
    %2286 = vmatprep.subr.bf16.mxu0 0
    %2287 = vmatpush1.bf16.msra.mxu0 0
    %2288 = vmatprep.subr.bf16.mxu0 0
    %2289 = vmatpush1.bf16.msra.mxu0 0
    %2290 = vmatprep.subr.bf16.mxu0 0
    %2291 = vmatpush1.bf16.msra.mxu0 0
    %2292 = vmatprep.subr.bf16.mxu0 0
    %2293 = vmatpush1.bf16.msra.mxu0 0
    %2294 = vmatprep.subr.bf16.mxu0 0
    %2295 = vmatpush1.bf16.msra.mxu0 0
    %2296 = vmatprep.subr.bf16.mxu0 0
    %2297 = vmatpush1.bf16.msra.mxu0 0
    %2298 = vmatprep.subr.bf16.mxu0 0
    %2299 = vmatpush1.bf16.msra.mxu0 0
    %2300 = vmatprep.subr.bf16.mxu0 0
    %2301 = vmatpush1.bf16.msra.mxu0 0
    %2302 = vmatprep.mubr.bf16.mxu0 0
    %2303 = vmatmul.mubr.bf16.gmra.mrb[0].mxu0 %v2100
    %v2304 = vpop.f32.mrb[0].mxu0
    %v2305 = vadd.f32 0.0, %v2304
    %v2306 = vpop.f32.mrb[0].mxu0
    %v2307 = vpop.f32.mrb[0].mxu0
    %v2308 = vpop.f32.mrb[0].mxu0
    %2309 = vdwg.mxu0
    %v2310 = vadd.f32 %v2097, %v2264
    %v2311 = vxor.u32 %v2310, 2147483648
    %v2312 = vmul.f32 %v2311, 1.442695
    %v2313 = vpow.pop %v2312
    %v2314 = vadd.f32 %v2313, 1.0
    %v2315 = vrcp.pop %v2314
    %v2316 = vmul.f32 1.0, %v2315
    %v2317 = vadd.f32 %v2098, %v2266
    %v2318 = vxor.u32 %v2317, 2147483648
    %v2319 = vmul.f32 %v2318, 1.442695
    %v2320 = vpow.pop %v2319
    %v2321 = vadd.f32 %v2320, 1.0
    %v2322 = vrcp.pop %v2321
    %v2323 = vmul.f32 1.0, %v2322
    %v2324 = vadd.f32 %v2305, %v1740
    %v2325 = vmul.f32 %v2316, %v2324
    %v2326 = vadd.f32 %v2099, %v2325
    %v2327 = vtanh.pop %v2326
    %v2328 = vsub.f32 1.0, %v2323
    %v2329 = vmul.f32 %v2328, %v2327
    %v2330 = vmul.f32 %v2323, %v2096
    %v2331 = vadd.f32 %v2329, %v2330
    %v2332 = vsel %vm899, %v2331, %v2096
    %2333 = vst [vmem:[#allocation2] sm:$0xff] %v2332
    %v2334 = vld [vmem:[#allocation3 + $0x18] sm:$0xff]
    %v2335 = vld [vmem:[#allocation3 + $0x20] sm:$0xff]
    %v2336 = vld [vmem:[#allocation3 + $0x28] sm:$0xff]
    %v2337 = vpack.c.bf16 %v2332, %v2332
    %2338 = vmatprep.subr.bf16.mxu0 %v2182
    %2339 = vmatpush1.bf16.msra.mxu0 %v2181
    %2340 = vmatprep.subr.bf16.mxu0 %v2185
    %2341 = vmatpush1.bf16.msra.mxu0 %v2184
    %2342 = vmatprep.subr.bf16.mxu0 %v2188
    %2343 = vmatpush1.bf16.msra.mxu0 %v2187
    %2344 = vmatprep.subr.bf16.mxu0 %v2191
    %2345 = vmatpush1.bf16.msra.mxu0 %v2190
    %2346 = vmatprep.subr.bf16.mxu0 %v2194
    %2347 = vmatpush1.bf16.msra.mxu0 %v2193
    %2348 = vmatprep.subr.bf16.mxu0 %v2197
    %2349 = vmatpush1.bf16.msra.mxu0 %v2196
    %2350 = vmatprep.subr.bf16.mxu0 %v2200
    %2351 = vmatpush1.bf16.msra.mxu0 %v2199
    %2352 = vmatprep.subr.bf16.mxu0 %v2203
    %2353 = vmatpush1.bf16.msra.mxu0 %v2202
    %2354 = vmatprep.subr.bf16.mxu0 0
    %2355 = vmatpush1.bf16.msra.mxu0 0
    %2356 = vmatprep.subr.bf16.mxu0 0
    %2357 = vmatpush1.bf16.msra.mxu0 0
    %2358 = vmatprep.subr.bf16.mxu0 0
    %2359 = vmatpush1.bf16.msra.mxu0 0
    %2360 = vmatprep.subr.bf16.mxu0 0
    %2361 = vmatpush1.bf16.msra.mxu0 0
    %2362 = vmatprep.subr.bf16.mxu0 0
    %2363 = vmatpush1.bf16.msra.mxu0 0
    %2364 = vmatprep.subr.bf16.mxu0 0
    %2365 = vmatpush1.bf16.msra.mxu0 0
    %2366 = vmatprep.subr.bf16.mxu0 0
    %2367 = vmatpush1.bf16.msra.mxu0 0
    %2368 = vmatprep.subr.bf16.mxu0 0
    %2369 = vmatpush1.bf16.msra.mxu0 0
    %2370 = vmatprep.mubr.bf16.mxu0 0
    %2371 = vmatmul.mubr.bf16.gmra.mrb[0].mxu0 %v2337
    %v2372 = vpop.f32.mrb[0].mxu0
    %v2373 = vadd.f32 0.0, %v2372
    %v2374 = vpop.f32.mrb[0].mxu0
    %v2375 = vadd.f32 0.0, %v2374
    %v2376 = vpop.f32.mrb[0].mxu0
    %v2377 = vpop.f32.mrb[0].mxu0
    %2378 = vdwg.mxu0
    %2379 = vmatprep.subr.bf16.mxu0 0
    %2380 = vmatpush1.bf16.msra.mxu0 %v2183
    %2381 = vmatprep.subr.bf16.mxu0 0
    %2382 = vmatpush1.bf16.msra.mxu0 %v2186
    %2383 = vmatprep.subr.bf16.mxu0 0
    %2384 = vmatpush1.bf16.msra.mxu0 %v2189
    %2385 = vmatprep.subr.bf16.mxu0 0
    %2386 = vmatpush1.bf16.msra.mxu0 %v2192
    %2387 = vmatprep.subr.bf16.mxu0 0
    %2388 = vmatpush1.bf16.msra.mxu0 %v2195
    %2389 = vmatprep.subr.bf16.mxu0 0
    %2390 = vmatpush1.bf16.msra.mxu0 %v2198
    %2391 = vmatprep.subr.bf16.mxu0 0
    %2392 = vmatpush1.bf16.msra.mxu0 %v2201
    %2393 = vmatprep.subr.bf16.mxu0 0
    %2394 = vmatpush1.bf16.msra.mxu0 %v2204
    %2395 = vmatprep.subr.bf16.mxu0 0
    %2396 = vmatpush1.bf16.msra.mxu0 0
    %2397 = vmatprep.subr.bf16.mxu0 0
    %2398 = vmatpush1.bf16.msra.mxu0 0
    %2399 = vmatprep.subr.bf16.mxu0 0
    %2400 = vmatpush1.bf16.msra.mxu0 0
    %2401 = vmatprep.subr.bf16.mxu0 0
    %2402 = vmatpush1.bf16.msra.mxu0 0
    %2403 = vmatprep.subr.bf16.mxu0 0
    %2404 = vmatpush1.bf16.msra.mxu0 0
    %2405 = vmatprep.subr.bf16.mxu0 0
    %2406 = vmatpush1.bf16.msra.mxu0 0
    %2407 = vmatprep.subr.bf16.mxu0 0
    %2408 = vmatpush1.bf16.msra.mxu0 0
    %2409 = vmatprep.subr.bf16.mxu0 0
    %2410 = vmatpush1.bf16.msra.mxu0 0
    %2411 = vmatprep.mubr.bf16.mxu0 0
    %2412 = vmatmul.mubr.bf16.gmra.mrb[0].mxu0 %v2337
    %v2413 = vpop.f32.mrb[0].mxu0
    %v2414 = vadd.f32 0.0, %v2413
    %v2415 = vpop.f32.mrb[0].mxu0
    %v2416 = vpop.f32.mrb[0].mxu0
    %v2417 = vpop.f32.mrb[0].mxu0
    %2418 = vdwg.mxu0
    %v2419 = vadd.f32 %v2334, %v2373
    %v2420 = vxor.u32 %v2419, 2147483648
    %v2421 = vmul.f32 %v2420, 1.442695
    %v2422 = vpow.pop %v2421
    %v2423 = vadd.f32 %v2422, 1.0
    %v2424 = vrcp.pop %v2423
    %v2425 = vmul.f32 1.0, %v2424
    %v2426 = vadd.f32 %v2335, %v2375
    %v2427 = vxor.u32 %v2426, 2147483648
    %v2428 = vmul.f32 %v2427, 1.442695
    %v2429 = vpow.pop %v2428
    %v2430 = vadd.f32 %v2429, 1.0
    %v2431 = vrcp.pop %v2430
    %v2432 = vmul.f32 1.0, %v2431
    %v2433 = vadd.f32 %v2414, %v1740
    %v2434 = vmul.f32 %v2425, %v2433
    %v2435 = vadd.f32 %v2336, %v2434
    %v2436 = vtanh.pop %v2435
    %v2437 = vsub.f32 1.0, %v2432
    %v2438 = vmul.f32 %v2437, %v2436
    %v2439 = vmul.f32 %v2432, %v2332
    %v2440 = vadd.f32 %v2438, %v2439
    %v2441 = vsel %vm1013, %v2440, %v2332
    %2442 = vst [vmem:[#allocation2 + $0x8] sm:$0xff] %v2441
    %v2443 = vld [vmem:[#allocation3 + $0x30] sm:$0xff]
    %v2444 = vld [vmem:[#allocation3 + $0x38] sm:$0xff]
    %v2445 = vld [vmem:[#allocation3 + $0x40] sm:$0xff]
    %v2446 = vpack.c.bf16 %v2441, %v2441
    %2447 = vmatprep.subr.bf16.mxu0 %v2182
    %2448 = vmatpush1.bf16.msra.mxu0 %v2181
    %2449 = vmatprep.subr.bf16.mxu0 %v2185
    %2450 = vmatpush1.bf16.msra.mxu0 %v2184
    %2451 = vmatprep.subr.bf16.mxu0 %v2188
    %2452 = vmatpush1.bf16.msra.mxu0 %v2187
    %2453 = vmatprep.subr.bf16.mxu0 %v2191
    %2454 = vmatpush1.bf16.msra.mxu0 %v2190
    %2455 = vmatprep.subr.bf16.mxu0 %v2194
    %2456 = vmatpush1.bf16.msra.mxu0 %v2193
    %2457 = vmatprep.subr.bf16.mxu0 %v2197
    %2458 = vmatpush1.bf16.msra.mxu0 %v2196
    %2459 = vmatprep.subr.bf16.mxu0 %v2200
    %2460 = vmatpush1.bf16.msra.mxu0 %v2199
    %2461 = vmatprep.subr.bf16.mxu0 %v2203
    %2462 = vmatpush1.bf16.msra.mxu0 %v2202
    %2463 = vmatprep.subr.bf16.mxu0 0
    %2464 = vmatpush1.bf16.msra.mxu0 0
    %2465 = vmatprep.subr.bf16.mxu0 0
    %2466 = vmatpush1.bf16.msra.mxu0 0
    %2467 = vmatprep.subr.bf16.mxu0 0
    %2468 = vmatpush1.bf16.msra.mxu0 0
    %2469 = vmatprep.subr.bf16.mxu0 0
    %2470 = vmatpush1.bf16.msra.mxu0 0
    %2471 = vmatprep.subr.bf16.mxu0 0
    %2472 = vmatpush1.bf16.msra.mxu0 0
    %2473 = vmatprep.subr.bf16.mxu0 0
    %2474 = vmatpush1.bf16.msra.mxu0 0
    %2475 = vmatprep.subr.bf16.mxu0 0
    %2476 = vmatpush1.bf16.msra.mxu0 0
    %2477 = vmatprep.subr.bf16.mxu0 0
    %2478 = vmatpush1.bf16.msra.mxu0 0
    %2479 = vmatprep.mubr.bf16.mxu0 0
    %2480 = vmatmul.mubr.bf16.gmra.mrb[0].mxu0 %v2446
    %v2481 = vpop.f32.mrb[0].mxu0
    %v2482 = vadd.f32 0.0, %v2481
    %v2483 = vpop.f32.mrb[0].mxu0
    %v2484 = vadd.f32 0.0, %v2483
    %v2485 = vpop.f32.mrb[0].mxu0
    %v2486 = vpop.f32.mrb[0].mxu0
    %2487 = vdwg.mxu0
    %2488 = vmatprep.subr.bf16.mxu0 0
    %2489 = vmatpush1.bf16.msra.mxu0 %v2183
    %2490 = vmatprep.subr.bf16.mxu0 0
    %2491 = vmatpush1.bf16.msra.mxu0 %v2186
    %2492 = vmatprep.subr.bf16.mxu0 0
    %2493 = vmatpush1.bf16.msra.mxu0 %v2189
    %2494 = vmatprep.subr.bf16.mxu0 0
    %2495 = vmatpush1.bf16.msra.mxu0 %v2192
    %2496 = vmatprep.subr.bf16.mxu0 0
    %2497 = vmatpush1.bf16.msra.mxu0 %v2195
    %2498 = vmatprep.subr.bf16.mxu0 0
    %2499 = vmatpush1.bf16.msra.mxu0 %v2198
    %2500 = vmatprep.subr.bf16.mxu0 0
    %2501 = vmatpush1.bf16.msra.mxu0 %v2201
    %2502 = vmatprep.subr.bf16.mxu0 0
    %2503 = vmatpush1.bf16.msra.mxu0 %v2204
    %2504 = vmatprep.subr.bf16.mxu0 0
    %2505 = vmatpush1.bf16.msra.mxu0 0
    %2506 = vmatprep.subr.bf16.mxu0 0
    %2507 = vmatpush1.bf16.msra.mxu0 0
    %2508 = vmatprep.subr.bf16.mxu0 0
    %2509 = vmatpush1.bf16.msra.mxu0 0
    %2510 = vmatprep.subr.bf16.mxu0 0
    %2511 = vmatpush1.bf16.msra.mxu0 0
    %2512 = vmatprep.subr.bf16.mxu0 0
    %2513 = vmatpush1.bf16.msra.mxu0 0
    %2514 = vmatprep.subr.bf16.mxu0 0
    %2515 = vmatpush1.bf16.msra.mxu0 0
    %2516 = vmatprep.subr.bf16.mxu0 0
    %2517 = vmatpush1.bf16.msra.mxu0 0
    %2518 = vmatprep.subr.bf16.mxu0 0
    %2519 = vmatpush1.bf16.msra.mxu0 0
    %2520 = vmatprep.mubr.bf16.mxu0 0
    %2521 = vmatmul.mubr.bf16.gmra.mrb[0].mxu0 %v2446
    %v2522 = vpop.f32.mrb[0].mxu0
    %v2523 = vadd.f32 0.0, %v2522
    %v2524 = vpop.f32.mrb[0].mxu0
    %v2525 = vpop.f32.mrb[0].mxu0
    %v2526 = vpop.f32.mrb[0].mxu0
    %2527 = vdwg.mxu0
    %v2528 = vadd.f32 %v2443, %v2482
    %v2529 = vxor.u32 %v2528, 2147483648
    %v2530 = vmul.f32 %v2529, 1.442695
    %v2531 = vpow.pop %v2530
    %v2532 = vadd.f32 %v2531, 1.0
    %v2533 = vrcp.pop %v2532
    %v2534 = vmul.f32 1.0, %v2533
    %v2535 = vadd.f32 %v2444, %v2484
    %v2536 = vxor.u32 %v2535, 2147483648
    %v2537 = vmul.f32 %v2536, 1.442695
    %v2538 = vpow.pop %v2537
    %v2539 = vadd.f32 %v2538, 1.0
    %v2540 = vrcp.pop %v2539
    %v2541 = vmul.f32 1.0, %v2540
    %v2542 = vadd.f32 %v2523, %v1740
    %v2543 = vmul.f32 %v2534, %v2542
    %v2544 = vadd.f32 %v2445, %v2543
    %v2545 = vtanh.pop %v2544
    %v2546 = vsub.f32 1.0, %v2541
    %v2547 = vmul.f32 %v2546, %v2545
    %v2548 = vmul.f32 %v2541, %v2441
    %v2549 = vadd.f32 %v2547, %v2548
    %v2550 = vsel %vm1127, %v2549, %v2441
    %2551 = vst [vmem:[#allocation2 + $0x10] sm:$0xff] %v2550
    %v2552 = vld [vmem:[#allocation3 + $0x48] sm:$0xff]
    %v2553 = vld [vmem:[#allocation3 + $0x50] sm:$0xff]
    %v2554 = vld [vmem:[#allocation3 + $0x58] sm:$0xff]
    %v2555 = vpack.c.bf16 %v2550, %v2550
    %2556 = vmatprep.subr.bf16.mxu0 %v2182
    %2557 = vmatpush1.bf16.msra.mxu0 %v2181
    %2558 = vmatprep.subr.bf16.mxu0 %v2185
    %2559 = vmatpush1.bf16.msra.mxu0 %v2184
    %2560 = vmatprep.subr.bf16.mxu0 %v2188
    %2561 = vmatpush1.bf16.msra.mxu0 %v2187
    %2562 = vmatprep.subr.bf16.mxu0 %v2191
    %2563 = vmatpush1.bf16.msra.mxu0 %v2190
    %2564 = vmatprep.subr.bf16.mxu0 %v2194
    %2565 = vmatpush1.bf16.msra.mxu0 %v2193
    %2566 = vmatprep.subr.bf16.mxu0 %v2197
    %2567 = vmatpush1.bf16.msra.mxu0 %v2196
    %2568 = vmatprep.subr.bf16.mxu0 %v2200
    %2569 = vmatpush1.bf16.msra.mxu0 %v2199
    %2570 = vmatprep.subr.bf16.mxu0 %v2203
    %2571 = vmatpush1.bf16.msra.mxu0 %v2202
    %2572 = vmatprep.subr.bf16.mxu0 0
    %2573 = vmatpush1.bf16.msra.mxu0 0
    %2574 = vmatprep.subr.bf16.mxu0 0
    %2575 = vmatpush1.bf16.msra.mxu0 0
    %2576 = vmatprep.subr.bf16.mxu0 0
    %2577 = vmatpush1.bf16.msra.mxu0 0
    %2578 = vmatprep.subr.bf16.mxu0 0
    %2579 = vmatpush1.bf16.msra.mxu0 0
    %2580 = vmatprep.subr.bf16.mxu0 0
    %2581 = vmatpush1.bf16.msra.mxu0 0
    %2582 = vmatprep.subr.bf16.mxu0 0
    %2583 = vmatpush1.bf16.msra.mxu0 0
    %2584 = vmatprep.subr.bf16.mxu0 0
    %2585 = vmatpush1.bf16.msra.mxu0 0
    %2586 = vmatprep.subr.bf16.mxu0 0
    %2587 = vmatpush1.bf16.msra.mxu0 0
    %2588 = vmatprep.mubr.bf16.mxu0 0
    %2589 = vmatmul.mubr.bf16.gmra.mrb[0].mxu0 %v2555
    %v2590 = vpop.f32.mrb[0].mxu0
    %v2591 = vadd.f32 0.0, %v2590
    %v2592 = vpop.f32.mrb[0].mxu0
    %v2593 = vadd.f32 0.0, %v2592
    %v2594 = vpop.f32.mrb[0].mxu0
    %v2595 = vpop.f32.mrb[0].mxu0
    %2596 = vdwg.mxu0
    %2597 = vmatprep.subr.bf16.mxu0 0
    %2598 = vmatpush1.bf16.msra.mxu0 %v2183
    %2599 = vmatprep.subr.bf16.mxu0 0
    %2600 = vmatpush1.bf16.msra.mxu0 %v2186
    %2601 = vmatprep.subr.bf16.mxu0 0
    %2602 = vmatpush1.bf16.msra.mxu0 %v2189
    %2603 = vmatprep.subr.bf16.mxu0 0
    %2604 = vmatpush1.bf16.msra.mxu0 %v2192
    %2605 = vmatprep.subr.bf16.mxu0 0
    %2606 = vmatpush1.bf16.msra.mxu0 %v2195
    %2607 = vmatprep.subr.bf16.mxu0 0
    %2608 = vmatpush1.bf16.msra.mxu0 %v2198
    %2609 = vmatprep.subr.bf16.mxu0 0
    %2610 = vmatpush1.bf16.msra.mxu0 %v2201
    %2611 = vmatprep.subr.bf16.mxu0 0
    %2612 = vmatpush1.bf16.msra.mxu0 %v2204
    %2613 = vmatprep.subr.bf16.mxu0 0
    %2614 = vmatpush1.bf16.msra.mxu0 0
    %2615 = vmatprep.subr.bf16.mxu0 0
    %2616 = vmatpush1.bf16.msra.mxu0 0
    %2617 = vmatprep.subr.bf16.mxu0 0
    %2618 = vmatpush1.bf16.msra.mxu0 0
    %2619 = vmatprep.subr.bf16.mxu0 0
    %2620 = vmatpush1.bf16.msra.mxu0 0
    %2621 = vmatprep.subr.bf16.mxu0 0
    %2622 = vmatpush1.bf16.msra.mxu0 0
    %2623 = vmatprep.subr.bf16.mxu0 0
    %2624 = vmatpush1.bf16.msra.mxu0 0
    %2625 = vmatprep.subr.bf16.mxu0 0
    %2626 = vmatpush1.bf16.msra.mxu0 0
    %2627 = vmatprep.subr.bf16.mxu0 0
    %2628 = vmatpush1.bf16.msra.mxu0 0
    %2629 = vmatprep.mubr.bf16.mxu0 0
    %2630 = vmatmul.mubr.bf16.gmra.mrb[0].mxu0 %v2555
    %v2631 = vpop.f32.mrb[0].mxu0
    %v2632 = vadd.f32 0.0, %v2631
    %v2633 = vpop.f32.mrb[0].mxu0
    %v2634 = vpop.f32.mrb[0].mxu0
    %v2635 = vpop.f32.mrb[0].mxu0
    %2636 = vdwg.mxu0
    %v2637 = vadd.f32 %v2552, %v2591
    %v2638 = vxor.u32 %v2637, 2147483648
    %v2639 = vmul.f32 %v2638, 1.442695
    %v2640 = vpow.pop %v2639
    %v2641 = vadd.f32 %v2640, 1.0
    %v2642 = vrcp.pop %v2641
    %v2643 = vmul.f32 1.0, %v2642
    %v2644 = vadd.f32 %v2553, %v2593
    %v2645 = vxor.u32 %v2644, 2147483648
    %v2646 = vmul.f32 %v2645, 1.442695
    %v2647 = vpow.pop %v2646
    %v2648 = vadd.f32 %v2647, 1.0
    %v2649 = vrcp.pop %v2648
    %v2650 = vmul.f32 1.0, %v2649
    %v2651 = vadd.f32 %v2632, %v1740
    %v2652 = vmul.f32 %v2643, %v2651
    %v2653 = vadd.f32 %v2554, %v2652
    %v2654 = vtanh.pop %v2653
    %v2655 = vsub.f32 1.0, %v2650
    %v2656 = vmul.f32 %v2655, %v2654
    %v2657 = vmul.f32 %v2650, %v2550
    %v2658 = vadd.f32 %v2656, %v2657
    %v2659 = vsel %vm1241, %v2658, %v2550
    %2660 = vst [vmem:[#allocation2 + $0x18] sm:$0xff] %v2659
    %v2661 = vld [vmem:[#allocation3 + $0x60] sm:$0xff]
    %v2662 = vld [vmem:[#allocation3 + $0x68] sm:$0xff]
    %v2663 = vld [vmem:[#allocation3 + $0x70] sm:$0xff]
    %v2664 = vpack.c.bf16 %v2659, %v2659
    %2665 = vmatprep.subr.bf16.mxu0 %v2182
    %2666 = vmatpush1.bf16.msra.mxu0 %v2181
    %2667 = vmatprep.subr.bf16.mxu0 %v2185
    %2668 = vmatpush1.bf16.msra.mxu0 %v2184
    %2669 = vmatprep.subr.bf16.mxu0 %v2188
    %2670 = vmatpush1.bf16.msra.mxu0 %v2187
    %2671 = vmatprep.subr.bf16.mxu0 %v2191
    %2672 = vmatpush1.bf16.msra.mxu0 %v2190
    %2673 = vmatprep.subr.bf16.mxu0 %v2194
    %2674 = vmatpush1.bf16.msra.mxu0 %v2193
    %2675 = vmatprep.subr.bf16.mxu0 %v2197
    %2676 = vmatpush1.bf16.msra.mxu0 %v2196
    %2677 = vmatprep.subr.bf16.mxu0 %v2200
    %2678 = vmatpush1.bf16.msra.mxu0 %v2199
    %2679 = vmatprep.subr.bf16.mxu0 %v2203
    %2680 = vmatpush1.bf16.msra.mxu0 %v2202
    %2681 = vmatprep.subr.bf16.mxu0 0
    %2682 = vmatpush1.bf16.msra.mxu0 0
    %2683 = vmatprep.subr.bf16.mxu0 0
    %2684 = vmatpush1.bf16.msra.mxu0 0
    %2685 = vmatprep.subr.bf16.mxu0 0
    %2686 = vmatpush1.bf16.msra.mxu0 0
    %2687 = vmatprep.subr.bf16.mxu0 0
    %2688 = vmatpush1.bf16.msra.mxu0 0
    %2689 = vmatprep.subr.bf16.mxu0 0
    %2690 = vmatpush1.bf16.msra.mxu0 0
    %2691 = vmatprep.subr.bf16.mxu0 0
    %2692 = vmatpush1.bf16.msra.mxu0 0
    %2693 = vmatprep.subr.bf16.mxu0 0
    %2694 = vmatpush1.bf16.msra.mxu0 0
    %2695 = vmatprep.subr.bf16.mxu0 0
    %2696 = vmatpush1.bf16.msra.mxu0 0
    %2697 = vmatprep.mubr.bf16.mxu0 0
    %2698 = vmatmul.mubr.bf16.gmra.mrb[0].mxu0 %v2664
    %v2699 = vpop.f32.mrb[0].mxu0
    %v2700 = vadd.f32 0.0, %v2699
    %v2701 = vpop.f32.mrb[0].mxu0
    %v2702 = vadd.f32 0.0, %v2701
    %v2703 = vpop.f32.mrb[0].mxu0
    %v2704 = vpop.f32.mrb[0].mxu0
    %2705 = vdwg.mxu0
    %2706 = vmatprep.subr.bf16.mxu0 0
    %2707 = vmatpush1.bf16.msra.mxu0 %v2183
    %2708 = vmatprep.subr.bf16.mxu0 0
    %2709 = vmatpush1.bf16.msra.mxu0 %v2186
    %2710 = vmatprep.subr.bf16.mxu0 0
    %2711 = vmatpush1.bf16.msra.mxu0 %v2189
    %2712 = vmatprep.subr.bf16.mxu0 0
    %2713 = vmatpush1.bf16.msra.mxu0 %v2192
    %2714 = vmatprep.subr.bf16.mxu0 0
    %2715 = vmatpush1.bf16.msra.mxu0 %v2195
    %2716 = vmatprep.subr.bf16.mxu0 0
    %2717 = vmatpush1.bf16.msra.mxu0 %v2198
    %2718 = vmatprep.subr.bf16.mxu0 0
    %2719 = vmatpush1.bf16.msra.mxu0 %v2201
    %2720 = vmatprep.subr.bf16.mxu0 0
    %2721 = vmatpush1.bf16.msra.mxu0 %v2204
    %2722 = vmatprep.subr.bf16.mxu0 0
    %2723 = vmatpush1.bf16.msra.mxu0 0
    %2724 = vmatprep.subr.bf16.mxu0 0
    %2725 = vmatpush1.bf16.msra.mxu0 0
    %2726 = vmatprep.subr.bf16.mxu0 0
    %2727 = vmatpush1.bf16.msra.mxu0 0
    %2728 = vmatprep.subr.bf16.mxu0 0
    %2729 = vmatpush1.bf16.msra.mxu0 0
    %2730 = vmatprep.subr.bf16.mxu0 0
    %2731 = vmatpush1.bf16.msra.mxu0 0
    %2732 = vmatprep.subr.bf16.mxu0 0
    %2733 = vmatpush1.bf16.msra.mxu0 0
    %2734 = vmatprep.subr.bf16.mxu0 0
    %2735 = vmatpush1.bf16.msra.mxu0 0
    %2736 = vmatprep.subr.bf16.mxu0 0
    %2737 = vmatpush1.bf16.msra.mxu0 0
    %2738 = vmatprep.mubr.bf16.mxu0 0
    %2739 = vmatmul.mubr.bf16.gmra.mrb[0].mxu0 %v2664
    %v2740 = vpop.f32.mrb[0].mxu0
    %v2741 = vadd.f32 0.0, %v2740
    %v2742 = vpop.f32.mrb[0].mxu0
    %v2743 = vpop.f32.mrb[0].mxu0
    %v2744 = vpop.f32.mrb[0].mxu0
    %2745 = vdwg.mxu0
    %v2746 = vadd.f32 %v2661, %v2700
    %v2747 = vxor.u32 %v2746, 2147483648
    %v2748 = vmul.f32 %v2747, 1.442695
    %v2749 = vpow.pop %v2748
    %v2750 = vadd.f32 %v2749, 1.0
    %v2751 = vrcp.pop %v2750
    %v2752 = vmul.f32 1.0, %v2751
    %v2753 = vadd.f32 %v2662, %v2702
    %v2754 = vxor.u32 %v2753, 2147483648
    %v2755 = vmul.f32 %v2754, 1.442695
    %v2756 = vpow.pop %v2755
    %v2757 = vadd.f32 %v2756, 1.0
    %v2758 = vrcp.pop %v2757
    %v2759 = vmul.f32 1.0, %v2758
    %v2760 = vadd.f32 %v2741, %v1740
    %v2761 = vmul.f32 %v2752, %v2760
    %v2762 = vadd.f32 %v2663, %v2761
    %v2763 = vtanh.pop %v2762
    %v2764 = vsub.f32 1.0, %v2759
    %v2765 = vmul.f32 %v2764, %v2763
    %v2766 = vmul.f32 %v2759, %v2659
    %v2767 = vadd.f32 %v2765, %v2766
    %v2768 = vsel %vm1355, %v2767, %v2659
    %2769 = vst [vmem:[#allocation2 + $0x20] sm:$0xff] %v2768
    %v2770 = vld [vmem:[#allocation3 + $0x78] sm:$0xff]
    %v2771 = vld [vmem:[#allocation3 + $0x80] sm:$0xff]
    %v2772 = vld [vmem:[#allocation3 + $0x88] sm:$0xff]
    %v2773 = vpack.c.bf16 %v2768, %v2768
    %2774 = vmatprep.subr.bf16.mxu0 %v2182
    %2775 = vmatpush1.bf16.msra.mxu0 %v2181
    %2776 = vmatprep.subr.bf16.mxu0 %v2185
    %2777 = vmatpush1.bf16.msra.mxu0 %v2184
    %2778 = vmatprep.subr.bf16.mxu0 %v2188
    %2779 = vmatpush1.bf16.msra.mxu0 %v2187
    %2780 = vmatprep.subr.bf16.mxu0 %v2191
    %2781 = vmatpush1.bf16.msra.mxu0 %v2190
    %2782 = vmatprep.subr.bf16.mxu0 %v2194
    %2783 = vmatpush1.bf16.msra.mxu0 %v2193
    %2784 = vmatprep.subr.bf16.mxu0 %v2197
    %2785 = vmatpush1.bf16.msra.mxu0 %v2196
    %2786 = vmatprep.subr.bf16.mxu0 %v2200
    %2787 = vmatpush1.bf16.msra.mxu0 %v2199
    %2788 = vmatprep.subr.bf16.mxu0 %v2203
    %2789 = vmatpush1.bf16.msra.mxu0 %v2202
    %2790 = vmatprep.subr.bf16.mxu0 0
    %2791 = vmatpush1.bf16.msra.mxu0 0
    %2792 = vmatprep.subr.bf16.mxu0 0
    %2793 = vmatpush1.bf16.msra.mxu0 0
    %2794 = vmatprep.subr.bf16.mxu0 0
    %2795 = vmatpush1.bf16.msra.mxu0 0
    %2796 = vmatprep.subr.bf16.mxu0 0
    %2797 = vmatpush1.bf16.msra.mxu0 0
    %2798 = vmatprep.subr.bf16.mxu0 0
    %2799 = vmatpush1.bf16.msra.mxu0 0
    %2800 = vmatprep.subr.bf16.mxu0 0
    %2801 = vmatpush1.bf16.msra.mxu0 0
    %2802 = vmatprep.subr.bf16.mxu0 0
    %2803 = vmatpush1.bf16.msra.mxu0 0
    %2804 = vmatprep.subr.bf16.mxu0 0
    %2805 = vmatpush1.bf16.msra.mxu0 0
    %2806 = vmatprep.mubr.bf16.mxu0 0
    %2807 = vmatmul.mubr.bf16.gmra.mrb[0].mxu0 %v2773
    %v2808 = vpop.f32.mrb[0].mxu0
    %v2809 = vadd.f32 0.0, %v2808
    %v2810 = vpop.f32.mrb[0].mxu0
    %v2811 = vadd.f32 0.0, %v2810
    %v2812 = vpop.f32.mrb[0].mxu0
    %v2813 = vpop.f32.mrb[0].mxu0
    %2814 = vdwg.mxu0
    %2815 = vmatprep.subr.bf16.mxu0 0
    %2816 = vmatpush1.bf16.msra.mxu0 %v2183
    %2817 = vmatprep.subr.bf16.mxu0 0
    %2818 = vmatpush1.bf16.msra.mxu0 %v2186
    %2819 = vmatprep.subr.bf16.mxu0 0
    %2820 = vmatpush1.bf16.msra.mxu0 %v2189
    %2821 = vmatprep.subr.bf16.mxu0 0
    %2822 = vmatpush1.bf16.msra.mxu0 %v2192
    %2823 = vmatprep.subr.bf16.mxu0 0
    %2824 = vmatpush1.bf16.msra.mxu0 %v2195
    %2825 = vmatprep.subr.bf16.mxu0 0
    %2826 = vmatpush1.bf16.msra.mxu0 %v2198
    %2827 = vmatprep.subr.bf16.mxu0 0
    %2828 = vmatpush1.bf16.msra.mxu0 %v2201
    %2829 = vmatprep.subr.bf16.mxu0 0
    %2830 = vmatpush1.bf16.msra.mxu0 %v2204
    %2831 = vmatprep.subr.bf16.mxu0 0
    %2832 = vmatpush1.bf16.msra.mxu0 0
    %2833 = vmatprep.subr.bf16.mxu0 0
    %2834 = vmatpush1.bf16.msra.mxu0 0
    %2835 = vmatprep.subr.bf16.mxu0 0
    %2836 = vmatpush1.bf16.msra.mxu0 0
    %2837 = vmatprep.subr.bf16.mxu0 0
    %2838 = vmatpush1.bf16.msra.mxu0 0
    %2839 = vmatprep.subr.bf16.mxu0 0
    %2840 = vmatpush1.bf16.msra.mxu0 0
    %2841 = vmatprep.subr.bf16.mxu0 0
    %2842 = vmatpush1.bf16.msra.mxu0 0
    %2843 = vmatprep.subr.bf16.mxu0 0
    %2844 = vmatpush1.bf16.msra.mxu0 0
    %2845 = vmatprep.subr.bf16.mxu0 0
    %2846 = vmatpush1.bf16.msra.mxu0 0
    %2847 = vmatprep.mubr.bf16.mxu0 0
    %2848 = vmatmul.mubr.bf16.gmra.mrb[0].mxu0 %v2773
    %v2849 = vpop.f32.mrb[0].mxu0
    %v2850 = vadd.f32 0.0, %v2849
    %v2851 = vpop.f32.mrb[0].mxu0
    %v2852 = vpop.f32.mrb[0].mxu0
    %v2853 = vpop.f32.mrb[0].mxu0
    %2854 = vdwg.mxu0
    %v2855 = vadd.f32 %v2770, %v2809
    %v2856 = vxor.u32 %v2855, 2147483648
    %v2857 = vmul.f32 %v2856, 1.442695
    %v2858 = vpow.pop %v2857
    %v2859 = vadd.f32 %v2858, 1.0
    %v2860 = vrcp.pop %v2859
    %v2861 = vmul.f32 1.0, %v2860
    %v2862 = vadd.f32 %v2771, %v2811
    %v2863 = vxor.u32 %v2862, 2147483648
    %v2864 = vmul.f32 %v2863, 1.442695
    %v2865 = vpow.pop %v2864
    %v2866 = vadd.f32 %v2865, 1.0
    %v2867 = vrcp.pop %v2866
    %v2868 = vmul.f32 1.0, %v2867
    %v2869 = vadd.f32 %v2850, %v1740
    %v2870 = vmul.f32 %v2861, %v2869
    %v2871 = vadd.f32 %v2772, %v2870
    %v2872 = vtanh.pop %v2871
    %v2873 = vsub.f32 1.0, %v2868
    %v2874 = vmul.f32 %v2873, %v2872
    %v2875 = vmul.f32 %v2868, %v2768
    %v2876 = vadd.f32 %v2874, %v2875
    %v2877 = vsel %vm1469, %v2876, %v2768
    %2878 = vst [vmem:[#allocation2 + $0x28] sm:$0xff] %v2877
    %v2879 = vld [vmem:[#allocation3 + $0x90] sm:$0xff]
    %v2880 = vld [vmem:[#allocation3 + $0x98] sm:$0xff]
    %v2881 = vld [vmem:[#allocation3 + $0xa0] sm:$0xff]
    %v2882 = vpack.c.bf16 %v2877, %v2877
    %2883 = vmatprep.subr.bf16.mxu0 %v2182
    %2884 = vmatpush1.bf16.msra.mxu0 %v2181
    %2885 = vmatprep.subr.bf16.mxu0 %v2185
    %2886 = vmatpush1.bf16.msra.mxu0 %v2184
    %2887 = vmatprep.subr.bf16.mxu0 %v2188
    %2888 = vmatpush1.bf16.msra.mxu0 %v2187
    %2889 = vmatprep.subr.bf16.mxu0 %v2191
    %2890 = vmatpush1.bf16.msra.mxu0 %v2190
    %2891 = vmatprep.subr.bf16.mxu0 %v2194
    %2892 = vmatpush1.bf16.msra.mxu0 %v2193
    %2893 = vmatprep.subr.bf16.mxu0 %v2197
    %2894 = vmatpush1.bf16.msra.mxu0 %v2196
    %2895 = vmatprep.subr.bf16.mxu0 %v2200
    %2896 = vmatpush1.bf16.msra.mxu0 %v2199
    %2897 = vmatprep.subr.bf16.mxu0 %v2203
    %2898 = vmatpush1.bf16.msra.mxu0 %v2202
    %2899 = vmatprep.subr.bf16.mxu0 0
    %2900 = vmatpush1.bf16.msra.mxu0 0
    %2901 = vmatprep.subr.bf16.mxu0 0
    %2902 = vmatpush1.bf16.msra.mxu0 0
    %2903 = vmatprep.subr.bf16.mxu0 0
    %2904 = vmatpush1.bf16.msra.mxu0 0
    %2905 = vmatprep.subr.bf16.mxu0 0
    %2906 = vmatpush1.bf16.msra.mxu0 0
    %2907 = vmatprep.subr.bf16.mxu0 0
    %2908 = vmatpush1.bf16.msra.mxu0 0
    %2909 = vmatprep.subr.bf16.mxu0 0
    %2910 = vmatpush1.bf16.msra.mxu0 0
    %2911 = vmatprep.subr.bf16.mxu0 0
    %2912 = vmatpush1.bf16.msra.mxu0 0
    %2913 = vmatprep.subr.bf16.mxu0 0
    %2914 = vmatpush1.bf16.msra.mxu0 0
    %2915 = vmatprep.mubr.bf16.mxu0 0
    %2916 = vmatmul.mubr.bf16.gmra.mrb[0].mxu0 %v2882
    %v2917 = vpop.f32.mrb[0].mxu0
    %v2918 = vadd.f32 0.0, %v2917
    %v2919 = vpop.f32.mrb[0].mxu0
    %v2920 = vadd.f32 0.0, %v2919
    %v2921 = vpop.f32.mrb[0].mxu0
    %v2922 = vpop.f32.mrb[0].mxu0
    %2923 = vdwg.mxu0
    %2924 = vmatprep.subr.bf16.mxu0 0
    %2925 = vmatpush1.bf16.msra.mxu0 %v2183
    %2926 = vmatprep.subr.bf16.mxu0 0
    %2927 = vmatpush1.bf16.msra.mxu0 %v2186
    %2928 = vmatprep.subr.bf16.mxu0 0
    %2929 = vmatpush1.bf16.msra.mxu0 %v2189
    %2930 = vmatprep.subr.bf16.mxu0 0
    %2931 = vmatpush1.bf16.msra.mxu0 %v2192
    %2932 = vmatprep.subr.bf16.mxu0 0
    %2933 = vmatpush1.bf16.msra.mxu0 %v2195
    %2934 = vmatprep.subr.bf16.mxu0 0
    %2935 = vmatpush1.bf16.msra.mxu0 %v2198
    %2936 = vmatprep.subr.bf16.mxu0 0
    %2937 = vmatpush1.bf16.msra.mxu0 %v2201
    %2938 = vmatprep.subr.bf16.mxu0 0
    %2939 = vmatpush1.bf16.msra.mxu0 %v2204
    %2940 = vmatprep.subr.bf16.mxu0 0
    %2941 = vmatpush1.bf16.msra.mxu0 0
    %2942 = vmatprep.subr.bf16.mxu0 0
    %2943 = vmatpush1.bf16.msra.mxu0 0
    %2944 = vmatprep.subr.bf16.mxu0 0
    %2945 = vmatpush1.bf16.msra.mxu0 0
    %2946 = vmatprep.subr.bf16.mxu0 0
    %2947 = vmatpush1.bf16.msra.mxu0 0
    %2948 = vmatprep.subr.bf16.mxu0 0
    %2949 = vmatpush1.bf16.msra.mxu0 0
    %2950 = vmatprep.subr.bf16.mxu0 0
    %2951 = vmatpush1.bf16.msra.mxu0 0
    %2952 = vmatprep.subr.bf16.mxu0 0
    %2953 = vmatpush1.bf16.msra.mxu0 0
    %2954 = vmatprep.subr.bf16.mxu0 0
    %2955 = vmatpush1.bf16.msra.mxu0 0
    %2956 = vmatprep.mubr.bf16.mxu0 0
    %2957 = vmatmul.mubr.bf16.gmra.mrb[0].mxu0 %v2882
    %v2958 = vpop.f32.mrb[0].mxu0
    %v2959 = vadd.f32 0.0, %v2958
    %v2960 = vpop.f32.mrb[0].mxu0
    %v2961 = vpop.f32.mrb[0].mxu0
    %v2962 = vpop.f32.mrb[0].mxu0
    %2963 = vdwg.mxu0
    %v2964 = vadd.f32 %v2879, %v2918
    %v2965 = vxor.u32 %v2964, 2147483648
    %v2966 = vmul.f32 %v2965, 1.442695
    %v2967 = vpow.pop %v2966
    %v2968 = vadd.f32 %v2967, 1.0
    %v2969 = vrcp.pop %v2968
    %v2970 = vmul.f32 1.0, %v2969
    %v2971 = vadd.f32 %v2880, %v2920
    %v2972 = vxor.u32 %v2971, 2147483648
    %v2973 = vmul.f32 %v2972, 1.442695
    %v2974 = vpow.pop %v2973
    %v2975 = vadd.f32 %v2974, 1.0
    %v2976 = vrcp.pop %v2975
    %v2977 = vmul.f32 1.0, %v2976
    %v2978 = vadd.f32 %v2959, %v1740
    %v2979 = vmul.f32 %v2970, %v2978
    %v2980 = vadd.f32 %v2881, %v2979
    %v2981 = vtanh.pop %v2980
    %v2982 = vsub.f32 1.0, %v2977
    %v2983 = vmul.f32 %v2982, %v2981
    %v2984 = vmul.f32 %v2977, %v2877
    %v2985 = vadd.f32 %v2983, %v2984
    %v2986 = vsel %vm1583, %v2985, %v2877
    %2987 = vst [vmem:[#allocation2 + $0x30] sm:$0xff] %v2986
    %v2988 = vld [vmem:[#allocation3 + $0xa8] sm:$0xff]
    %v2989 = vld [vmem:[#allocation3 + $0xb0] sm:$0xff]
    %v2990 = vld [vmem:[#allocation3 + $0xb8] sm:$0xff]
    %v2991 = vpack.c.bf16 %v2986, %v2986
    %2992 = vmatprep.subr.bf16.mxu0 %v2182
    %2993 = vmatpush1.bf16.msra.mxu0 %v2181
    %2994 = vmatprep.subr.bf16.mxu0 %v2185
    %2995 = vmatpush1.bf16.msra.mxu0 %v2184
    %2996 = vmatprep.subr.bf16.mxu0 %v2188
    %2997 = vmatpush1.bf16.msra.mxu0 %v2187
    %2998 = vmatprep.subr.bf16.mxu0 %v2191
    %2999 = vmatpush1.bf16.msra.mxu0 %v2190
    %3000 = vmatprep.subr.bf16.mxu0 %v2194
    %3001 = vmatpush1.bf16.msra.mxu0 %v2193
    %3002 = vmatprep.subr.bf16.mxu0 %v2197
    %3003 = vmatpush1.bf16.msra.mxu0 %v2196
    %3004 = vmatprep.subr.bf16.mxu0 %v2200
    %3005 = vmatpush1.bf16.msra.mxu0 %v2199
    %3006 = vmatprep.subr.bf16.mxu0 %v2203
    %3007 = vmatpush1.bf16.msra.mxu0 %v2202
    %3008 = vmatprep.subr.bf16.mxu0 0
    %3009 = vmatpush1.bf16.msra.mxu0 0
    %3010 = vmatprep.subr.bf16.mxu0 0
    %3011 = vmatpush1.bf16.msra.mxu0 0
    %3012 = vmatprep.subr.bf16.mxu0 0
    %3013 = vmatpush1.bf16.msra.mxu0 0
    %3014 = vmatprep.subr.bf16.mxu0 0
    %3015 = vmatpush1.bf16.msra.mxu0 0
    %3016 = vmatprep.subr.bf16.mxu0 0
    %3017 = vmatpush1.bf16.msra.mxu0 0
    %3018 = vmatprep.subr.bf16.mxu0 0
    %3019 = vmatpush1.bf16.msra.mxu0 0
    %3020 = vmatprep.subr.bf16.mxu0 0
    %3021 = vmatpush1.bf16.msra.mxu0 0
    %3022 = vmatprep.subr.bf16.mxu0 0
    %3023 = vmatpush1.bf16.msra.mxu0 0
    %3024 = vmatprep.mubr.bf16.mxu0 0
    %3025 = vmatmul.mubr.bf16.gmra.mrb[0].mxu0 %v2991
    %v3026 = vpop.f32.mrb[0].mxu0
    %v3027 = vadd.f32 0.0, %v3026
    %v3028 = vpop.f32.mrb[0].mxu0
    %v3029 = vadd.f32 0.0, %v3028
    %v3030 = vpop.f32.mrb[0].mxu0
    %v3031 = vpop.f32.mrb[0].mxu0
    %3032 = vdwg.mxu0
    %3033 = vmatprep.subr.bf16.mxu0 0
    %3034 = vmatpush1.bf16.msra.mxu0 %v2183
    %3035 = vmatprep.subr.bf16.mxu0 0
    %3036 = vmatpush1.bf16.msra.mxu0 %v2186
    %3037 = vmatprep.subr.bf16.mxu0 0
    %3038 = vmatpush1.bf16.msra.mxu0 %v2189
    %3039 = vmatprep.subr.bf16.mxu0 0
    %3040 = vmatpush1.bf16.msra.mxu0 %v2192
    %3041 = vmatprep.subr.bf16.mxu0 0
    %3042 = vmatpush1.bf16.msra.mxu0 %v2195
    %3043 = vmatprep.subr.bf16.mxu0 0
    %3044 = vmatpush1.bf16.msra.mxu0 %v2198
    %3045 = vmatprep.subr.bf16.mxu0 0
    %3046 = vmatpush1.bf16.msra.mxu0 %v2201
    %3047 = vmatprep.subr.bf16.mxu0 0
    %3048 = vmatpush1.bf16.msra.mxu0 %v2204
    %3049 = vmatprep.subr.bf16.mxu0 0
    %3050 = vmatpush1.bf16.msra.mxu0 0
    %3051 = vmatprep.subr.bf16.mxu0 0
    %3052 = vmatpush1.bf16.msra.mxu0 0
    %3053 = vmatprep.subr.bf16.mxu0 0
    %3054 = vmatpush1.bf16.msra.mxu0 0
    %3055 = vmatprep.subr.bf16.mxu0 0
    %3056 = vmatpush1.bf16.msra.mxu0 0
    %3057 = vmatprep.subr.bf16.mxu0 0
    %3058 = vmatpush1.bf16.msra.mxu0 0
    %3059 = vmatprep.subr.bf16.mxu0 0
    %3060 = vmatpush1.bf16.msra.mxu0 0
    %3061 = vmatprep.subr.bf16.mxu0 0
    %3062 = vmatpush1.bf16.msra.mxu0 0
    %3063 = vmatprep.subr.bf16.mxu0 0
    %3064 = vmatpush1.bf16.msra.mxu0 0
    %3065 = vmatprep.mubr.bf16.mxu0 0
    %3066 = vmatmul.mubr.bf16.gmra.mrb[0].mxu0 %v2991
    %v3067 = vpop.f32.mrb[0].mxu0
    %v3068 = vadd.f32 0.0, %v3067
    %v3069 = vpop.f32.mrb[0].mxu0
    %v3070 = vpop.f32.mrb[0].mxu0
    %v3071 = vpop.f32.mrb[0].mxu0
    %3072 = vdwg.mxu0
    %v3073 = vadd.f32 %v2988, %v3027
    %v3074 = vxor.u32 %v3073, 2147483648
    %v3075 = vmul.f32 %v3074, 1.442695
    %v3076 = vpow.pop %v3075
    %v3077 = vadd.f32 %v3076, 1.0
    %v3078 = vrcp.pop %v3077
    %v3079 = vmul.f32 1.0, %v3078
    %v3080 = vadd.f32 %v2989, %v3029
    %v3081 = vxor.u32 %v3080, 2147483648
    %v3082 = vmul.f32 %v3081, 1.442695
    %v3083 = vpow.pop %v3082
    %v3084 = vadd.f32 %v3083, 1.0
    %v3085 = vrcp.pop %v3084
    %v3086 = vmul.f32 1.0, %v3085
    %v3087 = vadd.f32 %v3068, %v1740
    %v3088 = vmul.f32 %v3079, %v3087
    %v3089 = vadd.f32 %v2990, %v3088
    %v3090 = vtanh.pop %v3089
    %v3091 = vsub.f32 1.0, %v3086
    %v3092 = vmul.f32 %v3091, %v3090
    %v3093 = vmul.f32 %v3086, %v2986
    %v3094 = vadd.f32 %v3092, %v3093
    %v3095 = vsel %vm1697, %v3094, %v2986
    %3096 = vst [vmem:[#allocation2 + $0x38] sm:$0xff] %v3095
    %s3097 = scalar_lea.vmem [#allocation12], 8
    %3098 = vst [vmem:[%s3097] sm:$0xff] %v3095
    %3099 = vst [vmem:[#allocation4] sm:$0xff] 0.0
    %3100 = vst [vmem:[#allocation4 + $0x8] sm:$0xff] 0.0
    %3101 = vst [vmem:[#allocation4 + $0x10] sm:$0xff] 0.0
    %v3102 = vld [vmem:[#allocation2] sm:$0xf]
    %3103 = vst [vmem:[#allocation4] sm:$0xf] %v3102
    %v3104 = vld [vmem:[#allocation2 + $0x8] sm:$0xf]
    %3105 = vst [vmem:[#allocation4 + $0x4] sm:$0xf] %v3104
    %v3106 = vld [vmem:[#allocation2 + $0x10] sm:$0xf]
    %3107 = vst [vmem:[#allocation4 + $0x8] sm:$0xf] %v3106
    %v3108 = vld [vmem:[#allocation2 + $0x18] sm:$0x7]
    %3109 = vst [vmem:[#allocation4 + $0xc] sm:$0x7] %v3108
    %v3110 = vld [vmem:[#allocation2 + $0x20] sm:$0x7]
    %3111 = vst [vmem:[#allocation4 + $0xf] sm:$0x7] %v3110
    %v3112 = vld [vmem:[#allocation2 + $0x28] sm:$0x3]
    %3113 = vst [vmem:[#allocation4 + $0x12] sm:$0x3] %v3112
    %v3114 = vld [vmem:[#allocation2 + $0x30] sm:$0x3]
    %3115 = vst [vmem:[#allocation4 + $0x14] sm:$0x3] %v3114
    %v3116 = vld [vmem:[#allocation2 + $0x38] sm:$0x1]
    %3117 = vst [vmem:[#allocation4 + $0x16] sm:$0x1] %v3116
    %v3118 = vld [vmem:[#allocation4] sm:$0xff]
    %v3119 = vld [vmem:[#allocation4 + $0x8] sm:$0xff]
    %v3120 = vld [vmem:[#allocation4 + $0x10] sm:$0xff]
    %v3121 = vpack.c.bf16 %v3119, %v3118
    %v3122 = vpack.c.bf16 %v3120, %v3120
    %v3123 = vld [vmem:[%s8] sm:$0xf]
    %v3124 = vld [vmem:[%s8 + $0x4] sm:$0xf]
    %v3125 = vld [vmem:[%s8 + $0x8] sm:$0xf]
    %v3126 = vld [vmem:[%s8 + $0xc] sm:$0xf]
    %v3127 = vld [vmem:[%s8 + $0x10] sm:$0xf]
    %v3128 = vld [vmem:[%s8 + $0x14] sm:$0xf]
    %v3129 = vld [vmem:[%s8 + $0x18] sm:$0xf]
    %v3130 = vld [vmem:[%s8 + $0x1c] sm:$0xf]
    %v3131 = vld [vmem:[%s8 + $0x20] sm:$0xf]
    %v3132 = vld [vmem:[%s8 + $0x24] sm:$0xf]
    %v3133 = vld [vmem:[%s8 + $0x28] sm:$0xf]
    %v3134 = vld [vmem:[%s8 + $0x2c] sm:$0xf]
    %v3135 = vld [vmem:[%s8 + $0x30] sm:$0xf]
    %v3136 = vld [vmem:[%s8 + $0x34] sm:$0xf]
    %v3137 = vld [vmem:[%s8 + $0x38] sm:$0xf]
    %v3138 = vld [vmem:[%s8 + $0x3c] sm:$0xf]
    %v3139 = vld [vmem:[%s9] sm:$0x1]
    %v3141 = vlaneseq
    %v3142 = vshrl.u32 %v3141, 7
    %v3143 = vsub.s32 0, %v3142
    %v3144 = vrot.slane %v3139, %v3143
    %v3162 = vunpack.c.l.b16 %v3123
    %v3163 = vunpack.c.l.b16 %v3124
    %v3164 = vunpack.c.l.b16 %v3125
    %v3165 = vunpack.c.l.b16 %v3126
    %v3166 = vunpack.c.l.b16 %v3127
    %v3167 = vunpack.c.l.b16 %v3128
    %v3168 = vunpack.c.l.b16 %v3129
    %v3169 = vunpack.c.l.b16 %v3130
    %v3170 = vunpack.c.l.b16 %v3131
    %v3171 = vunpack.c.l.b16 %v3132
    %v3172 = vunpack.c.l.b16 %v3133
    %v3173 = vunpack.c.l.b16 %v3134
    %v3174 = vunpack.c.l.b16 %v3135
    %v3175 = vunpack.c.l.b16 %v3136
    %v3176 = vunpack.c.l.b16 %v3137
    %v3177 = vunpack.c.l.b16 %v3138
    %v3178 = vpack.c.b16 %v3163, %v3162
    %v3179 = vpack.c.b16 %v3165, %v3164
    %v3180 = vpack.c.b16 %v3167, %v3166
    %v3181 = vpack.c.b16 %v3169, %v3168
    %v3182 = vpack.c.b16 %v3171, %v3170
    %v3183 = vpack.c.b16 %v3173, %v3172
    %v3184 = vpack.c.b16 %v3175, %v3174
    %v3185 = vpack.c.b16 %v3177, %v3176
    %3194 = vmatprep.subr.bf16.mxu0 0
    %3195 = vmatpush1.bf16.msra.mxu0 %v3178
    %3196 = vmatprep.subr.bf16.mxu0 0
    %3197 = vmatpush1.bf16.msra.mxu0 %v3179
    %3198 = vmatprep.subr.bf16.mxu0 0
    %3199 = vmatpush1.bf16.msra.mxu0 %v3180
    %3200 = vmatprep.subr.bf16.mxu0 0
    %3201 = vmatpush1.bf16.msra.mxu0 %v3181
    %3202 = vmatprep.subr.bf16.mxu0 0
    %3203 = vmatpush1.bf16.msra.mxu0 %v3182
    %3204 = vmatprep.subr.bf16.mxu0 0
    %3205 = vmatpush1.bf16.msra.mxu0 %v3183
    %3206 = vmatprep.subr.bf16.mxu0 0
    %3207 = vmatpush1.bf16.msra.mxu0 %v3184
    %3208 = vmatprep.subr.bf16.mxu0 0
    %3209 = vmatpush1.bf16.msra.mxu0 %v3185
    %3210 = vmatprep.subr.bf16.mxu0 0
    %3211 = vmatpush1.bf16.msra.mxu0 0
    %3212 = vmatprep.subr.bf16.mxu0 0
    %3213 = vmatpush1.bf16.msra.mxu0 0
    %3214 = vmatprep.subr.bf16.mxu0 0
    %3215 = vmatpush1.bf16.msra.mxu0 0
    %3216 = vmatprep.subr.bf16.mxu0 0
    %3217 = vmatpush1.bf16.msra.mxu0 0
    %3218 = vmatprep.subr.bf16.mxu0 0
    %3219 = vmatpush1.bf16.msra.mxu0 0
    %3220 = vmatprep.subr.bf16.mxu0 0
    %3221 = vmatpush1.bf16.msra.mxu0 0
    %3222 = vmatprep.subr.bf16.mxu0 0
    %3223 = vmatpush1.bf16.msra.mxu0 0
    %3224 = vmatprep.subr.bf16.mxu0 0
    %3225 = vmatpush1.bf16.msra.mxu0 0
    %3226 = vmatprep.mubr.bf16.mxu0 0
    %3227 = vmatmul.mubr.bf16.gmra.mrb[0].mxu0 %v3121
    %v3228 = vpop.f32.mrb[0].mxu0
    %v3229 = vadd.f32 %v3144, %v3228
    %v3230 = vpop.f32.mrb[0].mxu0
    %v3231 = vpop.f32.mrb[0].mxu0
    %v3232 = vadd.f32 %v3144, %v3231
    %v3233 = vpop.f32.mrb[0].mxu0
    %3234 = vmatprep.mubr.bf16.mxu0 0
    %3235 = vmatmul.mubr.bf16.gmra.mrb[0].mxu0 %v3122
    %v3236 = vpop.f32.mrb[0].mxu0
    %v3237 = vadd.f32 %v3144, %v3236
    %v3238 = vpop.f32.mrb[0].mxu0
    %v3239 = vpop.f32.mrb[0].mxu0
    %v3240 = vpop.f32.mrb[0].mxu0
    %3241 = vdwg.mxu0
    %3242 = vmax.xlane.f32.xlu0 %v3229
    %v3243 = vpop.xlane.xlu0 %3242
    %3244 = vmax.xlane.f32.xlu0 %v3232
    %v3245 = vpop.xlane.xlu0 %3244
    %3246 = vmax.xlane.f32.xlu0 %v3237
    %v3247 = vpop.xlane.xlu0 %3246
    %v3248 = vsub.f32 %v3229, %v3243
    %v3249 = vsub.f32 %v3232, %v3245
    %v3250 = vsub.f32 %v3237, %v3247
    %v3251 = vmul.f32 %v3248, 1.442695
    %v3252 = vpow.pop %v3251
    %v3253 = vmul.f32 %v3249, 1.442695
    %v3254 = vpow.pop %v3253
    %v3255 = vmul.f32 %v3250, 1.442695
    %v3256 = vpow.pop %v3255
    %3257 = vadd.xlane.f32.xlu0 %v3252
    %v3258 = vpop.xlane.xlu0 %3257
    %3259 = vadd.xlane.f32.xlu0 %v3254
    %v3260 = vpop.xlane.xlu0 %3259
    %3261 = vadd.xlane.f32.xlu0 %v3256
    %v3262 = vpop.xlane.xlu0 %3261
    %v3263 = vlog2.pop %v3258
    %v3264 = vmul.f32 %v3263, 0.6931472
    %v3265 = vlog2.pop %v3260
    %v3266 = vmul.f32 %v3265, 0.6931472
    %v3267 = vlog2.pop %v3262
    %v3268 = vmul.f32 %v3267, 0.6931472
    %v3269 = vsub.f32 %v3248, %v3264
    %v3270 = vsub.f32 %v3249, %v3266
    %v3271 = vsub.f32 %v3250, %v3268
    %3272 = vst [vmem:[#allocation11] sm:$0xff] %v3269
    %3273 = vst [vmem:[#allocation11 + $0x8] sm:$0xff] %v3270
    %3274 = vst [vmem:[#allocation11 + $0x10] sm:$0xff] %v3271
    // Predicated region
    $region54: #{tpu_custom_call.1} parent=1 // pred_check
      _
    $region55: #{tpu_custom_call.1} parent=1 // pred_check_branch
      %3276 = sbr.rel (0) target = $region57
    $region56: #{tpu_custom_call.1} parent=1 // pred_region
      %s3278 = ssub.s32 384, 384
      %3279 = vsyncadd [#allocation7], %s3278
      %s3280 = sshll.u32 [#allocation11], 4
      %s3281 = int_to_ptr.vmem [resolvable:$true] %s3280
      %3286 = dma.vmem_to_hbm [thread:$0]  %s3281, 384, %s10, [#allocation7], 128, 128, 8
    $region57: #{tpu_custom_call.1} parent=1 // pred_fallthru
      _
    // Predicated region
    $region58: #{tpu_custom_call.1} parent=1 // pred_check
      _
    $region59: #{tpu_custom_call.1} parent=1 // pred_check_branch
      %3288 = sbr.rel (0) target = $region61
    $region60: #{tpu_custom_call.1} parent=1 // pred_region
      %s3290 = ssub.s32 256, 256
      %3291 = vsyncadd [#allocation13], %s3290
      %s3292 = sshll.u32 [#allocation12], 4
      %s3293 = int_to_ptr.vmem [resolvable:$true] %s3292
      %3298 = dma.vmem_to_hbm [thread:$0]  %s3293, 256, %s11, [#allocation13], 128, 128, 8
    $region61: #{tpu_custom_call.1} parent=1 // pred_fallthru
      _
    // Predicated region
    $region62: #{tpu_custom_call.1} parent=1 // pred_check
      _
    $region63: #{tpu_custom_call.1} parent=1 // pred_check_branch
      %3300 = sbr.rel (0) target = $region65
    $region64: #{tpu_custom_call.1} parent=1 // pred_region
      %3301 = dma.done [#allocation7], 384
    $region65: #{tpu_custom_call.1} parent=1 // pred_fallthru
      _
    // Predicated region
    $region66: #{tpu_custom_call.1} parent=1 // pred_check
      _
    $region67: #{tpu_custom_call.1} parent=1 // pred_check_branch
      %3303 = sbr.rel (0) target = $region69
    $region68: #{tpu_custom_call.1} parent=1 // pred_region
      %3304 = dma.done [#allocation13], 256
    $region69: #{tpu_custom_call.1} parent=1 // pred_fallthru
      _
    %3305 = vsyncpa [#allocation6], 1
    %3306 = vsyncpa [#allocation9], 1
    %3307 = vsyncpa [#allocation7], 1
    %3308 = vsyncpa [#allocation13], 1

</llo_original>
